<compile_context>
chip_gen: v7x
topology: tpu7x:2x2x1
jax: 0.10.0
libtpu: 0.0.40
codegen_flags: <defaults>
</compile_context>

<pallas_src>
import functools

import jax
import jax.numpy as jnp
from jax import lax
from jax.experimental import pallas as pl
from jax.experimental.pallas import tpu as pltpu


def convt_silu_kernel(x_ref, w_ref, b_ref, y_ref, *, W, HW):
    """ConvTranspose2d(k=3, s=2, p=1, op=1) + SiLU on a flattened (M, Cin) slab.

    x_ref: (M, Cin)          flattened channels-last activations, M = N*H*W
    w_ref: (4, Cin, 4*Cout)  per-tap weight blocks for [x, x_right, x_down, x_down_right]
    b_ref: (1, 4*Cout)       bias replicated across the 4 output phases
    y_ref: (M, 4*Cout)       phase columns [out[2i,2j] | out[2i,2j+1] | out[2i+1,2j] | out[2i+1,2j+1]]
    """
    x = x_ref[...]
    M = x.shape[0]

    rows = lax.broadcasted_iota(jnp.int32, (M, 1), 0)
    keep_r = (rows % W) < (W - 1)        # j < W-1  -> x[i, j+1] exists
    keep_d = (rows % HW) < (HW - W)      # i < H-1  -> x[i+1, j] exists

    dot = functools.partial(jnp.dot, preferred_element_type=jnp.float32,
                            precision=lax.Precision.HIGHEST)

    # Four accumulating MXU matmuls; each shifted copy is built (XLU roll + VPU mask)
    # right before its matmul so the live vreg set stays small.  roll(x, M-k) gives
    # result[m] = x[(m+k) mod M]; wrapped rows are masked to zero.
    acc = dot(x, w_ref[0])
    xr = jnp.where(keep_r, pltpu.roll(x, M - 1, axis=0), 0.0)                 # x[i, j+1]
    acc += dot(xr, w_ref[1])
    xd = jnp.where(keep_d, pltpu.roll(x, M - W, axis=0), 0.0)                 # x[i+1, j]
    acc += dot(xd, w_ref[2])
    xdr = jnp.where(keep_r & keep_d, pltpu.roll(x, M - W - 1, axis=0), 0.0)   # x[i+1, j+1]
    acc += dot(xdr, w_ref[3])

    y = acc + b_ref[...]
    y_ref[...] = y * jax.nn.sigmoid(y)   # SiLU (exact sigmoid; EUP exp path)


def pack_td1_params(w_pt, bias):
    """Pack PyTorch ConvTranspose2d params once at module init (static per model).

    w_pt: (Cin, Cout, 3, 3) PyTorch ConvTranspose2d weight layout; bias: (Cout,).
    Returns w_packed (4, Cin, 4*Cout) and b_cat (1, 4*Cout).
    Block columns = output phases [2i,2j | 2i,2j+1 | 2i+1,2j | 2i+1,2j+1];
    block index 0..3 = contribution of [x[i,j], x[i,j+1], x[i+1,j], x[i+1,j+1]].
    """
    Cin, Cout = w_pt.shape[0], w_pt.shape[1]
    w = jnp.transpose(w_pt, (2, 3, 0, 1)).astype(jnp.float32)   # (ky, kx, Cin, Cout)
    z = jnp.zeros((Cin, Cout), jnp.float32)
    w0 = jnp.concatenate([w[1, 1], w[1, 2], w[2, 1], w[2, 2]], axis=1)   # x[i, j]
    w1 = jnp.concatenate([z,       w[1, 0], z,       w[2, 0]], axis=1)   # x[i, j+1]
    w2 = jnp.concatenate([z,       z,       w[0, 1], w[0, 2]], axis=1)   # x[i+1, j]
    w3 = jnp.concatenate([z,       z,       z,       w[0, 0]], axis=1)   # x[i+1, j+1]
    w_packed = jnp.stack([w0, w1, w2, w3], axis=0)                       # (4, Cin, 4*Cout)
    b_cat = jnp.tile(bias.astype(jnp.float32), 4).reshape(1, 4 * Cout)
    return w_packed, b_cat


def td1_forward(x_nchw, w_packed, b_cat):
    """x_nchw: (N, Cin, H, W); w_packed/b_cat from pack_td1_params.
    Returns (N, Cout, 2H, 2W)."""
    N, Cin, H, W = x_nchw.shape
    Cout = w_packed.shape[2] // 4
    HW = H * W
    M = N * HW

    # NCHW -> flattened channels-last (M, Cin); allowed to fuse into the pallas input.
    x = jnp.transpose(x_nchw, (0, 2, 3, 1)).astype(jnp.float32).reshape(M, Cin)

    y = pl.pallas_call(
        functools.partial(convt_silu_kernel, W=W, HW=HW),
        out_shape=jax.ShapeDtypeStruct((M, 4 * Cout), jnp.float32),
        in_specs=[pl.BlockSpec(memory_space=pltpu.MemorySpace.VMEM)] * 3,
        out_specs=pl.BlockSpec(memory_space=pltpu.MemorySpace.VMEM),
        compiler_params=pltpu.CompilerParams(
            allow_input_fusion=[True, False, False]),
    )(x, w_packed, b_cat)

    # De-interleave the 4 phases and return NCHW in a single transpose:
    # out[n, c, 2i+py, 2j+px] = y[n, i, j, py, px, c]
    y6 = y.reshape(N, H, W, 2, 2, Cout)
    out = jnp.transpose(y6, (0, 5, 1, 3, 2, 4))
    return out.reshape(N, Cout, 2 * H, 2 * W)
    # TODO(synk): for production H/W/N add a "parallel" row-grid (per-image row blocks with a
    # W-row halo) so v7x's 2 TensorCores are used and VMEM blocks are sized for 64 MiB; at
    # M=128 the gridless single invocation is cheapest.  If the surrounding model is NHWC
    # end-to-end, drop both NCHW transposes entirely.


def td1_reference(x_nchw, w_pt, bias):
    """Pure-JAX reference: ConvTranspose2d == conv with lhs dilation + flipped kernel."""
    Cout = w_pt.shape[1]
    w_flip = jnp.transpose(w_pt, (1, 0, 2, 3))[:, :, ::-1, ::-1]   # OIHW, spatially flipped
    y = lax.conv_general_dilated(
        x_nchw.astype(jnp.float32), w_flip.astype(jnp.float32),
        window_strides=(1, 1),
        padding=((1, 2), (1, 2)),          # (k-1-p, k-1-p+output_padding)
        lhs_dilation=(2, 2),
        dimension_numbers=('NCHW', 'OIHW', 'NCHW'),
        precision=lax.Precision.HIGHEST)
    y = y + bias.reshape(1, Cout, 1, 1)
    return y * jax.nn.sigmoid(y)           # SiLU


if __name__ == "__main__":
    key = jax.random.PRNGKey(0)
    kx, kw, kb = jax.random.split(key, 3)

    N, Cin, Cout, H, W = 2, 64, 32, 8, 8
    x = jax.random.normal(kx, (N, Cin, H, W), dtype=jnp.float32)
    w_pt = jax.random.normal(kw, (Cin, Cout, 3, 3), dtype=jnp.float32) * 0.1
    bias = jax.random.normal(kb, (Cout,), dtype=jnp.float32) * 0.1

    # Static packing done once at "module init", outside the per-call forward.
    w_packed, b_cat = pack_td1_params(w_pt, bias)
    w_packed = jax.block_until_ready(w_packed)
    b_cat = jax.block_until_ready(b_cat)

    fwd = jax.jit(td1_forward)
    out = jax.block_until_ready(fwd(x, w_packed, b_cat))
    ref = jax.block_until_ready(td1_reference(x, w_pt, bias))

    assert out.shape == (N, Cout, 2 * H, 2 * W), out.shape
    assert jnp.allclose(out, ref, atol=1e-4, rtol=1e-4), float(jnp.max(jnp.abs(out - ref)))
    print("KERNEL_OK")
</pallas_src>

<mosaic_0001>
module attributes {stable_mosaic.version = 11 : i64} {
  func.func @convt_silu_kernel(%arg0: memref<128x64xf32, #tpu.memory_space<vmem>>, %arg1: memref<4x64x128xf32, #tpu.memory_space<vmem>>, %arg2: memref<1x128xf32, #tpu.memory_space<vmem>>, %arg3: memref<128x128xf32, #tpu.memory_space<vmem>>) attributes {dimension_semantics = [], scalar_prefetch = 0 : i64, scratch_operands = 0 : i64, tpu.core_type = #tpu.core_type<tc>} {
    %c0 = arith.constant 0 : index
    %c0_0 = arith.constant 0 : index
    %0 = vector.load %arg0[%c0, %c0_0] : memref<128x64xf32, #tpu.memory_space<vmem>>, vector<128x64xf32>
    %1 = tpu.iota {dimensions = array<i32: 0>} : vector<128x1xi32>
    %c8_i32 = arith.constant 8 : i32
    %c0_i32 = arith.constant 0 : i32
    %2 = arith.cmpi eq, %c8_i32, %c0_i32 : i32
    %c1_i32 = arith.constant 1 : i32
    %3 = arith.select %2, %c1_i32, %c8_i32 : i32
    %4 = vector.broadcast %3 : i32 to vector<128x1xi32>
    %5 = arith.remsi %1, %4 : vector<128x1xi32>
    %c0_i32_1 = arith.constant 0 : i32
    %6 = vector.broadcast %c0_i32_1 : i32 to vector<128x1xi32>
    %7 = arith.cmpi ne, %5, %6 : vector<128x1xi32>
    %c0_i32_2 = arith.constant 0 : i32
    %8 = vector.broadcast %c0_i32_2 : i32 to vector<128x1xi32>
    %9 = arith.cmpi slt, %5, %8 : vector<128x1xi32>
    %c0_i32_3 = arith.constant 0 : i32
    %10 = arith.cmpi slt, %3, %c0_i32_3 : i32
    %11 = vector.broadcast %10 : i1 to vector<128x1xi1>
    %12 = vector.broadcast %11 : vector<128x1xi1> to vector<128x1xi1>
    %13 = arith.xori %9, %12 : vector<128x1xi1>
    %14 = arith.andi %13, %7 : vector<128x1xi1>
    %15 = vector.broadcast %3 : i32 to vector<128x1xi32>
    %16 = arith.addi %5, %15 : vector<128x1xi32>
    %17 = arith.select %14, %16, %5 : vector<128x1xi1>, vector<128x1xi32>
    %c7_i32 = arith.constant 7 : i32
    %18 = vector.broadcast %c7_i32 : i32 to vector<128x1xi32>
    %19 = arith.cmpi slt, %17, %18 : vector<128x1xi32>
    %c64_i32 = arith.constant 64 : i32
    %c0_i32_4 = arith.constant 0 : i32
    %20 = arith.cmpi eq, %c64_i32, %c0_i32_4 : i32
    %c1_i32_5 = arith.constant 1 : i32
    %21 = arith.select %20, %c1_i32_5, %c64_i32 : i32
    %22 = vector.broadcast %21 : i32 to vector<128x1xi32>
    %23 = arith.remsi %1, %22 : vector<128x1xi32>
    %c0_i32_6 = arith.constant 0 : i32
    %24 = vector.broadcast %c0_i32_6 : i32 to vector<128x1xi32>
    %25 = arith.cmpi ne, %23, %24 : vector<128x1xi32>
    %c0_i32_7 = arith.constant 0 : i32
    %26 = vector.broadcast %c0_i32_7 : i32 to vector<128x1xi32>
    %27 = arith.cmpi slt, %23, %26 : vector<128x1xi32>
    %c0_i32_8 = arith.constant 0 : i32
    %28 = arith.cmpi slt, %21, %c0_i32_8 : i32
    %29 = vector.broadcast %28 : i1 to vector<128x1xi1>
    %30 = vector.broadcast %29 : vector<128x1xi1> to vector<128x1xi1>
    %31 = arith.xori %27, %30 : vector<128x1xi1>
    %32 = arith.andi %31, %25 : vector<128x1xi1>
    %33 = vector.broadcast %21 : i32 to vector<128x1xi32>
    %34 = arith.addi %23, %33 : vector<128x1xi32>
    %35 = arith.select %32, %34, %23 : vector<128x1xi1>, vector<128x1xi32>
    %c56_i32 = arith.constant 56 : i32
    %36 = vector.broadcast %c56_i32 : i32 to vector<128x1xi32>
    %37 = arith.cmpi slt, %35, %36 : vector<128x1xi32>
    %c0_9 = arith.constant 0 : index
    %c0_10 = arith.constant 0 : index
    %c0_11 = arith.constant 0 : index
    %38 = vector.load %arg1[%c0_9, %c0_10, %c0_11] : memref<4x64x128xf32, #tpu.memory_space<vmem>>, vector<1x64x128xf32>
    %39 = vector.shape_cast %38 : vector<1x64x128xf32> to vector<64x128xf32>
    %cst = arith.constant dense<0.000000e+00> : vector<128x128xf32>
    %40 = tpu.matmul %0, %39, %cst {dimension_numbers = #tpu.dot_dimension_numbers<[1], [0], [0], [1], [0, 0, 1, 1], [], []>, precision = #tpu.contract_precision<fp32>} : vector<128x64xf32>, vector<64x128xf32>, vector<128x128xf32> -> vector<128x128xf32>
    %c127_i32 = arith.constant 127 : i32
    %41 = tpu.dynamic_rotate %0 by %c127_i32 dim 0 : vector<128x64xf32>, i32 -> vector<128x64xf32>
    %cst_12 = arith.constant 0.000000e+00 : f32
    %42 = vector.shape_cast %19 : vector<128x1xi1> to vector<128x1xi1>
    %43 = vector.broadcast %42 : vector<128x1xi1> to vector<128x64xi1>
    %44 = vector.broadcast %cst_12 : f32 to vector<128x64xf32>
    %45 = arith.select %43, %41, %44 : vector<128x64xi1>, vector<128x64xf32>
    %c1 = arith.constant 1 : index
    %c0_13 = arith.constant 0 : index
    %c0_14 = arith.constant 0 : index
    %46 = vector.load %arg1[%c1, %c0_13, %c0_14] : memref<4x64x128xf32, #tpu.memory_space<vmem>>, vector<1x64x128xf32>
    %47 = vector.shape_cast %46 : vector<1x64x128xf32> to vector<64x128xf32>
    %cst_15 = arith.constant dense<0.000000e+00> : vector<128x128xf32>
    %48 = tpu.matmul %45, %47, %cst_15 {dimension_numbers = #tpu.dot_dimension_numbers<[1], [0], [0], [1], [0, 0, 1, 1], [], []>, precision = #tpu.contract_precision<fp32>} : vector<128x64xf32>, vector<64x128xf32>, vector<128x128xf32> -> vector<128x128xf32>
    %49 = arith.addf %40, %48 : vector<128x128xf32>
    %c120_i32 = arith.constant 120 : i32
    %50 = tpu.dynamic_rotate %0 by %c120_i32 dim 0 : vector<128x64xf32>, i32 -> vector<128x64xf32>
    %cst_16 = arith.constant 0.000000e+00 : f32
    %51 = vector.shape_cast %37 : vector<128x1xi1> to vector<128x1xi1>
    %52 = vector.broadcast %51 : vector<128x1xi1> to vector<128x64xi1>
    %53 = vector.broadcast %cst_16 : f32 to vector<128x64xf32>
    %54 = arith.select %52, %50, %53 : vector<128x64xi1>, vector<128x64xf32>
    %c2 = arith.constant 2 : index
    %c0_17 = arith.constant 0 : index
    %c0_18 = arith.constant 0 : index
    %55 = vector.load %arg1[%c2, %c0_17, %c0_18] : memref<4x64x128xf32, #tpu.memory_space<vmem>>, vector<1x64x128xf32>
    %56 = vector.shape_cast %55 : vector<1x64x128xf32> to vector<64x128xf32>
    %cst_19 = arith.constant dense<0.000000e+00> : vector<128x128xf32>
    %57 = tpu.matmul %54, %56, %cst_19 {dimension_numbers = #tpu.dot_dimension_numbers<[1], [0], [0], [1], [0, 0, 1, 1], [], []>, precision = #tpu.contract_precision<fp32>} : vector<128x64xf32>, vector<64x128xf32>, vector<128x128xf32> -> vector<128x128xf32>
    %58 = arith.addf %49, %57 : vector<128x128xf32>
    %59 = arith.andi %19, %37 : vector<128x1xi1>
    %c119_i32 = arith.constant 119 : i32
    %60 = tpu.dynamic_rotate %0 by %c119_i32 dim 0 : vector<128x64xf32>, i32 -> vector<128x64xf32>
    %cst_20 = arith.constant 0.000000e+00 : f32
    %61 = vector.shape_cast %59 : vector<128x1xi1> to vector<128x1xi1>
    %62 = vector.broadcast %61 : vector<128x1xi1> to vector<128x64xi1>
    %63 = vector.broadcast %cst_20 : f32 to vector<128x64xf32>
    %64 = arith.select %62, %60, %63 : vector<128x64xi1>, vector<128x64xf32>
    %c3 = arith.constant 3 : index
    %c0_21 = arith.constant 0 : index
    %c0_22 = arith.constant 0 : index
    %65 = vector.load %arg1[%c3, %c0_21, %c0_22] : memref<4x64x128xf32, #tpu.memory_space<vmem>>, vector<1x64x128xf32>
    %66 = vector.shape_cast %65 : vector<1x64x128xf32> to vector<64x128xf32>
    %cst_23 = arith.constant dense<0.000000e+00> : vector<128x128xf32>
    %67 = tpu.matmul %64, %66, %cst_23 {dimension_numbers = #tpu.dot_dimension_numbers<[1], [0], [0], [1], [0, 0, 1, 1], [], []>, precision = #tpu.contract_precision<fp32>} : vector<128x64xf32>, vector<64x128xf32>, vector<128x128xf32> -> vector<128x128xf32>
    %68 = arith.addf %58, %67 : vector<128x128xf32>
    %c0_24 = arith.constant 0 : index
    %c0_25 = arith.constant 0 : index
    %69 = vector.load %arg2[%c0_24, %c0_25] : memref<1x128xf32, #tpu.memory_space<vmem>>, vector<1x128xf32>
    %70 = vector.broadcast %69 : vector<1x128xf32> to vector<128x128xf32>
    %71 = arith.addf %68, %70 : vector<128x128xf32>
    %72 = arith.negf %71 : vector<128x128xf32>
    %73 = math.exp %72 : vector<128x128xf32>
    %cst_26 = arith.constant 1.000000e+00 : f32
    %74 = vector.broadcast %cst_26 : f32 to vector<128x128xf32>
    %75 = arith.addf %74, %73 : vector<128x128xf32>
    %76 = arith.divf %74, %75 : vector<128x128xf32>
    %77 = arith.mulf %71, %76 : vector<128x128xf32>
    %c0_27 = arith.constant 0 : index
    %c0_28 = arith.constant 0 : index
    %78 = vector.load %arg3[%c0_27, %c0_28] : memref<128x128xf32, #tpu.memory_space<vmem>>, vector<128x128xf32>
    tpu.vector_store %arg3[%c0_27, %c0_28], %77 {strides = array<i32>} : memref<128x128xf32, #tpu.memory_space<vmem>>, vector<128x128xf32>,
    return
  }
}

</mosaic_0001>

<llo_original>
// kernel: td1_forward.1
$region0: #{td1_forward.1}
  #allocation0 [shape = 'u32[]', space=smem, size = 0x4, offset = 0x4, fixed_abs, tag = 'smem constant byte address 0x4 - core index']
  #allocation1 [shape = 'u32[144,128]{1,0:T(1,128)}', space=vmem, size = 0x12000, scoped, tag = 'internal scratch']
  %s0 = inlined_call_operand.hbm [shape: f32[128,64], index: 0, kind: input, shape index: {}]
  %s1 = inlined_call_operand.hbm [shape: f32[4,64,128], index: 1, kind: input, shape index: {}]
  %s2 = inlined_call_operand.vmem [shape: f32[1,128], index: 2, kind: input, shape index: {}]
  %s3 = inlined_call_operand.vmem [shape: f32[128,128], index: 3, kind: output, shape index: {}]
  %s4 = sld [smem:[#allocation0]]
  $region30: #{td1_forward.1} parent=0
    _
  %s6 = ssub.s32 1, %s4
  %s7 = scalar_select 0, %s6, %s4
  $region1: #{td1_forward.1} parent=0
    #allocation2 [shape = 'u8[65536]{0}', space=vmem, size = 0x10000, scoped, tag = 'input window, operand 0, single buffered']
    #allocation3 [shape = 's32[1]{0}', space=sflag, size = 0x4, scoped, tag = 'scoped memory for td1_forward.1']
    #allocation4 [shape = 'u8[131072]{0}', space=vmem, size = 0x20000, scoped, tag = 'input window, operand 1, single buffered']
    #allocation5 [shape = 's32[1]{0}', space=sflag, size = 0x4, scoped, tag = 'scoped memory for td1_forward.1']
    %8 = vsyncpa [#allocation3], 0
    %9 = vsyncpa [#allocation5], 0
    // Predicated region
    $region2: #{td1_forward.1} parent=1 // pred_check
      _
    $region3: #{td1_forward.1} parent=1 // pred_check_branch
      %11 = sbr.rel (0) target = $region5
    $region4: #{td1_forward.1} parent=1 // pred_region
      %s13 = ssub.s32 2048, 2048
      %14 = vsyncadd [#allocation3], %s13
      %s15 = sshll.u32 [#allocation2], 4
      %s16 = int_to_ptr.vmem [resolvable:$true] %s15
      %21 = dma.hbm_to_vmem [thread:$0]  %s0, 2048, %s16, [#allocation3], 128, 128, 8
    $region5: #{td1_forward.1} parent=1 // pred_fallthru
      _
    // Predicated region
    $region6: #{td1_forward.1} parent=1 // pred_check
      _
    $region7: #{td1_forward.1} parent=1 // pred_check_branch
      %23 = sbr.rel (0) target = $region9
    $region8: #{td1_forward.1} parent=1 // pred_region
      %s25 = ssub.s32 4096, 4096
      %26 = vsyncadd [#allocation5], %s25
      %s27 = sshll.u32 [#allocation4], 4
      %s28 = int_to_ptr.vmem [resolvable:$true] %s27
      %33 = dma.hbm_to_vmem [thread:$0]  %s1, 4096, %s28, [#allocation5], 128, 128, 8
    $region9: #{td1_forward.1} parent=1 // pred_fallthru
      _
    // Predicated region
    $region10: #{td1_forward.1} parent=1 // pred_check
      _
    $region11: #{td1_forward.1} parent=1 // pred_check_branch
      %35 = sbr.rel (0) target = $region13
    $region12: #{td1_forward.1} parent=1 // pred_region
      _
    $region13: #{td1_forward.1} parent=1 // pred_fallthru
      _
    // Predicated region
    $region14: #{td1_forward.1} parent=1 // pred_check
      _
    $region15: #{td1_forward.1} parent=1 // pred_check_branch
      %37 = sbr.rel (0) target = $region17
    $region16: #{td1_forward.1} parent=1 // pred_region
      %38 = dma.done [#allocation3], 2048
    $region17: #{td1_forward.1} parent=1 // pred_fallthru
      _
    // Predicated region
    $region18: #{td1_forward.1} parent=1 // pred_check
      _
    $region19: #{td1_forward.1} parent=1 // pred_check_branch
      %40 = sbr.rel (0) target = $region21
    $region20: #{td1_forward.1} parent=1 // pred_region
      %41 = dma.done [#allocation5], 4096
    $region21: #{td1_forward.1} parent=1 // pred_fallthru
      _
    %v42 = vld [vmem:[#allocation2] sm:$0xff]
    %v43 = vld [vmem:[#allocation2 + $0x8] sm:$0xff]
    %v44 = vld [vmem:[#allocation2 + $0x10] sm:$0xff]
    %v45 = vld [vmem:[#allocation2 + $0x18] sm:$0xff]
    %v46 = vld [vmem:[#allocation2 + $0x20] sm:$0xff]
    %v47 = vld [vmem:[#allocation2 + $0x28] sm:$0xff]
    %v48 = vld [vmem:[#allocation2 + $0x30] sm:$0xff]
    %v49 = vld [vmem:[#allocation2 + $0x38] sm:$0xff]
    %v50 = vld [vmem:[#allocation2 + $0x40] sm:$0xff]
    %v51 = vld [vmem:[#allocation2 + $0x48] sm:$0xff]
    %v52 = vld [vmem:[#allocation2 + $0x50] sm:$0xff]
    %v53 = vld [vmem:[#allocation2 + $0x58] sm:$0xff]
    %v54 = vld [vmem:[#allocation2 + $0x60] sm:$0xff]
    %v55 = vld [vmem:[#allocation2 + $0x68] sm:$0xff]
    %v56 = vld [vmem:[#allocation2 + $0x70] sm:$0xff]
    %v57 = vld [vmem:[#allocation2 + $0x78] sm:$0xff]
    %v58 = vlaneseq
    %v59 = vshrl.u32 %v58, 7
    %v60 = vadd.s32 %v59, 8
    %v61 = vadd.s32 %v59, 16
    %v62 = vadd.s32 %v59, 24
    %v63 = vadd.s32 %v59, 32
    %v64 = vadd.s32 %v59, 40
    %v65 = vadd.s32 %v59, 48
    %v66 = vadd.s32 %v59, 56
    %v67 = vadd.s32 %v59, 64
    %v68 = vadd.s32 %v59, 72
    %v69 = vadd.s32 %v59, 80
    %v70 = vadd.s32 %v59, 88
    %v71 = vadd.s32 %v59, 96
    %v72 = vadd.s32 %v59, 104
    %v73 = vadd.s32 %v59, 112
    %v74 = vadd.s32 %v59, 120
    %vm75 = vcmp.lt.s32.totalorder %v59, 0
    %v76 = vsub.s32 0, %v59
    %v77 = vsel %vm75, %v76, %v59
    %v78 = vshrl.u32 %v77, 3
    %v79 = vand.u32 %v77, 7
    %v80 = vsub.s32 0, %v79
    %v81 = vsel %vm75, %v80, %v79
    %vm82 = vcmp.lt.s32.totalorder %v60, 0
    %v83 = vsub.s32 0, %v60
    %v84 = vsel %vm82, %v83, %v60
    %v85 = vshrl.u32 %v84, 3
    %v86 = vand.u32 %v84, 7
    %v87 = vsub.s32 0, %v86
    %v88 = vsel %vm82, %v87, %v86
    %vm89 = vcmp.lt.s32.totalorder %v61, 0
    %v90 = vsub.s32 0, %v61
    %v91 = vsel %vm89, %v90, %v61
    %v92 = vshrl.u32 %v91, 3
    %v93 = vand.u32 %v91, 7
    %v94 = vsub.s32 0, %v93
    %v95 = vsel %vm89, %v94, %v93
    %vm96 = vcmp.lt.s32.totalorder %v62, 0
    %v97 = vsub.s32 0, %v62
    %v98 = vsel %vm96, %v97, %v62
    %v99 = vshrl.u32 %v98, 3
    %v100 = vand.u32 %v98, 7
    %v101 = vsub.s32 0, %v100
    %v102 = vsel %vm96, %v101, %v100
    %vm103 = vcmp.lt.s32.totalorder %v63, 0
    %v104 = vsub.s32 0, %v63
    %v105 = vsel %vm103, %v104, %v63
    %v106 = vshrl.u32 %v105, 3
    %v107 = vand.u32 %v105, 7
    %v108 = vsub.s32 0, %v107
    %v109 = vsel %vm103, %v108, %v107
    %vm110 = vcmp.lt.s32.totalorder %v64, 0
    %v111 = vsub.s32 0, %v64
    %v112 = vsel %vm110, %v111, %v64
    %v113 = vshrl.u32 %v112, 3
    %v114 = vand.u32 %v112, 7
    %v115 = vsub.s32 0, %v114
    %v116 = vsel %vm110, %v115, %v114
    %vm117 = vcmp.lt.s32.totalorder %v65, 0
    %v118 = vsub.s32 0, %v65
    %v119 = vsel %vm117, %v118, %v65
    %v120 = vshrl.u32 %v119, 3
    %v121 = vand.u32 %v119, 7
    %v122 = vsub.s32 0, %v121
    %v123 = vsel %vm117, %v122, %v121
    %vm124 = vcmp.lt.s32.totalorder %v66, 0
    %v125 = vsub.s32 0, %v66
    %v126 = vsel %vm124, %v125, %v66
    %v127 = vshrl.u32 %v126, 3
    %v128 = vand.u32 %v126, 7
    %v129 = vsub.s32 0, %v128
    %v130 = vsel %vm124, %v129, %v128
    %vm131 = vcmp.lt.s32.totalorder %v67, 0
    %v132 = vsub.s32 0, %v67
    %v133 = vsel %vm131, %v132, %v67
    %v134 = vshrl.u32 %v133, 3
    %v135 = vand.u32 %v133, 7
    %v136 = vsub.s32 0, %v135
    %v137 = vsel %vm131, %v136, %v135
    %vm138 = vcmp.lt.s32.totalorder %v68, 0
    %v139 = vsub.s32 0, %v68
    %v140 = vsel %vm138, %v139, %v68
    %v141 = vshrl.u32 %v140, 3
    %v142 = vand.u32 %v140, 7
    %v143 = vsub.s32 0, %v142
    %v144 = vsel %vm138, %v143, %v142
    %vm145 = vcmp.lt.s32.totalorder %v69, 0
    %v146 = vsub.s32 0, %v69
    %v147 = vsel %vm145, %v146, %v69
    %v148 = vshrl.u32 %v147, 3
    %v149 = vand.u32 %v147, 7
    %v150 = vsub.s32 0, %v149
    %v151 = vsel %vm145, %v150, %v149
    %vm152 = vcmp.lt.s32.totalorder %v70, 0
    %v153 = vsub.s32 0, %v70
    %v154 = vsel %vm152, %v153, %v70
    %v155 = vshrl.u32 %v154, 3
    %v156 = vand.u32 %v154, 7
    %v157 = vsub.s32 0, %v156
    %v158 = vsel %vm152, %v157, %v156
    %vm159 = vcmp.lt.s32.totalorder %v71, 0
    %v160 = vsub.s32 0, %v71
    %v161 = vsel %vm159, %v160, %v71
    %v162 = vshrl.u32 %v161, 3
    %v163 = vand.u32 %v161, 7
    %v164 = vsub.s32 0, %v163
    %v165 = vsel %vm159, %v164, %v163
    %vm166 = vcmp.lt.s32.totalorder %v72, 0
    %v167 = vsub.s32 0, %v72
    %v168 = vsel %vm166, %v167, %v72
    %v169 = vshrl.u32 %v168, 3
    %v170 = vand.u32 %v168, 7
    %v171 = vsub.s32 0, %v170
    %v172 = vsel %vm166, %v171, %v170
    %vm173 = vcmp.lt.s32.totalorder %v73, 0
    %v174 = vsub.s32 0, %v73
    %v175 = vsel %vm173, %v174, %v73
    %v176 = vshrl.u32 %v175, 3
    %v177 = vand.u32 %v175, 7
    %v178 = vsub.s32 0, %v177
    %v179 = vsel %vm173, %v178, %v177
    %vm180 = vcmp.lt.s32.totalorder %v74, 0
    %v181 = vsub.s32 0, %v74
    %v182 = vsel %vm180, %v181, %v74
    %v183 = vshrl.u32 %v182, 3
    %v184 = vand.u32 %v182, 7
    %v185 = vsub.s32 0, %v184
    %v186 = vsel %vm180, %v185, %v184
    %vm187 = vcmp.ne.s32.totalorder %v81, 0
    %vm188 = vcmp.ne.s32.totalorder %v88, 0
    %vm189 = vcmp.ne.s32.totalorder %v95, 0
    %vm190 = vcmp.ne.s32.totalorder %v102, 0
    %vm191 = vcmp.ne.s32.totalorder %v109, 0
    %vm192 = vcmp.ne.s32.totalorder %v116, 0
    %vm193 = vcmp.ne.s32.totalorder %v123, 0
    %vm194 = vcmp.ne.s32.totalorder %v130, 0
    %vm195 = vcmp.ne.s32.totalorder %v137, 0
    %vm196 = vcmp.ne.s32.totalorder %v144, 0
    %vm197 = vcmp.ne.s32.totalorder %v151, 0
    %vm198 = vcmp.ne.s32.totalorder %v158, 0
    %vm199 = vcmp.ne.s32.totalorder %v165, 0
    %vm200 = vcmp.ne.s32.totalorder %v172, 0
    %vm201 = vcmp.ne.s32.totalorder %v179, 0
    %vm202 = vcmp.ne.s32.totalorder %v186, 0
    %vm203 = vcmp.lt.s32.totalorder %v81, 0
    %vm204 = vcmp.lt.s32.totalorder %v88, 0
    %vm205 = vcmp.lt.s32.totalorder %v95, 0
    %vm206 = vcmp.lt.s32.totalorder %v102, 0
    %vm207 = vcmp.lt.s32.totalorder %v109, 0
    %vm208 = vcmp.lt.s32.totalorder %v116, 0
    %vm209 = vcmp.lt.s32.totalorder %v123, 0
    %vm210 = vcmp.lt.s32.totalorder %v130, 0
    %vm211 = vcmp.lt.s32.totalorder %v137, 0
    %vm212 = vcmp.lt.s32.totalorder %v144, 0
    %vm213 = vcmp.lt.s32.totalorder %v151, 0
    %vm214 = vcmp.lt.s32.totalorder %v158, 0
    %vm215 = vcmp.lt.s32.totalorder %v165, 0
    %vm216 = vcmp.lt.s32.totalorder %v172, 0
    %vm217 = vcmp.lt.s32.totalorder %v179, 0
    %vm218 = vcmp.lt.s32.totalorder %v186, 0
    %vm219 = vmand %vm203, %vm187
    %vm220 = vmand %vm204, %vm188
    %vm221 = vmand %vm205, %vm189
    %vm222 = vmand %vm206, %vm190
    %vm223 = vmand %vm207, %vm191
    %vm224 = vmand %vm208, %vm192
    %vm225 = vmand %vm209, %vm193
    %vm226 = vmand %vm210, %vm194
    %vm227 = vmand %vm211, %vm195
    %vm228 = vmand %vm212, %vm196
    %vm229 = vmand %vm213, %vm197
    %vm230 = vmand %vm214, %vm198
    %vm231 = vmand %vm215, %vm199
    %vm232 = vmand %vm216, %vm200
    %vm233 = vmand %vm217, %vm201
    %vm234 = vmand %vm218, %vm202
    %v235 = vadd.s32 %v81, 8
    %v236 = vadd.s32 %v88, 8
    %v237 = vadd.s32 %v95, 8
    %v238 = vadd.s32 %v102, 8
    %v239 = vadd.s32 %v109, 8
    %v240 = vadd.s32 %v116, 8
    %v241 = vadd.s32 %v123, 8
    %v242 = vadd.s32 %v130, 8
    %v243 = vadd.s32 %v137, 8
    %v244 = vadd.s32 %v144, 8
    %v245 = vadd.s32 %v151, 8
    %v246 = vadd.s32 %v158, 8
    %v247 = vadd.s32 %v165, 8
    %v248 = vadd.s32 %v172, 8
    %v249 = vadd.s32 %v179, 8
    %v250 = vadd.s32 %v186, 8
    %v251 = vsel %vm219, %v235, %v81
    %v252 = vsel %vm220, %v236, %v88
    %v253 = vsel %vm221, %v237, %v95
    %v254 = vsel %vm222, %v238, %v102
    %v255 = vsel %vm223, %v239, %v109
    %v256 = vsel %vm224, %v240, %v116
    %v257 = vsel %vm225, %v241, %v123
    %v258 = vsel %vm226, %v242, %v130
    %v259 = vsel %vm227, %v243, %v137
    %v260 = vsel %vm228, %v244, %v144
    %v261 = vsel %vm229, %v245, %v151
    %v262 = vsel %vm230, %v246, %v158
    %v263 = vsel %vm231, %v247, %v165
    %v264 = vsel %vm232, %v248, %v172
    %v265 = vsel %vm233, %v249, %v179
    %v266 = vsel %vm234, %v250, %v186
    %vm267 = vcmp.lt.s32.totalorder %v251, 7
    %vm268 = vcmp.lt.s32.totalorder %v252, 7
    %vm269 = vcmp.lt.s32.totalorder %v253, 7
    %vm270 = vcmp.lt.s32.totalorder %v254, 7
    %vm271 = vcmp.lt.s32.totalorder %v255, 7
    %vm272 = vcmp.lt.s32.totalorder %v256, 7
    %vm273 = vcmp.lt.s32.totalorder %v257, 7
    %vm274 = vcmp.lt.s32.totalorder %v258, 7
    %vm275 = vcmp.lt.s32.totalorder %v259, 7
    %vm276 = vcmp.lt.s32.totalorder %v260, 7
    %vm277 = vcmp.lt.s32.totalorder %v261, 7
    %vm278 = vcmp.lt.s32.totalorder %v262, 7
    %vm279 = vcmp.lt.s32.totalorder %v263, 7
    %vm280 = vcmp.lt.s32.totalorder %v264, 7
    %vm281 = vcmp.lt.s32.totalorder %v265, 7
    %vm282 = vcmp.lt.s32.totalorder %v266, 7
    %vm283 = vcmp.lt.s32.totalorder %v59, 0
    %v284 = vsub.s32 0, %v59
    %v285 = vsel %vm283, %v284, %v59
    %v286 = vshrl.u32 %v285, 6
    %v287 = vand.u32 %v285, 63
    %v288 = vsub.s32 0, %v287
    %v289 = vsel %vm283, %v288, %v287
    %vm290 = vcmp.lt.s32.totalorder %v60, 0
    %v291 = vsub.s32 0, %v60
    %v292 = vsel %vm290, %v291, %v60
    %v293 = vshrl.u32 %v292, 6
    %v294 = vand.u32 %v292, 63
    %v295 = vsub.s32 0, %v294
    %v296 = vsel %vm290, %v295, %v294
    %vm297 = vcmp.lt.s32.totalorder %v61, 0
    %v298 = vsub.s32 0, %v61
    %v299 = vsel %vm297, %v298, %v61
    %v300 = vshrl.u32 %v299, 6
    %v301 = vand.u32 %v299, 63
    %v302 = vsub.s32 0, %v301
    %v303 = vsel %vm297, %v302, %v301
    %vm304 = vcmp.lt.s32.totalorder %v62, 0
    %v305 = vsub.s32 0, %v62
    %v306 = vsel %vm304, %v305, %v62
    %v307 = vshrl.u32 %v306, 6
    %v308 = vand.u32 %v306, 63
    %v309 = vsub.s32 0, %v308
    %v310 = vsel %vm304, %v309, %v308
    %vm311 = vcmp.lt.s32.totalorder %v63, 0
    %v312 = vsub.s32 0, %v63
    %v313 = vsel %vm311, %v312, %v63
    %v314 = vshrl.u32 %v313, 6
    %v315 = vand.u32 %v313, 63
    %v316 = vsub.s32 0, %v315
    %v317 = vsel %vm311, %v316, %v315
    %vm318 = vcmp.lt.s32.totalorder %v64, 0
    %v319 = vsub.s32 0, %v64
    %v320 = vsel %vm318, %v319, %v64
    %v321 = vshrl.u32 %v320, 6
    %v322 = vand.u32 %v320, 63
    %v323 = vsub.s32 0, %v322
    %v324 = vsel %vm318, %v323, %v322
    %vm325 = vcmp.lt.s32.totalorder %v65, 0
    %v326 = vsub.s32 0, %v65
    %v327 = vsel %vm325, %v326, %v65
    %v328 = vshrl.u32 %v327, 6
    %v329 = vand.u32 %v327, 63
    %v330 = vsub.s32 0, %v329
    %v331 = vsel %vm325, %v330, %v329
    %vm332 = vcmp.lt.s32.totalorder %v66, 0
    %v333 = vsub.s32 0, %v66
    %v334 = vsel %vm332, %v333, %v66
    %v335 = vshrl.u32 %v334, 6
    %v336 = vand.u32 %v334, 63
    %v337 = vsub.s32 0, %v336
    %v338 = vsel %vm332, %v337, %v336
    %vm339 = vcmp.lt.s32.totalorder %v67, 0
    %v340 = vsub.s32 0, %v67
    %v341 = vsel %vm339, %v340, %v67
    %v342 = vshrl.u32 %v341, 6
    %v343 = vand.u32 %v341, 63
    %v344 = vsub.s32 0, %v343
    %v345 = vsel %vm339, %v344, %v343
    %vm346 = vcmp.lt.s32.totalorder %v68, 0
    %v347 = vsub.s32 0, %v68
    %v348 = vsel %vm346, %v347, %v68
    %v349 = vshrl.u32 %v348, 6
    %v350 = vand.u32 %v348, 63
    %v351 = vsub.s32 0, %v350
    %v352 = vsel %vm346, %v351, %v350
    %vm353 = vcmp.lt.s32.totalorder %v69, 0
    %v354 = vsub.s32 0, %v69
    %v355 = vsel %vm353, %v354, %v69
    %v356 = vshrl.u32 %v355, 6
    %v357 = vand.u32 %v355, 63
    %v358 = vsub.s32 0, %v357
    %v359 = vsel %vm353, %v358, %v357
    %vm360 = vcmp.lt.s32.totalorder %v70, 0
    %v361 = vsub.s32 0, %v70
    %v362 = vsel %vm360, %v361, %v70
    %v363 = vshrl.u32 %v362, 6
    %v364 = vand.u32 %v362, 63
    %v365 = vsub.s32 0, %v364
    %v366 = vsel %vm360, %v365, %v364
    %vm367 = vcmp.lt.s32.totalorder %v71, 0
    %v368 = vsub.s32 0, %v71
    %v369 = vsel %vm367, %v368, %v71
    %v370 = vshrl.u32 %v369, 6
    %v371 = vand.u32 %v369, 63
    %v372 = vsub.s32 0, %v371
    %v373 = vsel %vm367, %v372, %v371
    %vm374 = vcmp.lt.s32.totalorder %v72, 0
    %v375 = vsub.s32 0, %v72
    %v376 = vsel %vm374, %v375, %v72
    %v377 = vshrl.u32 %v376, 6
    %v378 = vand.u32 %v376, 63
    %v379 = vsub.s32 0, %v378
    %v380 = vsel %vm374, %v379, %v378
    %vm381 = vcmp.lt.s32.totalorder %v73, 0
    %v382 = vsub.s32 0, %v73
    %v383 = vsel %vm381, %v382, %v73
    %v384 = vshrl.u32 %v383, 6
    %v385 = vand.u32 %v383, 63
    %v386 = vsub.s32 0, %v385
    %v387 = vsel %vm381, %v386, %v385
    %vm388 = vcmp.lt.s32.totalorder %v74, 0
    %v389 = vsub.s32 0, %v74
    %v390 = vsel %vm388, %v389, %v74
    %v391 = vshrl.u32 %v390, 6
    %v392 = vand.u32 %v390, 63
    %v393 = vsub.s32 0, %v392
    %v394 = vsel %vm388, %v393, %v392
    %vm395 = vcmp.ne.s32.totalorder %v289, 0
    %vm396 = vcmp.ne.s32.totalorder %v296, 0
    %vm397 = vcmp.ne.s32.totalorder %v303, 0
    %vm398 = vcmp.ne.s32.totalorder %v310, 0
    %vm399 = vcmp.ne.s32.totalorder %v317, 0
    %vm400 = vcmp.ne.s32.totalorder %v324, 0
    %vm401 = vcmp.ne.s32.totalorder %v331, 0
    %vm402 = vcmp.ne.s32.totalorder %v338, 0
    %vm403 = vcmp.ne.s32.totalorder %v345, 0
    %vm404 = vcmp.ne.s32.totalorder %v352, 0
    %vm405 = vcmp.ne.s32.totalorder %v359, 0
    %vm406 = vcmp.ne.s32.totalorder %v366, 0
    %vm407 = vcmp.ne.s32.totalorder %v373, 0
    %vm408 = vcmp.ne.s32.totalorder %v380, 0
    %vm409 = vcmp.ne.s32.totalorder %v387, 0
    %vm410 = vcmp.ne.s32.totalorder %v394, 0
    %vm411 = vcmp.lt.s32.totalorder %v289, 0
    %vm412 = vcmp.lt.s32.totalorder %v296, 0
    %vm413 = vcmp.lt.s32.totalorder %v303, 0
    %vm414 = vcmp.lt.s32.totalorder %v310, 0
    %vm415 = vcmp.lt.s32.totalorder %v317, 0
    %vm416 = vcmp.lt.s32.totalorder %v324, 0
    %vm417 = vcmp.lt.s32.totalorder %v331, 0
    %vm418 = vcmp.lt.s32.totalorder %v338, 0
    %vm419 = vcmp.lt.s32.totalorder %v345, 0
    %vm420 = vcmp.lt.s32.totalorder %v352, 0
    %vm421 = vcmp.lt.s32.totalorder %v359, 0
    %vm422 = vcmp.lt.s32.totalorder %v366, 0
    %vm423 = vcmp.lt.s32.totalorder %v373, 0
    %vm424 = vcmp.lt.s32.totalorder %v380, 0
    %vm425 = vcmp.lt.s32.totalorder %v387, 0
    %vm426 = vcmp.lt.s32.totalorder %v394, 0
    %vm427 = vmand %vm411, %vm395
    %vm428 = vmand %vm412, %vm396
    %vm429 = vmand %vm413, %vm397
    %vm430 = vmand %vm414, %vm398
    %vm431 = vmand %vm415, %vm399
    %vm432 = vmand %vm416, %vm400
    %vm433 = vmand %vm417, %vm401
    %vm434 = vmand %vm418, %vm402
    %vm435 = vmand %vm419, %vm403
    %vm436 = vmand %vm420, %vm404
    %vm437 = vmand %vm421, %vm405
    %vm438 = vmand %vm422, %vm406
    %vm439 = vmand %vm423, %vm407
    %vm440 = vmand %vm424, %vm408
    %vm441 = vmand %vm425, %vm409
    %vm442 = vmand %vm426, %vm410
    %v443 = vadd.s32 %v289, 64
    %v444 = vadd.s32 %v296, 64
    %v445 = vadd.s32 %v303, 64
    %v446 = vadd.s32 %v310, 64
    %v447 = vadd.s32 %v317, 64
    %v448 = vadd.s32 %v324, 64
    %v449 = vadd.s32 %v331, 64
    %v450 = vadd.s32 %v338, 64
    %v451 = vadd.s32 %v345, 64
    %v452 = vadd.s32 %v352, 64
    %v453 = vadd.s32 %v359, 64
    %v454 = vadd.s32 %v366, 64
    %v455 = vadd.s32 %v373, 64
    %v456 = vadd.s32 %v380, 64
    %v457 = vadd.s32 %v387, 64
    %v458 = vadd.s32 %v394, 64
    %v459 = vsel %vm427, %v443, %v289
    %v460 = vsel %vm428, %v444, %v296
    %v461 = vsel %vm429, %v445, %v303
    %v462 = vsel %vm430, %v446, %v310
    %v463 = vsel %vm431, %v447, %v317
    %v464 = vsel %vm432, %v448, %v324
    %v465 = vsel %vm433, %v449, %v331
    %v466 = vsel %vm434, %v450, %v338
    %v467 = vsel %vm435, %v451, %v345
    %v468 = vsel %vm436, %v452, %v352
    %v469 = vsel %vm437, %v453, %v359
    %v470 = vsel %vm438, %v454, %v366
    %v471 = vsel %vm439, %v455, %v373
    %v472 = vsel %vm440, %v456, %v380
    %v473 = vsel %vm441, %v457, %v387
    %v474 = vsel %vm442, %v458, %v394
    %vm475 = vcmp.lt.s32.totalorder %v459, 56
    %vm476 = vcmp.lt.s32.totalorder %v460, 56
    %vm477 = vcmp.lt.s32.totalorder %v461, 56
    %vm478 = vcmp.lt.s32.totalorder %v462, 56
    %vm479 = vcmp.lt.s32.totalorder %v463, 56
    %vm480 = vcmp.lt.s32.totalorder %v464, 56
    %vm481 = vcmp.lt.s32.totalorder %v465, 56
    %vm482 = vcmp.lt.s32.totalorder %v466, 56
    %vm483 = vcmp.lt.s32.totalorder %v467, 56
    %vm484 = vcmp.lt.s32.totalorder %v468, 56
    %vm485 = vcmp.lt.s32.totalorder %v469, 56
    %vm486 = vcmp.lt.s32.totalorder %v470, 56
    %vm487 = vcmp.lt.s32.totalorder %v471, 56
    %vm488 = vcmp.lt.s32.totalorder %v472, 56
    %vm489 = vcmp.lt.s32.totalorder %v473, 56
    %vm490 = vcmp.lt.s32.totalorder %v474, 56
    %v491 = vld [vmem:[#allocation4] sm:$0xff]
    %v492 = vld [vmem:[#allocation4 + $0x8] sm:$0xff]
    %v493 = vld [vmem:[#allocation4 + $0x10] sm:$0xff]
    %v494 = vld [vmem:[#allocation4 + $0x18] sm:$0xff]
    %v495 = vld [vmem:[#allocation4 + $0x20] sm:$0xff]
    %v496 = vld [vmem:[#allocation4 + $0x28] sm:$0xff]
    %v497 = vld [vmem:[#allocation4 + $0x30] sm:$0xff]
    %v498 = vld [vmem:[#allocation4 + $0x38] sm:$0xff]
    %v499 = vrot.slane %v42, 1
    %v500 = vrot.slane %v43, 1
    %v501 = vrot.slane %v44, 1
    %v502 = vrot.slane %v45, 1
    %v503 = vrot.slane %v46, 1
    %v504 = vrot.slane %v47, 1
    %v505 = vrot.slane %v48, 1
    %v506 = vrot.slane %v49, 1
    %v507 = vrot.slane %v50, 1
    %v508 = vrot.slane %v51, 1
    %v509 = vrot.slane %v52, 1
    %v510 = vrot.slane %v53, 1
    %v511 = vrot.slane %v54, 1
    %v512 = vrot.slane %v55, 1
    %v513 = vrot.slane %v56, 1
    %v514 = vrot.slane %v57, 1
    %vm515 = vcmp.lt.s32.totalorder %v59, 7
    %v516 = vsel %vm515, %v513, %v514
    %v517 = vsel %vm515, %v512, %v513
    %v518 = vsel %vm515, %v511, %v512
    %v519 = vsel %vm515, %v510, %v511
    %v520 = vsel %vm515, %v509, %v510
    %v521 = vsel %vm515, %v508, %v509
    %v522 = vsel %vm515, %v507, %v508
    %v523 = vsel %vm515, %v506, %v507
    %v524 = vsel %vm515, %v505, %v506
    %v525 = vsel %vm515, %v504, %v505
    %v526 = vsel %vm515, %v503, %v504
    %v527 = vsel %vm515, %v502, %v503
    %v528 = vsel %vm515, %v501, %v502
    %v529 = vsel %vm515, %v500, %v501
    %v530 = vsel %vm515, %v499, %v500
    %v531 = vsel %vm515, %v514, %v499
    %v532 = vsel %vm267, 1, 0
    %v533 = vsel %vm268, 1, 0
    %v534 = vsel %vm269, 1, 0
    %v535 = vsel %vm270, 1, 0
    %v536 = vsel %vm271, 1, 0
    %v537 = vsel %vm272, 1, 0
    %v538 = vsel %vm273, 1, 0
    %v539 = vsel %vm274, 1, 0
    %v540 = vsel %vm275, 1, 0
    %v541 = vsel %vm276, 1, 0
    %v542 = vsel %vm277, 1, 0
    %v543 = vsel %vm278, 1, 0
    %v544 = vsel %vm279, 1, 0
    %v545 = vsel %vm280, 1, 0
    %v546 = vsel %vm281, 1, 0
    %v547 = vsel %vm282, 1, 0
    %vm548 = vcmp.eq.s32.totalorder %v532, 1
    %vm549 = vcmp.eq.s32.totalorder %v533, 1
    %vm550 = vcmp.eq.s32.totalorder %v534, 1
    %vm551 = vcmp.eq.s32.totalorder %v535, 1
    %vm552 = vcmp.eq.s32.totalorder %v536, 1
    %vm553 = vcmp.eq.s32.totalorder %v537, 1
    %vm554 = vcmp.eq.s32.totalorder %v538, 1
    %vm555 = vcmp.eq.s32.totalorder %v539, 1
    %vm556 = vcmp.eq.s32.totalorder %v540, 1
    %vm557 = vcmp.eq.s32.totalorder %v541, 1
    %vm558 = vcmp.eq.s32.totalorder %v542, 1
    %vm559 = vcmp.eq.s32.totalorder %v543, 1
    %vm560 = vcmp.eq.s32.totalorder %v544, 1
    %vm561 = vcmp.eq.s32.totalorder %v545, 1
    %vm562 = vcmp.eq.s32.totalorder %v546, 1
    %vm563 = vcmp.eq.s32.totalorder %v547, 1
    %v564 = vsel %vm548, %v530, 0.0
    %v565 = vsel %vm549, %v529, 0.0
    %v566 = vsel %vm550, %v528, 0.0
    %v567 = vsel %vm551, %v527, 0.0
    %v568 = vsel %vm552, %v526, 0.0
    %v569 = vsel %vm553, %v525, 0.0
    %v570 = vsel %vm554, %v524, 0.0
    %v571 = vsel %vm555, %v523, 0.0
    %v572 = vsel %vm556, %v522, 0.0
    %v573 = vsel %vm557, %v521, 0.0
    %v574 = vsel %vm558, %v520, 0.0
    %v575 = vsel %vm559, %v519, 0.0
    %v576 = vsel %vm560, %v518, 0.0
    %v577 = vsel %vm561, %v517, 0.0
    %v578 = vsel %vm562, %v516, 0.0
    %v579 = vsel %vm563, %v531, 0.0
    %s580 = scalar_lea.vmem [#allocation4], 64
    %v581 = vld [vmem:[%s580] sm:$0xff]
    %v582 = vld [vmem:[%s580 + $0x8] sm:$0xff]
    %v583 = vld [vmem:[%s580 + $0x10] sm:$0xff]
    %v584 = vld [vmem:[%s580 + $0x18] sm:$0xff]
    %v585 = vld [vmem:[%s580 + $0x20] sm:$0xff]
    %v586 = vld [vmem:[%s580 + $0x28] sm:$0xff]
    %v587 = vld [vmem:[%s580 + $0x30] sm:$0xff]
    %v588 = vld [vmem:[%s580 + $0x38] sm:$0xff]
    %vm589 = vcmask 523264
    %v591 = vsel %vm589, %v564, 0
    %v594 = vsel %vm589, %v565, 0
    %v597 = vsel %vm589, %v566, 0
    %v600 = vsel %vm589, %v567, 0
    %v603 = vsel %vm589, %v568, 0
    %v606 = vsel %vm589, %v569, 0
    %v609 = vsel %vm589, %v570, 0
    %v612 = vsel %vm589, %v571, 0
    %v615 = vsel %vm589, %v572, 0
    %v618 = vsel %vm589, %v573, 0
    %v621 = vsel %vm589, %v574, 0
    %v624 = vsel %vm589, %v575, 0
    %v627 = vsel %vm589, %v576, 0
    %v630 = vsel %vm589, %v577, 0
    %v633 = vsel %vm589, %v578, 0
    %v636 = vsel %vm589, %v579, 0
    %638 = vmatprep.subr.mxu0 0.0
    %v639 = vand.u32 %v581, 4294901760
    %640 = vmatpush1.msra.mxu0 %v639
    %641 = vmatprep.subr.mxu0 0.0
    %v642 = vand.u32 %v582, 4294901760
    %643 = vmatpush1.msra.mxu0 %v642
    %644 = vmatprep.subr.mxu0 0.0
    %v645 = vand.u32 %v583, 4294901760
    %646 = vmatpush1.msra.mxu0 %v645
    %647 = vmatprep.subr.mxu0 0.0
    %v648 = vand.u32 %v584, 4294901760
    %649 = vmatpush1.msra.mxu0 %v648
    %650 = vmatprep.subr.mxu0 0.0
    %v651 = vand.u32 %v585, 4294901760
    %652 = vmatpush1.msra.mxu0 %v651
    %653 = vmatprep.subr.mxu0 0.0
    %v654 = vand.u32 %v586, 4294901760
    %655 = vmatpush1.msra.mxu0 %v654
    %656 = vmatprep.subr.mxu0 0.0
    %v657 = vand.u32 %v587, 4294901760
    %658 = vmatpush1.msra.mxu0 %v657
    %659 = vmatprep.subr.mxu0 0.0
    %v660 = vand.u32 %v588, 4294901760
    %661 = vmatpush1.msra.mxu0 %v660
    %662 = vmatprep.subr.mxu0 0.0
    %663 = vmatpush1.msra.mxu0 0.0
    %664 = vmatprep.subr.mxu0 0.0
    %665 = vmatpush1.msra.mxu0 0.0
    %666 = vmatprep.subr.mxu0 0.0
    %667 = vmatpush1.msra.mxu0 0.0
    %668 = vmatprep.subr.mxu0 0.0
    %669 = vmatpush1.msra.mxu0 0.0
    %670 = vmatprep.subr.mxu0 0.0
    %671 = vmatpush1.msra.mxu0 0.0
    %672 = vmatprep.subr.mxu0 0.0
    %673 = vmatpush1.msra.mxu0 0.0
    %674 = vmatprep.subr.mxu0 0.0
    %675 = vmatpush1.msra.mxu0 0.0
    %676 = vmatprep.subr.mxu0 0.0
    %677 = vmatpush1.msra.mxu0 0.0
    %678 = vmatprep.subr.mxu0 0.0
    %679 = vmatpush1.msra.mxu0 0.0
    %680 = vmatprep.subr.mxu0 0.0
    %681 = vmatpush1.msra.mxu0 0.0
    %682 = vmatprep.subr.mxu0 0.0
    %683 = vmatpush1.msra.mxu0 0.0
    %684 = vmatprep.subr.mxu0 0.0
    %685 = vmatpush1.msra.mxu0 0.0
    %686 = vmatprep.subr.mxu0 0.0
    %687 = vmatpush1.msra.mxu0 0.0
    %688 = vmatprep.subr.mxu0 0.0
    %689 = vmatpush1.msra.mxu0 0.0
    %690 = vmatprep.subr.mxu0 0.0
    %691 = vmatpush1.msra.mxu0 0.0
    %692 = vmatprep.subr.mxu0 0.0
    %693 = vmatpush1.msra.mxu0 0.0
    %694 = vmatprep.subr.mxu0 0.0
    %695 = vmatpush1.msra.mxu0 0.0
    %696 = vmatprep.subr.mxu0 0.0
    %697 = vmatpush1.msra.mxu0 0.0
    %698 = vmatprep.subr.mxu0 0.0
    %699 = vmatpush1.msra.mxu0 0.0
    %700 = vmatprep.subr.mxu0 0.0
    %701 = vmatpush1.msra.mxu0 0.0
    %702 = vmatprep.subr.mxu0 0.0
    %703 = vmatpush1.msra.mxu0 0.0
    %704 = vmatprep.subr.mxu0 0.0
    %705 = vmatpush1.msra.mxu0 0.0
    %706 = vmatprep.subr.mxu0 0.0
    %707 = vmatpush1.msra.mxu0 0.0
    %708 = vmatprep.subr.mxu0 0.0
    %709 = vmatpush1.msra.mxu0 0.0
    %710 = vmatprep.mubr.f32.mxu0 0.0
    %v711 = vand.u32 %v591, 4294901760
    %v712 = vsub.f32 %v591, %v711
    %v713 = vand.u32 %v712, 4294901760
    %v714 = vsub.f32 %v712, %v713
    %v715 = vand.u32 %v714, 4294901760
    %716 = vmatmul.mubr.f32.gmra.mrb[0].mxu0 %v715
    %v717 = vpop.f32.mrb[0].mxu0
    %v718 = vadd.f32 0.0, %v717
    %v719 = vpop.f32.mrb[0].mxu0
    %720 = vmatprep.mubr.f32.mxu0 0.0
    %v721 = vand.u32 %v594, 4294901760
    %v722 = vsub.f32 %v594, %v721
    %v723 = vand.u32 %v722, 4294901760
    %v724 = vsub.f32 %v722, %v723
    %v725 = vand.u32 %v724, 4294901760
    %726 = vmatmul.mubr.f32.gmra.mrb[0].mxu0 %v725
    %v727 = vpop.f32.mrb[0].mxu0
    %v728 = vadd.f32 0.0, %v727
    %v729 = vpop.f32.mrb[0].mxu0
    %730 = vmatprep.mubr.f32.mxu0 0.0
    %v731 = vand.u32 %v597, 4294901760
    %v732 = vsub.f32 %v597, %v731
    %v733 = vand.u32 %v732, 4294901760
    %v734 = vsub.f32 %v732, %v733
    %v735 = vand.u32 %v734, 4294901760
    %736 = vmatmul.mubr.f32.gmra.mrb[0].mxu0 %v735
    %v737 = vpop.f32.mrb[0].mxu0
    %v738 = vadd.f32 0.0, %v737
    %v739 = vpop.f32.mrb[0].mxu0
    %740 = vmatprep.mubr.f32.mxu0 0.0
    %v741 = vand.u32 %v600, 4294901760
    %v742 = vsub.f32 %v600, %v741
    %v743 = vand.u32 %v742, 4294901760
    %v744 = vsub.f32 %v742, %v743
    %v745 = vand.u32 %v744, 4294901760
    %746 = vmatmul.mubr.f32.gmra.mrb[0].mxu0 %v745
    %v747 = vpop.f32.mrb[0].mxu0
    %v748 = vadd.f32 0.0, %v747
    %v749 = vpop.f32.mrb[0].mxu0
    %750 = vmatprep.mubr.f32.mxu0 0.0
    %v751 = vand.u32 %v603, 4294901760
    %v752 = vsub.f32 %v603, %v751
    %v753 = vand.u32 %v752, 4294901760
    %v754 = vsub.f32 %v752, %v753
    %v755 = vand.u32 %v754, 4294901760
    %756 = vmatmul.mubr.f32.gmra.mrb[0].mxu0 %v755
    %v757 = vpop.f32.mrb[0].mxu0
    %v758 = vadd.f32 0.0, %v757
    %v759 = vpop.f32.mrb[0].mxu0
    %760 = vmatprep.mubr.f32.mxu0 0.0
    %v761 = vand.u32 %v606, 4294901760
    %v762 = vsub.f32 %v606, %v761
    %v763 = vand.u32 %v762, 4294901760
    %v764 = vsub.f32 %v762, %v763
    %v765 = vand.u32 %v764, 4294901760
    %766 = vmatmul.mubr.f32.gmra.mrb[0].mxu0 %v765
    %v767 = vpop.f32.mrb[0].mxu0
    %v768 = vadd.f32 0.0, %v767
    %v769 = vpop.f32.mrb[0].mxu0
    %770 = vmatprep.mubr.f32.mxu0 0.0
    %v771 = vand.u32 %v609, 4294901760
    %v772 = vsub.f32 %v609, %v771
    %v773 = vand.u32 %v772, 4294901760
    %v774 = vsub.f32 %v772, %v773
    %v775 = vand.u32 %v774, 4294901760
    %776 = vmatmul.mubr.f32.gmra.mrb[0].mxu0 %v775
    %v777 = vpop.f32.mrb[0].mxu0
    %v778 = vadd.f32 0.0, %v777
    %v779 = vpop.f32.mrb[0].mxu0
    %780 = vmatprep.mubr.f32.mxu0 0.0
    %v781 = vand.u32 %v612, 4294901760
    %v782 = vsub.f32 %v612, %v781
    %v783 = vand.u32 %v782, 4294901760
    %v784 = vsub.f32 %v782, %v783
    %v785 = vand.u32 %v784, 4294901760
    %786 = vmatmul.mubr.f32.gmra.mrb[0].mxu0 %v785
    %v787 = vpop.f32.mrb[0].mxu0
    %v788 = vadd.f32 0.0, %v787
    %v789 = vpop.f32.mrb[0].mxu0
    %790 = vmatprep.mubr.f32.mxu0 0.0
    %v791 = vand.u32 %v615, 4294901760
    %v792 = vsub.f32 %v615, %v791
    %v793 = vand.u32 %v792, 4294901760
    %v794 = vsub.f32 %v792, %v793
    %v795 = vand.u32 %v794, 4294901760
    %796 = vmatmul.mubr.f32.gmra.mrb[0].mxu0 %v795
    %v797 = vpop.f32.mrb[0].mxu0
    %v798 = vadd.f32 0.0, %v797
    %v799 = vpop.f32.mrb[0].mxu0
    %800 = vmatprep.mubr.f32.mxu0 0.0
    %v801 = vand.u32 %v618, 4294901760
    %v802 = vsub.f32 %v618, %v801
    %v803 = vand.u32 %v802, 4294901760
    %v804 = vsub.f32 %v802, %v803
    %v805 = vand.u32 %v804, 4294901760
    %806 = vmatmul.mubr.f32.gmra.mrb[0].mxu0 %v805
    %v807 = vpop.f32.mrb[0].mxu0
    %v808 = vadd.f32 0.0, %v807
    %v809 = vpop.f32.mrb[0].mxu0
    %810 = vmatprep.mubr.f32.mxu0 0.0
    %v811 = vand.u32 %v621, 4294901760
    %v812 = vsub.f32 %v621, %v811
    %v813 = vand.u32 %v812, 4294901760
    %v814 = vsub.f32 %v812, %v813
    %v815 = vand.u32 %v814, 4294901760
    %816 = vmatmul.mubr.f32.gmra.mrb[0].mxu0 %v815
    %v817 = vpop.f32.mrb[0].mxu0
    %v818 = vadd.f32 0.0, %v817
    %v819 = vpop.f32.mrb[0].mxu0
    %820 = vmatprep.mubr.f32.mxu0 0.0
    %v821 = vand.u32 %v624, 4294901760
    %v822 = vsub.f32 %v624, %v821
    %v823 = vand.u32 %v822, 4294901760
    %v824 = vsub.f32 %v822, %v823
    %v825 = vand.u32 %v824, 4294901760
    %826 = vmatmul.mubr.f32.gmra.mrb[0].mxu0 %v825
    %v827 = vpop.f32.mrb[0].mxu0
    %v828 = vadd.f32 0.0, %v827
    %v829 = vpop.f32.mrb[0].mxu0
    %830 = vmatprep.mubr.f32.mxu0 0.0
    %v831 = vand.u32 %v627, 4294901760
    %v832 = vsub.f32 %v627, %v831
    %v833 = vand.u32 %v832, 4294901760
    %v834 = vsub.f32 %v832, %v833
    %v835 = vand.u32 %v834, 4294901760
    %836 = vmatmul.mubr.f32.gmra.mrb[0].mxu0 %v835
    %v837 = vpop.f32.mrb[0].mxu0
    %v838 = vadd.f32 0.0, %v837
    %v839 = vpop.f32.mrb[0].mxu0
    %840 = vmatprep.mubr.f32.mxu0 0.0
    %v841 = vand.u32 %v630, 4294901760
    %v842 = vsub.f32 %v630, %v841
    %v843 = vand.u32 %v842, 4294901760
    %v844 = vsub.f32 %v842, %v843
    %v845 = vand.u32 %v844, 4294901760
    %846 = vmatmul.mubr.f32.gmra.mrb[0].mxu0 %v845
    %v847 = vpop.f32.mrb[0].mxu0
    %v848 = vadd.f32 0.0, %v847
    %v849 = vpop.f32.mrb[0].mxu0
    %850 = vmatprep.mubr.f32.mxu0 0.0
    %v851 = vand.u32 %v633, 4294901760
    %v852 = vsub.f32 %v633, %v851
    %v853 = vand.u32 %v852, 4294901760
    %v854 = vsub.f32 %v852, %v853
    %v855 = vand.u32 %v854, 4294901760
    %856 = vmatmul.mubr.f32.gmra.mrb[0].mxu0 %v855
    %v857 = vpop.f32.mrb[0].mxu0
    %v858 = vadd.f32 0.0, %v857
    %v859 = vpop.f32.mrb[0].mxu0
    %860 = vmatprep.mubr.f32.mxu0 0.0
    %v861 = vand.u32 %v636, 4294901760
    %v862 = vsub.f32 %v636, %v861
    %v863 = vand.u32 %v862, 4294901760
    %v864 = vsub.f32 %v862, %v863
    %v865 = vand.u32 %v864, 4294901760
    %866 = vmatmul.mubr.f32.gmra.mrb[0].mxu0 %v865
    %v867 = vpop.f32.mrb[0].mxu0
    %v868 = vadd.f32 0.0, %v867
    %v869 = vpop.f32.mrb[0].mxu0
    %870 = vdwg.mxu0
    %871 = vmatprep.subr.mxu0 0.0
    %v872 = vand.u32 %v581, 4294901760
    %v873 = vsub.f32 %v581, %v872
    %v874 = vand.u32 %v873, 4294901760
    %v875 = vsub.f32 %v873, %v874
    %v876 = vand.u32 %v875, 4294901760
    %877 = vmatpush1.msra.mxu0 %v876
    %878 = vmatprep.subr.mxu0 0.0
    %v879 = vand.u32 %v582, 4294901760
    %v880 = vsub.f32 %v582, %v879
    %v881 = vand.u32 %v880, 4294901760
    %v882 = vsub.f32 %v880, %v881
    %v883 = vand.u32 %v882, 4294901760
    %884 = vmatpush1.msra.mxu0 %v883
    %885 = vmatprep.subr.mxu0 0.0
    %v886 = vand.u32 %v583, 4294901760
    %v887 = vsub.f32 %v583, %v886
    %v888 = vand.u32 %v887, 4294901760
    %v889 = vsub.f32 %v887, %v888
    %v890 = vand.u32 %v889, 4294901760
    %891 = vmatpush1.msra.mxu0 %v890
    %892 = vmatprep.subr.mxu0 0.0
    %v893 = vand.u32 %v584, 4294901760
    %v894 = vsub.f32 %v584, %v893
    %v895 = vand.u32 %v894, 4294901760
    %v896 = vsub.f32 %v894, %v895
    %v897 = vand.u32 %v896, 4294901760
    %898 = vmatpush1.msra.mxu0 %v897
    %899 = vmatprep.subr.mxu0 0.0
    %v900 = vand.u32 %v585, 4294901760
    %v901 = vsub.f32 %v585, %v900
    %v902 = vand.u32 %v901, 4294901760
    %v903 = vsub.f32 %v901, %v902
    %v904 = vand.u32 %v903, 4294901760
    %905 = vmatpush1.msra.mxu0 %v904
    %906 = vmatprep.subr.mxu0 0.0
    %v907 = vand.u32 %v586, 4294901760
    %v908 = vsub.f32 %v586, %v907
    %v909 = vand.u32 %v908, 4294901760
    %v910 = vsub.f32 %v908, %v909
    %v911 = vand.u32 %v910, 4294901760
    %912 = vmatpush1.msra.mxu0 %v911
    %913 = vmatprep.subr.mxu0 0.0
    %v914 = vand.u32 %v587, 4294901760
    %v915 = vsub.f32 %v587, %v914
    %v916 = vand.u32 %v915, 4294901760
    %v917 = vsub.f32 %v915, %v916
    %v918 = vand.u32 %v917, 4294901760
    %919 = vmatpush1.msra.mxu0 %v918
    %920 = vmatprep.subr.mxu0 0.0
    %v921 = vand.u32 %v588, 4294901760
    %v922 = vsub.f32 %v588, %v921
    %v923 = vand.u32 %v922, 4294901760
    %v924 = vsub.f32 %v922, %v923
    %v925 = vand.u32 %v924, 4294901760
    %926 = vmatpush1.msra.mxu0 %v925
    %927 = vmatprep.subr.mxu0 0.0
    %928 = vmatpush1.msra.mxu0 0.0
    %929 = vmatprep.subr.mxu0 0.0
    %930 = vmatpush1.msra.mxu0 0.0
    %931 = vmatprep.subr.mxu0 0.0
    %932 = vmatpush1.msra.mxu0 0.0
    %933 = vmatprep.subr.mxu0 0.0
    %934 = vmatpush1.msra.mxu0 0.0
    %935 = vmatprep.subr.mxu0 0.0
    %936 = vmatpush1.msra.mxu0 0.0
    %937 = vmatprep.subr.mxu0 0.0
    %938 = vmatpush1.msra.mxu0 0.0
    %939 = vmatprep.subr.mxu0 0.0
    %940 = vmatpush1.msra.mxu0 0.0
    %941 = vmatprep.subr.mxu0 0.0
    %942 = vmatpush1.msra.mxu0 0.0
    %943 = vmatprep.subr.mxu0 0.0
    %944 = vmatpush1.msra.mxu0 0.0
    %945 = vmatprep.subr.mxu0 0.0
    %946 = vmatpush1.msra.mxu0 0.0
    %947 = vmatprep.subr.mxu0 0.0
    %948 = vmatpush1.msra.mxu0 0.0
    %949 = vmatprep.subr.mxu0 0.0
    %950 = vmatpush1.msra.mxu0 0.0
    %951 = vmatprep.subr.mxu0 0.0
    %952 = vmatpush1.msra.mxu0 0.0
    %953 = vmatprep.subr.mxu0 0.0
    %954 = vmatpush1.msra.mxu0 0.0
    %955 = vmatprep.subr.mxu0 0.0
    %956 = vmatpush1.msra.mxu0 0.0
    %957 = vmatprep.subr.mxu0 0.0
    %958 = vmatpush1.msra.mxu0 0.0
    %959 = vmatprep.subr.mxu0 0.0
    %960 = vmatpush1.msra.mxu0 0.0
    %961 = vmatprep.subr.mxu0 0.0
    %962 = vmatpush1.msra.mxu0 0.0
    %963 = vmatprep.subr.mxu0 0.0
    %964 = vmatpush1.msra.mxu0 0.0
    %965 = vmatprep.subr.mxu0 0.0
    %966 = vmatpush1.msra.mxu0 0.0
    %967 = vmatprep.subr.mxu0 0.0
    %968 = vmatpush1.msra.mxu0 0.0
    %969 = vmatprep.subr.mxu0 0.0
    %970 = vmatpush1.msra.mxu0 0.0
    %971 = vmatprep.subr.mxu0 0.0
    %972 = vmatpush1.msra.mxu0 0.0
    %973 = vmatprep.subr.mxu0 0.0
    %974 = vmatpush1.msra.mxu0 0.0
    %975 = vmatprep.mubr.f32.mxu0 0.0
    %v976 = vand.u32 %v591, 4294901760
    %977 = vmatmul.mubr.f32.gmra.mrb[0].mxu0 %v976
    %v978 = vpop.f32.mrb[0].mxu0
    %v979 = vadd.f32 %v718, %v978
    %v980 = vpop.f32.mrb[0].mxu0
    %981 = vmatprep.mubr.f32.mxu0 0.0
    %v982 = vand.u32 %v594, 4294901760
    %983 = vmatmul.mubr.f32.gmra.mrb[0].mxu0 %v982
    %v984 = vpop.f32.mrb[0].mxu0
    %v985 = vadd.f32 %v728, %v984
    %v986 = vpop.f32.mrb[0].mxu0
    %987 = vmatprep.mubr.f32.mxu0 0.0
    %v988 = vand.u32 %v597, 4294901760
    %989 = vmatmul.mubr.f32.gmra.mrb[0].mxu0 %v988
    %v990 = vpop.f32.mrb[0].mxu0
    %v991 = vadd.f32 %v738, %v990
    %v992 = vpop.f32.mrb[0].mxu0
    %993 = vmatprep.mubr.f32.mxu0 0.0
    %v994 = vand.u32 %v600, 4294901760
    %995 = vmatmul.mubr.f32.gmra.mrb[0].mxu0 %v994
    %v996 = vpop.f32.mrb[0].mxu0
    %v997 = vadd.f32 %v748, %v996
    %v998 = vpop.f32.mrb[0].mxu0
    %999 = vmatprep.mubr.f32.mxu0 0.0
    %v1000 = vand.u32 %v603, 4294901760
    %1001 = vmatmul.mubr.f32.gmra.mrb[0].mxu0 %v1000
    %v1002 = vpop.f32.mrb[0].mxu0
    %v1003 = vadd.f32 %v758, %v1002
    %v1004 = vpop.f32.mrb[0].mxu0
    %1005 = vmatprep.mubr.f32.mxu0 0.0
    %v1006 = vand.u32 %v606, 4294901760
    %1007 = vmatmul.mubr.f32.gmra.mrb[0].mxu0 %v1006
    %v1008 = vpop.f32.mrb[0].mxu0
    %v1009 = vadd.f32 %v768, %v1008
    %v1010 = vpop.f32.mrb[0].mxu0
    %1011 = vmatprep.mubr.f32.mxu0 0.0
    %v1012 = vand.u32 %v609, 4294901760
    %1013 = vmatmul.mubr.f32.gmra.mrb[0].mxu0 %v1012
    %v1014 = vpop.f32.mrb[0].mxu0
    %v1015 = vadd.f32 %v778, %v1014
    %v1016 = vpop.f32.mrb[0].mxu0
    %1017 = vmatprep.mubr.f32.mxu0 0.0
    %v1018 = vand.u32 %v612, 4294901760
    %1019 = vmatmul.mubr.f32.gmra.mrb[0].mxu0 %v1018
    %v1020 = vpop.f32.mrb[0].mxu0
    %v1021 = vadd.f32 %v788, %v1020
    %v1022 = vpop.f32.mrb[0].mxu0
    %1023 = vmatprep.mubr.f32.mxu0 0.0
    %v1024 = vand.u32 %v615, 4294901760
    %1025 = vmatmul.mubr.f32.gmra.mrb[0].mxu0 %v1024
    %v1026 = vpop.f32.mrb[0].mxu0
    %v1027 = vadd.f32 %v798, %v1026
    %v1028 = vpop.f32.mrb[0].mxu0
    %1029 = vmatprep.mubr.f32.mxu0 0.0
    %v1030 = vand.u32 %v618, 4294901760
    %1031 = vmatmul.mubr.f32.gmra.mrb[0].mxu0 %v1030
    %v1032 = vpop.f32.mrb[0].mxu0
    %v1033 = vadd.f32 %v808, %v1032
    %v1034 = vpop.f32.mrb[0].mxu0
    %1035 = vmatprep.mubr.f32.mxu0 0.0
    %v1036 = vand.u32 %v621, 4294901760
    %1037 = vmatmul.mubr.f32.gmra.mrb[0].mxu0 %v1036
    %v1038 = vpop.f32.mrb[0].mxu0
    %v1039 = vadd.f32 %v818, %v1038
    %v1040 = vpop.f32.mrb[0].mxu0
    %1041 = vmatprep.mubr.f32.mxu0 0.0
    %v1042 = vand.u32 %v624, 4294901760
    %1043 = vmatmul.mubr.f32.gmra.mrb[0].mxu0 %v1042
    %v1044 = vpop.f32.mrb[0].mxu0
    %v1045 = vadd.f32 %v828, %v1044
    %v1046 = vpop.f32.mrb[0].mxu0
    %1047 = vmatprep.mubr.f32.mxu0 0.0
    %v1048 = vand.u32 %v627, 4294901760
    %1049 = vmatmul.mubr.f32.gmra.mrb[0].mxu0 %v1048
    %v1050 = vpop.f32.mrb[0].mxu0
    %v1051 = vadd.f32 %v838, %v1050
    %v1052 = vpop.f32.mrb[0].mxu0
    %1053 = vmatprep.mubr.f32.mxu0 0.0
    %v1054 = vand.u32 %v630, 4294901760
    %1055 = vmatmul.mubr.f32.gmra.mrb[0].mxu0 %v1054
    %v1056 = vpop.f32.mrb[0].mxu0
    %v1057 = vadd.f32 %v848, %v1056
    %v1058 = vpop.f32.mrb[0].mxu0
    %1059 = vmatprep.mubr.f32.mxu0 0.0
    %v1060 = vand.u32 %v633, 4294901760
    %1061 = vmatmul.mubr.f32.gmra.mrb[0].mxu0 %v1060
    %v1062 = vpop.f32.mrb[0].mxu0
    %v1063 = vadd.f32 %v858, %v1062
    %v1064 = vpop.f32.mrb[0].mxu0
    %1065 = vmatprep.mubr.f32.mxu0 0.0
    %v1066 = vand.u32 %v636, 4294901760
    %1067 = vmatmul.mubr.f32.gmra.mrb[0].mxu0 %v1066
    %v1068 = vpop.f32.mrb[0].mxu0
    %v1069 = vadd.f32 %v868, %v1068
    %v1070 = vpop.f32.mrb[0].mxu0
    %1071 = vdwg.mxu0
    %1072 = vmatprep.subr.mxu0 0.0
    %v1073 = vand.u32 %v581, 4294901760
    %v1074 = vsub.f32 %v581, %v1073
    %1075 = vmatpush1.msra.mxu0 %v1074
    %1076 = vmatprep.subr.mxu0 0.0
    %v1077 = vand.u32 %v582, 4294901760
    %v1078 = vsub.f32 %v582, %v1077
    %1079 = vmatpush1.msra.mxu0 %v1078
    %1080 = vmatprep.subr.mxu0 0.0
    %v1081 = vand.u32 %v583, 4294901760
    %v1082 = vsub.f32 %v583, %v1081
    %1083 = vmatpush1.msra.mxu0 %v1082
    %1084 = vmatprep.subr.mxu0 0.0
    %v1085 = vand.u32 %v584, 4294901760
    %v1086 = vsub.f32 %v584, %v1085
    %1087 = vmatpush1.msra.mxu0 %v1086
    %1088 = vmatprep.subr.mxu0 0.0
    %v1089 = vand.u32 %v585, 4294901760
    %v1090 = vsub.f32 %v585, %v1089
    %1091 = vmatpush1.msra.mxu0 %v1090
    %1092 = vmatprep.subr.mxu0 0.0
    %v1093 = vand.u32 %v586, 4294901760
    %v1094 = vsub.f32 %v586, %v1093
    %1095 = vmatpush1.msra.mxu0 %v1094
    %1096 = vmatprep.subr.mxu0 0.0
    %v1097 = vand.u32 %v587, 4294901760
    %v1098 = vsub.f32 %v587, %v1097
    %1099 = vmatpush1.msra.mxu0 %v1098
    %1100 = vmatprep.subr.mxu0 0.0
    %v1101 = vand.u32 %v588, 4294901760
    %v1102 = vsub.f32 %v588, %v1101
    %1103 = vmatpush1.msra.mxu0 %v1102
    %1104 = vmatprep.subr.mxu0 0.0
    %1105 = vmatpush1.msra.mxu0 0.0
    %1106 = vmatprep.subr.mxu0 0.0
    %1107 = vmatpush1.msra.mxu0 0.0
    %1108 = vmatprep.subr.mxu0 0.0
    %1109 = vmatpush1.msra.mxu0 0.0
    %1110 = vmatprep.subr.mxu0 0.0
    %1111 = vmatpush1.msra.mxu0 0.0
    %1112 = vmatprep.subr.mxu0 0.0
    %1113 = vmatpush1.msra.mxu0 0.0
    %1114 = vmatprep.subr.mxu0 0.0
    %1115 = vmatpush1.msra.mxu0 0.0
    %1116 = vmatprep.subr.mxu0 0.0
    %1117 = vmatpush1.msra.mxu0 0.0
    %1118 = vmatprep.subr.mxu0 0.0
    %1119 = vmatpush1.msra.mxu0 0.0
    %1120 = vmatprep.subr.mxu0 0.0
    %1121 = vmatpush1.msra.mxu0 0.0
    %1122 = vmatprep.subr.mxu0 0.0
    %1123 = vmatpush1.msra.mxu0 0.0
    %1124 = vmatprep.subr.mxu0 0.0
    %1125 = vmatpush1.msra.mxu0 0.0
    %1126 = vmatprep.subr.mxu0 0.0
    %1127 = vmatpush1.msra.mxu0 0.0
    %1128 = vmatprep.subr.mxu0 0.0
    %1129 = vmatpush1.msra.mxu0 0.0
    %1130 = vmatprep.subr.mxu0 0.0
    %1131 = vmatpush1.msra.mxu0 0.0
    %1132 = vmatprep.subr.mxu0 0.0
    %1133 = vmatpush1.msra.mxu0 0.0
    %1134 = vmatprep.subr.mxu0 0.0
    %1135 = vmatpush1.msra.mxu0 0.0
    %1136 = vmatprep.subr.mxu0 0.0
    %1137 = vmatpush1.msra.mxu0 0.0
    %1138 = vmatprep.subr.mxu0 0.0
    %1139 = vmatpush1.msra.mxu0 0.0
    %1140 = vmatprep.subr.mxu0 0.0
    %1141 = vmatpush1.msra.mxu0 0.0
    %1142 = vmatprep.subr.mxu0 0.0
    %1143 = vmatpush1.msra.mxu0 0.0
    %1144 = vmatprep.subr.mxu0 0.0
    %1145 = vmatpush1.msra.mxu0 0.0
    %1146 = vmatprep.subr.mxu0 0.0
    %1147 = vmatpush1.msra.mxu0 0.0
    %1148 = vmatprep.subr.mxu0 0.0
    %1149 = vmatpush1.msra.mxu0 0.0
    %1150 = vmatprep.subr.mxu0 0.0
    %1151 = vmatpush1.msra.mxu0 0.0
    %1152 = vmatprep.mubr.f32.mxu0 0.0
    %v1153 = vand.u32 %v591, 4294901760
    %v1154 = vsub.f32 %v591, %v1153
    %1155 = vmatmul.mubr.f32.gmra.mrb[0].mxu0 %v1154
    %v1156 = vpop.f32.mrb[0].mxu0
    %v1157 = vadd.f32 %v979, %v1156
    %v1158 = vpop.f32.mrb[0].mxu0
    %1159 = vmatprep.mubr.f32.mxu0 0.0
    %v1160 = vand.u32 %v594, 4294901760
    %v1161 = vsub.f32 %v594, %v1160
    %1162 = vmatmul.mubr.f32.gmra.mrb[0].mxu0 %v1161
    %v1163 = vpop.f32.mrb[0].mxu0
    %v1164 = vadd.f32 %v985, %v1163
    %v1165 = vpop.f32.mrb[0].mxu0
    %1166 = vmatprep.mubr.f32.mxu0 0.0
    %v1167 = vand.u32 %v597, 4294901760
    %v1168 = vsub.f32 %v597, %v1167
    %1169 = vmatmul.mubr.f32.gmra.mrb[0].mxu0 %v1168
    %v1170 = vpop.f32.mrb[0].mxu0
    %v1171 = vadd.f32 %v991, %v1170
    %v1172 = vpop.f32.mrb[0].mxu0
    %1173 = vmatprep.mubr.f32.mxu0 0.0
    %v1174 = vand.u32 %v600, 4294901760
    %v1175 = vsub.f32 %v600, %v1174
    %1176 = vmatmul.mubr.f32.gmra.mrb[0].mxu0 %v1175
    %v1177 = vpop.f32.mrb[0].mxu0
    %v1178 = vadd.f32 %v997, %v1177
    %v1179 = vpop.f32.mrb[0].mxu0
    %1180 = vmatprep.mubr.f32.mxu0 0.0
    %v1181 = vand.u32 %v603, 4294901760
    %v1182 = vsub.f32 %v603, %v1181
    %1183 = vmatmul.mubr.f32.gmra.mrb[0].mxu0 %v1182
    %v1184 = vpop.f32.mrb[0].mxu0
    %v1185 = vadd.f32 %v1003, %v1184
    %v1186 = vpop.f32.mrb[0].mxu0
    %1187 = vmatprep.mubr.f32.mxu0 0.0
    %v1188 = vand.u32 %v606, 4294901760
    %v1189 = vsub.f32 %v606, %v1188
    %1190 = vmatmul.mubr.f32.gmra.mrb[0].mxu0 %v1189
    %v1191 = vpop.f32.mrb[0].mxu0
    %v1192 = vadd.f32 %v1009, %v1191
    %v1193 = vpop.f32.mrb[0].mxu0
    %1194 = vmatprep.mubr.f32.mxu0 0.0
    %v1195 = vand.u32 %v609, 4294901760
    %v1196 = vsub.f32 %v609, %v1195
    %1197 = vmatmul.mubr.f32.gmra.mrb[0].mxu0 %v1196
    %v1198 = vpop.f32.mrb[0].mxu0
    %v1199 = vadd.f32 %v1015, %v1198
    %v1200 = vpop.f32.mrb[0].mxu0
    %1201 = vmatprep.mubr.f32.mxu0 0.0
    %v1202 = vand.u32 %v612, 4294901760
    %v1203 = vsub.f32 %v612, %v1202
    %1204 = vmatmul.mubr.f32.gmra.mrb[0].mxu0 %v1203
    %v1205 = vpop.f32.mrb[0].mxu0
    %v1206 = vadd.f32 %v1021, %v1205
    %v1207 = vpop.f32.mrb[0].mxu0
    %1208 = vmatprep.mubr.f32.mxu0 0.0
    %v1209 = vand.u32 %v615, 4294901760
    %v1210 = vsub.f32 %v615, %v1209
    %1211 = vmatmul.mubr.f32.gmra.mrb[0].mxu0 %v1210
    %v1212 = vpop.f32.mrb[0].mxu0
    %v1213 = vadd.f32 %v1027, %v1212
    %v1214 = vpop.f32.mrb[0].mxu0
    %1215 = vmatprep.mubr.f32.mxu0 0.0
    %v1216 = vand.u32 %v618, 4294901760
    %v1217 = vsub.f32 %v618, %v1216
    %1218 = vmatmul.mubr.f32.gmra.mrb[0].mxu0 %v1217
    %v1219 = vpop.f32.mrb[0].mxu0
    %v1220 = vadd.f32 %v1033, %v1219
    %v1221 = vpop.f32.mrb[0].mxu0
    %1222 = vmatprep.mubr.f32.mxu0 0.0
    %v1223 = vand.u32 %v621, 4294901760
    %v1224 = vsub.f32 %v621, %v1223
    %1225 = vmatmul.mubr.f32.gmra.mrb[0].mxu0 %v1224
    %v1226 = vpop.f32.mrb[0].mxu0
    %v1227 = vadd.f32 %v1039, %v1226
    %v1228 = vpop.f32.mrb[0].mxu0
    %1229 = vmatprep.mubr.f32.mxu0 0.0
    %v1230 = vand.u32 %v624, 4294901760
    %v1231 = vsub.f32 %v624, %v1230
    %1232 = vmatmul.mubr.f32.gmra.mrb[0].mxu0 %v1231
    %v1233 = vpop.f32.mrb[0].mxu0
    %v1234 = vadd.f32 %v1045, %v1233
    %v1235 = vpop.f32.mrb[0].mxu0
    %1236 = vmatprep.mubr.f32.mxu0 0.0
    %v1237 = vand.u32 %v627, 4294901760
    %v1238 = vsub.f32 %v627, %v1237
    %1239 = vmatmul.mubr.f32.gmra.mrb[0].mxu0 %v1238
    %v1240 = vpop.f32.mrb[0].mxu0
    %v1241 = vadd.f32 %v1051, %v1240
    %v1242 = vpop.f32.mrb[0].mxu0
    %1243 = vmatprep.mubr.f32.mxu0 0.0
    %v1244 = vand.u32 %v630, 4294901760
    %v1245 = vsub.f32 %v630, %v1244
    %1246 = vmatmul.mubr.f32.gmra.mrb[0].mxu0 %v1245
    %v1247 = vpop.f32.mrb[0].mxu0
    %v1248 = vadd.f32 %v1057, %v1247
    %v1249 = vpop.f32.mrb[0].mxu0
    %1250 = vmatprep.mubr.f32.mxu0 0.0
    %v1251 = vand.u32 %v633, 4294901760
    %v1252 = vsub.f32 %v633, %v1251
    %1253 = vmatmul.mubr.f32.gmra.mrb[0].mxu0 %v1252
    %v1254 = vpop.f32.mrb[0].mxu0
    %v1255 = vadd.f32 %v1063, %v1254
    %v1256 = vpop.f32.mrb[0].mxu0
    %1257 = vmatprep.mubr.f32.mxu0 0.0
    %v1258 = vand.u32 %v636, 4294901760
    %v1259 = vsub.f32 %v636, %v1258
    %1260 = vmatmul.mubr.f32.gmra.mrb[0].mxu0 %v1259
    %v1261 = vpop.f32.mrb[0].mxu0
    %v1262 = vadd.f32 %v1069, %v1261
    %v1263 = vpop.f32.mrb[0].mxu0
    %1264 = vdwg.mxu0
    %1265 = vmatprep.subr.mxu0 0.0
    %v1266 = vand.u32 %v581, 4294901760
    %1267 = vmatpush1.msra.mxu0 %v1266
    %1268 = vmatprep.subr.mxu0 0.0
    %v1269 = vand.u32 %v582, 4294901760
    %1270 = vmatpush1.msra.mxu0 %v1269
    %1271 = vmatprep.subr.mxu0 0.0
    %v1272 = vand.u32 %v583, 4294901760
    %1273 = vmatpush1.msra.mxu0 %v1272
    %1274 = vmatprep.subr.mxu0 0.0
    %v1275 = vand.u32 %v584, 4294901760
    %1276 = vmatpush1.msra.mxu0 %v1275
    %1277 = vmatprep.subr.mxu0 0.0
    %v1278 = vand.u32 %v585, 4294901760
    %1279 = vmatpush1.msra.mxu0 %v1278
    %1280 = vmatprep.subr.mxu0 0.0
    %v1281 = vand.u32 %v586, 4294901760
    %1282 = vmatpush1.msra.mxu0 %v1281
    %1283 = vmatprep.subr.mxu0 0.0
    %v1284 = vand.u32 %v587, 4294901760
    %1285 = vmatpush1.msra.mxu0 %v1284
    %1286 = vmatprep.subr.mxu0 0.0
    %v1287 = vand.u32 %v588, 4294901760
    %1288 = vmatpush1.msra.mxu0 %v1287
    %1289 = vmatprep.subr.mxu0 0.0
    %1290 = vmatpush1.msra.mxu0 0.0
    %1291 = vmatprep.subr.mxu0 0.0
    %1292 = vmatpush1.msra.mxu0 0.0
    %1293 = vmatprep.subr.mxu0 0.0
    %1294 = vmatpush1.msra.mxu0 0.0
    %1295 = vmatprep.subr.mxu0 0.0
    %1296 = vmatpush1.msra.mxu0 0.0
    %1297 = vmatprep.subr.mxu0 0.0
    %1298 = vmatpush1.msra.mxu0 0.0
    %1299 = vmatprep.subr.mxu0 0.0
    %1300 = vmatpush1.msra.mxu0 0.0
    %1301 = vmatprep.subr.mxu0 0.0
    %1302 = vmatpush1.msra.mxu0 0.0
    %1303 = vmatprep.subr.mxu0 0.0
    %1304 = vmatpush1.msra.mxu0 0.0
    %1305 = vmatprep.subr.mxu0 0.0
    %1306 = vmatpush1.msra.mxu0 0.0
    %1307 = vmatprep.subr.mxu0 0.0
    %1308 = vmatpush1.msra.mxu0 0.0
    %1309 = vmatprep.subr.mxu0 0.0
    %1310 = vmatpush1.msra.mxu0 0.0
    %1311 = vmatprep.subr.mxu0 0.0
    %1312 = vmatpush1.msra.mxu0 0.0
    %1313 = vmatprep.subr.mxu0 0.0
    %1314 = vmatpush1.msra.mxu0 0.0
    %1315 = vmatprep.subr.mxu0 0.0
    %1316 = vmatpush1.msra.mxu0 0.0
    %1317 = vmatprep.subr.mxu0 0.0
    %1318 = vmatpush1.msra.mxu0 0.0
    %1319 = vmatprep.subr.mxu0 0.0
    %1320 = vmatpush1.msra.mxu0 0.0
    %1321 = vmatprep.subr.mxu0 0.0
    %1322 = vmatpush1.msra.mxu0 0.0
    %1323 = vmatprep.subr.mxu0 0.0
    %1324 = vmatpush1.msra.mxu0 0.0
    %1325 = vmatprep.subr.mxu0 0.0
    %1326 = vmatpush1.msra.mxu0 0.0
    %1327 = vmatprep.subr.mxu0 0.0
    %1328 = vmatpush1.msra.mxu0 0.0
    %1329 = vmatprep.subr.mxu0 0.0
    %1330 = vmatpush1.msra.mxu0 0.0
    %1331 = vmatprep.subr.mxu0 0.0
    %1332 = vmatpush1.msra.mxu0 0.0
    %1333 = vmatprep.subr.mxu0 0.0
    %1334 = vmatpush1.msra.mxu0 0.0
    %1335 = vmatprep.subr.mxu0 0.0
    %1336 = vmatpush1.msra.mxu0 0.0
    %1337 = vmatprep.mubr.f32.mxu0 0.0
    %v1338 = vand.u32 %v591, 4294901760
    %v1339 = vsub.f32 %v591, %v1338
    %v1340 = vand.u32 %v1339, 4294901760
    %1341 = vmatmul.mubr.f32.gmra.mrb[0].mxu0 %v1340
    %v1342 = vpop.f32.mrb[0].mxu0
    %v1343 = vadd.f32 %v1157, %v1342
    %v1344 = vpop.f32.mrb[0].mxu0
    %1345 = vmatprep.mubr.f32.mxu0 0.0
    %v1346 = vand.u32 %v594, 4294901760
    %v1347 = vsub.f32 %v594, %v1346
    %v1348 = vand.u32 %v1347, 4294901760
    %1349 = vmatmul.mubr.f32.gmra.mrb[0].mxu0 %v1348
    %v1350 = vpop.f32.mrb[0].mxu0
    %v1351 = vadd.f32 %v1164, %v1350
    %v1352 = vpop.f32.mrb[0].mxu0
    %1353 = vmatprep.mubr.f32.mxu0 0.0
    %v1354 = vand.u32 %v597, 4294901760
    %v1355 = vsub.f32 %v597, %v1354
    %v1356 = vand.u32 %v1355, 4294901760
    %1357 = vmatmul.mubr.f32.gmra.mrb[0].mxu0 %v1356
    %v1358 = vpop.f32.mrb[0].mxu0
    %v1359 = vadd.f32 %v1171, %v1358
    %v1360 = vpop.f32.mrb[0].mxu0
    %1361 = vmatprep.mubr.f32.mxu0 0.0
    %v1362 = vand.u32 %v600, 4294901760
    %v1363 = vsub.f32 %v600, %v1362
    %v1364 = vand.u32 %v1363, 4294901760
    %1365 = vmatmul.mubr.f32.gmra.mrb[0].mxu0 %v1364
    %v1366 = vpop.f32.mrb[0].mxu0
    %v1367 = vadd.f32 %v1178, %v1366
    %v1368 = vpop.f32.mrb[0].mxu0
    %1369 = vmatprep.mubr.f32.mxu0 0.0
    %v1370 = vand.u32 %v603, 4294901760
    %v1371 = vsub.f32 %v603, %v1370
    %v1372 = vand.u32 %v1371, 4294901760
    %1373 = vmatmul.mubr.f32.gmra.mrb[0].mxu0 %v1372
    %v1374 = vpop.f32.mrb[0].mxu0
    %v1375 = vadd.f32 %v1185, %v1374
    %v1376 = vpop.f32.mrb[0].mxu0
    %1377 = vmatprep.mubr.f32.mxu0 0.0
    %v1378 = vand.u32 %v606, 4294901760
    %v1379 = vsub.f32 %v606, %v1378
    %v1380 = vand.u32 %v1379, 4294901760
    %1381 = vmatmul.mubr.f32.gmra.mrb[0].mxu0 %v1380
    %v1382 = vpop.f32.mrb[0].mxu0
    %v1383 = vadd.f32 %v1192, %v1382
    %v1384 = vpop.f32.mrb[0].mxu0
    %1385 = vmatprep.mubr.f32.mxu0 0.0
    %v1386 = vand.u32 %v609, 4294901760
    %v1387 = vsub.f32 %v609, %v1386
    %v1388 = vand.u32 %v1387, 4294901760
    %1389 = vmatmul.mubr.f32.gmra.mrb[0].mxu0 %v1388
    %v1390 = vpop.f32.mrb[0].mxu0
    %v1391 = vadd.f32 %v1199, %v1390
    %v1392 = vpop.f32.mrb[0].mxu0
    %1393 = vmatprep.mubr.f32.mxu0 0.0
    %v1394 = vand.u32 %v612, 4294901760
    %v1395 = vsub.f32 %v612, %v1394
    %v1396 = vand.u32 %v1395, 4294901760
    %1397 = vmatmul.mubr.f32.gmra.mrb[0].mxu0 %v1396
    %v1398 = vpop.f32.mrb[0].mxu0
    %v1399 = vadd.f32 %v1206, %v1398
    %v1400 = vpop.f32.mrb[0].mxu0
    %1401 = vmatprep.mubr.f32.mxu0 0.0
    %v1402 = vand.u32 %v615, 4294901760
    %v1403 = vsub.f32 %v615, %v1402
    %v1404 = vand.u32 %v1403, 4294901760
    %1405 = vmatmul.mubr.f32.gmra.mrb[0].mxu0 %v1404
    %v1406 = vpop.f32.mrb[0].mxu0
    %v1407 = vadd.f32 %v1213, %v1406
    %v1408 = vpop.f32.mrb[0].mxu0
    %1409 = vmatprep.mubr.f32.mxu0 0.0
    %v1410 = vand.u32 %v618, 4294901760
    %v1411 = vsub.f32 %v618, %v1410
    %v1412 = vand.u32 %v1411, 4294901760
    %1413 = vmatmul.mubr.f32.gmra.mrb[0].mxu0 %v1412
    %v1414 = vpop.f32.mrb[0].mxu0
    %v1415 = vadd.f32 %v1220, %v1414
    %v1416 = vpop.f32.mrb[0].mxu0
    %1417 = vmatprep.mubr.f32.mxu0 0.0
    %v1418 = vand.u32 %v621, 4294901760
    %v1419 = vsub.f32 %v621, %v1418
    %v1420 = vand.u32 %v1419, 4294901760
    %1421 = vmatmul.mubr.f32.gmra.mrb[0].mxu0 %v1420
    %v1422 = vpop.f32.mrb[0].mxu0
    %v1423 = vadd.f32 %v1227, %v1422
    %v1424 = vpop.f32.mrb[0].mxu0
    %1425 = vmatprep.mubr.f32.mxu0 0.0
    %v1426 = vand.u32 %v624, 4294901760
    %v1427 = vsub.f32 %v624, %v1426
    %v1428 = vand.u32 %v1427, 4294901760
    %1429 = vmatmul.mubr.f32.gmra.mrb[0].mxu0 %v1428
    %v1430 = vpop.f32.mrb[0].mxu0
    %v1431 = vadd.f32 %v1234, %v1430
    %v1432 = vpop.f32.mrb[0].mxu0
    %1433 = vmatprep.mubr.f32.mxu0 0.0
    %v1434 = vand.u32 %v627, 4294901760
    %v1435 = vsub.f32 %v627, %v1434
    %v1436 = vand.u32 %v1435, 4294901760
    %1437 = vmatmul.mubr.f32.gmra.mrb[0].mxu0 %v1436
    %v1438 = vpop.f32.mrb[0].mxu0
    %v1439 = vadd.f32 %v1241, %v1438
    %v1440 = vpop.f32.mrb[0].mxu0
    %1441 = vmatprep.mubr.f32.mxu0 0.0
    %v1442 = vand.u32 %v630, 4294901760
    %v1443 = vsub.f32 %v630, %v1442
    %v1444 = vand.u32 %v1443, 4294901760
    %1445 = vmatmul.mubr.f32.gmra.mrb[0].mxu0 %v1444
    %v1446 = vpop.f32.mrb[0].mxu0
    %v1447 = vadd.f32 %v1248, %v1446
    %v1448 = vpop.f32.mrb[0].mxu0
    %1449 = vmatprep.mubr.f32.mxu0 0.0
    %v1450 = vand.u32 %v633, 4294901760
    %v1451 = vsub.f32 %v633, %v1450
    %v1452 = vand.u32 %v1451, 4294901760
    %1453 = vmatmul.mubr.f32.gmra.mrb[0].mxu0 %v1452
    %v1454 = vpop.f32.mrb[0].mxu0
    %v1455 = vadd.f32 %v1255, %v1454
    %v1456 = vpop.f32.mrb[0].mxu0
    %1457 = vmatprep.mubr.f32.mxu0 0.0
    %v1458 = vand.u32 %v636, 4294901760
    %v1459 = vsub.f32 %v636, %v1458
    %v1460 = vand.u32 %v1459, 4294901760
    %1461 = vmatmul.mubr.f32.gmra.mrb[0].mxu0 %v1460
    %v1462 = vpop.f32.mrb[0].mxu0
    %v1463 = vadd.f32 %v1262, %v1462
    %v1464 = vpop.f32.mrb[0].mxu0
    %1465 = vdwg.mxu0
    %1466 = vmatprep.subr.mxu0 0.0
    %v1467 = vand.u32 %v581, 4294901760
    %v1468 = vsub.f32 %v581, %v1467
    %v1469 = vand.u32 %v1468, 4294901760
    %1470 = vmatpush1.msra.mxu0 %v1469
    %1471 = vmatprep.subr.mxu0 0.0
    %v1472 = vand.u32 %v582, 4294901760
    %v1473 = vsub.f32 %v582, %v1472
    %v1474 = vand.u32 %v1473, 4294901760
    %1475 = vmatpush1.msra.mxu0 %v1474
    %1476 = vmatprep.subr.mxu0 0.0
    %v1477 = vand.u32 %v583, 4294901760
    %v1478 = vsub.f32 %v583, %v1477
    %v1479 = vand.u32 %v1478, 4294901760
    %1480 = vmatpush1.msra.mxu0 %v1479
    %1481 = vmatprep.subr.mxu0 0.0
    %v1482 = vand.u32 %v584, 4294901760
    %v1483 = vsub.f32 %v584, %v1482
    %v1484 = vand.u32 %v1483, 4294901760
    %1485 = vmatpush1.msra.mxu0 %v1484
    %1486 = vmatprep.subr.mxu0 0.0
    %v1487 = vand.u32 %v585, 4294901760
    %v1488 = vsub.f32 %v585, %v1487
    %v1489 = vand.u32 %v1488, 4294901760
    %1490 = vmatpush1.msra.mxu0 %v1489
    %1491 = vmatprep.subr.mxu0 0.0
    %v1492 = vand.u32 %v586, 4294901760
    %v1493 = vsub.f32 %v586, %v1492
    %v1494 = vand.u32 %v1493, 4294901760
    %1495 = vmatpush1.msra.mxu0 %v1494
    %1496 = vmatprep.subr.mxu0 0.0
    %v1497 = vand.u32 %v587, 4294901760
    %v1498 = vsub.f32 %v587, %v1497
    %v1499 = vand.u32 %v1498, 4294901760
    %1500 = vmatpush1.msra.mxu0 %v1499
    %1501 = vmatprep.subr.mxu0 0.0
    %v1502 = vand.u32 %v588, 4294901760
    %v1503 = vsub.f32 %v588, %v1502
    %v1504 = vand.u32 %v1503, 4294901760
    %1505 = vmatpush1.msra.mxu0 %v1504
    %1506 = vmatprep.subr.mxu0 0.0
    %1507 = vmatpush1.msra.mxu0 0.0
    %1508 = vmatprep.subr.mxu0 0.0
    %1509 = vmatpush1.msra.mxu0 0.0
    %1510 = vmatprep.subr.mxu0 0.0
    %1511 = vmatpush1.msra.mxu0 0.0
    %1512 = vmatprep.subr.mxu0 0.0
    %1513 = vmatpush1.msra.mxu0 0.0
    %1514 = vmatprep.subr.mxu0 0.0
    %1515 = vmatpush1.msra.mxu0 0.0
    %1516 = vmatprep.subr.mxu0 0.0
    %1517 = vmatpush1.msra.mxu0 0.0
    %1518 = vmatprep.subr.mxu0 0.0
    %1519 = vmatpush1.msra.mxu0 0.0
    %1520 = vmatprep.subr.mxu0 0.0
    %1521 = vmatpush1.msra.mxu0 0.0
    %1522 = vmatprep.subr.mxu0 0.0
    %1523 = vmatpush1.msra.mxu0 0.0
    %1524 = vmatprep.subr.mxu0 0.0
    %1525 = vmatpush1.msra.mxu0 0.0
    %1526 = vmatprep.subr.mxu0 0.0
    %1527 = vmatpush1.msra.mxu0 0.0
    %1528 = vmatprep.subr.mxu0 0.0
    %1529 = vmatpush1.msra.mxu0 0.0
    %1530 = vmatprep.subr.mxu0 0.0
    %1531 = vmatpush1.msra.mxu0 0.0
    %1532 = vmatprep.subr.mxu0 0.0
    %1533 = vmatpush1.msra.mxu0 0.0
    %1534 = vmatprep.subr.mxu0 0.0
    %1535 = vmatpush1.msra.mxu0 0.0
    %1536 = vmatprep.subr.mxu0 0.0
    %1537 = vmatpush1.msra.mxu0 0.0
    %1538 = vmatprep.subr.mxu0 0.0
    %1539 = vmatpush1.msra.mxu0 0.0
    %1540 = vmatprep.subr.mxu0 0.0
    %1541 = vmatpush1.msra.mxu0 0.0
    %1542 = vmatprep.subr.mxu0 0.0
    %1543 = vmatpush1.msra.mxu0 0.0
    %1544 = vmatprep.subr.mxu0 0.0
    %1545 = vmatpush1.msra.mxu0 0.0
    %1546 = vmatprep.subr.mxu0 0.0
    %1547 = vmatpush1.msra.mxu0 0.0
    %1548 = vmatprep.subr.mxu0 0.0
    %1549 = vmatpush1.msra.mxu0 0.0
    %1550 = vmatprep.subr.mxu0 0.0
    %1551 = vmatpush1.msra.mxu0 0.0
    %1552 = vmatprep.subr.mxu0 0.0
    %1553 = vmatpush1.msra.mxu0 0.0
    %1554 = vmatprep.mubr.f32.mxu0 0.0
    %v1555 = vand.u32 %v591, 4294901760
    %1556 = vmatmul.mubr.f32.gmra.mrb[0].mxu0 %v1555
    %v1557 = vpop.f32.mrb[0].mxu0
    %v1558 = vadd.f32 %v1343, %v1557
    %v1559 = vpop.f32.mrb[0].mxu0
    %1560 = vmatprep.mubr.f32.mxu0 0.0
    %v1561 = vand.u32 %v594, 4294901760
    %1562 = vmatmul.mubr.f32.gmra.mrb[0].mxu0 %v1561
    %v1563 = vpop.f32.mrb[0].mxu0
    %v1564 = vadd.f32 %v1351, %v1563
    %v1565 = vpop.f32.mrb[0].mxu0
    %1566 = vmatprep.mubr.f32.mxu0 0.0
    %v1567 = vand.u32 %v597, 4294901760
    %1568 = vmatmul.mubr.f32.gmra.mrb[0].mxu0 %v1567
    %v1569 = vpop.f32.mrb[0].mxu0
    %v1570 = vadd.f32 %v1359, %v1569
    %v1571 = vpop.f32.mrb[0].mxu0
    %1572 = vmatprep.mubr.f32.mxu0 0.0
    %v1573 = vand.u32 %v600, 4294901760
    %1574 = vmatmul.mubr.f32.gmra.mrb[0].mxu0 %v1573
    %v1575 = vpop.f32.mrb[0].mxu0
    %v1576 = vadd.f32 %v1367, %v1575
    %v1577 = vpop.f32.mrb[0].mxu0
    %1578 = vmatprep.mubr.f32.mxu0 0.0
    %v1579 = vand.u32 %v603, 4294901760
    %1580 = vmatmul.mubr.f32.gmra.mrb[0].mxu0 %v1579
    %v1581 = vpop.f32.mrb[0].mxu0
    %v1582 = vadd.f32 %v1375, %v1581
    %v1583 = vpop.f32.mrb[0].mxu0
    %1584 = vmatprep.mubr.f32.mxu0 0.0
    %v1585 = vand.u32 %v606, 4294901760
    %1586 = vmatmul.mubr.f32.gmra.mrb[0].mxu0 %v1585
    %v1587 = vpop.f32.mrb[0].mxu0
    %v1588 = vadd.f32 %v1383, %v1587
    %v1589 = vpop.f32.mrb[0].mxu0
    %1590 = vmatprep.mubr.f32.mxu0 0.0
    %v1591 = vand.u32 %v609, 4294901760
    %1592 = vmatmul.mubr.f32.gmra.mrb[0].mxu0 %v1591
    %v1593 = vpop.f32.mrb[0].mxu0
    %v1594 = vadd.f32 %v1391, %v1593
    %v1595 = vpop.f32.mrb[0].mxu0
    %1596 = vmatprep.mubr.f32.mxu0 0.0
    %v1597 = vand.u32 %v612, 4294901760
    %1598 = vmatmul.mubr.f32.gmra.mrb[0].mxu0 %v1597
    %v1599 = vpop.f32.mrb[0].mxu0
    %v1600 = vadd.f32 %v1399, %v1599
    %v1601 = vpop.f32.mrb[0].mxu0
    %1602 = vmatprep.mubr.f32.mxu0 0.0
    %v1603 = vand.u32 %v615, 4294901760
    %1604 = vmatmul.mubr.f32.gmra.mrb[0].mxu0 %v1603
    %v1605 = vpop.f32.mrb[0].mxu0
    %v1606 = vadd.f32 %v1407, %v1605
    %v1607 = vpop.f32.mrb[0].mxu0
    %1608 = vmatprep.mubr.f32.mxu0 0.0
    %v1609 = vand.u32 %v618, 4294901760
    %1610 = vmatmul.mubr.f32.gmra.mrb[0].mxu0 %v1609
    %v1611 = vpop.f32.mrb[0].mxu0
    %v1612 = vadd.f32 %v1415, %v1611
    %v1613 = vpop.f32.mrb[0].mxu0
    %1614 = vmatprep.mubr.f32.mxu0 0.0
    %v1615 = vand.u32 %v621, 4294901760
    %1616 = vmatmul.mubr.f32.gmra.mrb[0].mxu0 %v1615
    %v1617 = vpop.f32.mrb[0].mxu0
    %v1618 = vadd.f32 %v1423, %v1617
    %v1619 = vpop.f32.mrb[0].mxu0
    %1620 = vmatprep.mubr.f32.mxu0 0.0
    %v1621 = vand.u32 %v624, 4294901760
    %1622 = vmatmul.mubr.f32.gmra.mrb[0].mxu0 %v1621
    %v1623 = vpop.f32.mrb[0].mxu0
    %v1624 = vadd.f32 %v1431, %v1623
    %v1625 = vpop.f32.mrb[0].mxu0
    %1626 = vmatprep.mubr.f32.mxu0 0.0
    %v1627 = vand.u32 %v627, 4294901760
    %1628 = vmatmul.mubr.f32.gmra.mrb[0].mxu0 %v1627
    %v1629 = vpop.f32.mrb[0].mxu0
    %v1630 = vadd.f32 %v1439, %v1629
    %v1631 = vpop.f32.mrb[0].mxu0
    %1632 = vmatprep.mubr.f32.mxu0 0.0
    %v1633 = vand.u32 %v630, 4294901760
    %1634 = vmatmul.mubr.f32.gmra.mrb[0].mxu0 %v1633
    %v1635 = vpop.f32.mrb[0].mxu0
    %v1636 = vadd.f32 %v1447, %v1635
    %v1637 = vpop.f32.mrb[0].mxu0
    %1638 = vmatprep.mubr.f32.mxu0 0.0
    %v1639 = vand.u32 %v633, 4294901760
    %1640 = vmatmul.mubr.f32.gmra.mrb[0].mxu0 %v1639
    %v1641 = vpop.f32.mrb[0].mxu0
    %v1642 = vadd.f32 %v1455, %v1641
    %v1643 = vpop.f32.mrb[0].mxu0
    %1644 = vmatprep.mubr.f32.mxu0 0.0
    %v1645 = vand.u32 %v636, 4294901760
    %1646 = vmatmul.mubr.f32.gmra.mrb[0].mxu0 %v1645
    %v1647 = vpop.f32.mrb[0].mxu0
    %v1648 = vadd.f32 %v1463, %v1647
    %v1649 = vpop.f32.mrb[0].mxu0
    %1650 = vdwg.mxu0
    %1651 = vmatprep.subr.mxu0 0.0
    %v1652 = vand.u32 %v581, 4294901760
    %1653 = vmatpush1.msra.mxu0 %v1652
    %1654 = vmatprep.subr.mxu0 0.0
    %v1655 = vand.u32 %v582, 4294901760
    %1656 = vmatpush1.msra.mxu0 %v1655
    %1657 = vmatprep.subr.mxu0 0.0
    %v1658 = vand.u32 %v583, 4294901760
    %1659 = vmatpush1.msra.mxu0 %v1658
    %1660 = vmatprep.subr.mxu0 0.0
    %v1661 = vand.u32 %v584, 4294901760
    %1662 = vmatpush1.msra.mxu0 %v1661
    %1663 = vmatprep.subr.mxu0 0.0
    %v1664 = vand.u32 %v585, 4294901760
    %1665 = vmatpush1.msra.mxu0 %v1664
    %1666 = vmatprep.subr.mxu0 0.0
    %v1667 = vand.u32 %v586, 4294901760
    %1668 = vmatpush1.msra.mxu0 %v1667
    %1669 = vmatprep.subr.mxu0 0.0
    %v1670 = vand.u32 %v587, 4294901760
    %1671 = vmatpush1.msra.mxu0 %v1670
    %1672 = vmatprep.subr.mxu0 0.0
    %v1673 = vand.u32 %v588, 4294901760
    %1674 = vmatpush1.msra.mxu0 %v1673
    %1675 = vmatprep.subr.mxu0 0.0
    %1676 = vmatpush1.msra.mxu0 0.0
    %1677 = vmatprep.subr.mxu0 0.0
    %1678 = vmatpush1.msra.mxu0 0.0
    %1679 = vmatprep.subr.mxu0 0.0
    %1680 = vmatpush1.msra.mxu0 0.0
    %1681 = vmatprep.subr.mxu0 0.0
    %1682 = vmatpush1.msra.mxu0 0.0
    %1683 = vmatprep.subr.mxu0 0.0
    %1684 = vmatpush1.msra.mxu0 0.0
    %1685 = vmatprep.subr.mxu0 0.0
    %1686 = vmatpush1.msra.mxu0 0.0
    %1687 = vmatprep.subr.mxu0 0.0
    %1688 = vmatpush1.msra.mxu0 0.0
    %1689 = vmatprep.subr.mxu0 0.0
    %1690 = vmatpush1.msra.mxu0 0.0
    %1691 = vmatprep.subr.mxu0 0.0
    %1692 = vmatpush1.msra.mxu0 0.0
    %1693 = vmatprep.subr.mxu0 0.0
    %1694 = vmatpush1.msra.mxu0 0.0
    %1695 = vmatprep.subr.mxu0 0.0
    %1696 = vmatpush1.msra.mxu0 0.0
    %1697 = vmatprep.subr.mxu0 0.0
    %1698 = vmatpush1.msra.mxu0 0.0
    %1699 = vmatprep.subr.mxu0 0.0
    %1700 = vmatpush1.msra.mxu0 0.0
    %1701 = vmatprep.subr.mxu0 0.0
    %1702 = vmatpush1.msra.mxu0 0.0
    %1703 = vmatprep.subr.mxu0 0.0
    %1704 = vmatpush1.msra.mxu0 0.0
    %1705 = vmatprep.subr.mxu0 0.0
    %1706 = vmatpush1.msra.mxu0 0.0
    %1707 = vmatprep.subr.mxu0 0.0
    %1708 = vmatpush1.msra.mxu0 0.0
    %1709 = vmatprep.subr.mxu0 0.0
    %1710 = vmatpush1.msra.mxu0 0.0
    %1711 = vmatprep.subr.mxu0 0.0
    %1712 = vmatpush1.msra.mxu0 0.0
    %1713 = vmatprep.subr.mxu0 0.0
    %1714 = vmatpush1.msra.mxu0 0.0
    %1715 = vmatprep.subr.mxu0 0.0
    %1716 = vmatpush1.msra.mxu0 0.0
    %1717 = vmatprep.subr.mxu0 0.0
    %1718 = vmatpush1.msra.mxu0 0.0
    %1719 = vmatprep.subr.mxu0 0.0
    %1720 = vmatpush1.msra.mxu0 0.0
    %1721 = vmatprep.subr.mxu0 0.0
    %1722 = vmatpush1.msra.mxu0 0.0
    %1723 = vmatprep.mubr.f32.mxu0 0.0
    %v1724 = vand.u32 %v591, 4294901760
    %1725 = vmatmul.mubr.f32.gmra.mrb[0].mxu0 %v1724
    %v1726 = vpop.f32.mrb[0].mxu0
    %v1727 = vadd.f32 %v1558, %v1726
    %v1728 = vpop.f32.mrb[0].mxu0
    %1729 = vmatprep.mubr.f32.mxu0 0.0
    %v1730 = vand.u32 %v594, 4294901760
    %1731 = vmatmul.mubr.f32.gmra.mrb[0].mxu0 %v1730
    %v1732 = vpop.f32.mrb[0].mxu0
    %v1733 = vadd.f32 %v1564, %v1732
    %v1734 = vpop.f32.mrb[0].mxu0
    %1735 = vmatprep.mubr.f32.mxu0 0.0
    %v1736 = vand.u32 %v597, 4294901760
    %1737 = vmatmul.mubr.f32.gmra.mrb[0].mxu0 %v1736
    %v1738 = vpop.f32.mrb[0].mxu0
    %v1739 = vadd.f32 %v1570, %v1738
    %v1740 = vpop.f32.mrb[0].mxu0
    %1741 = vmatprep.mubr.f32.mxu0 0.0
    %v1742 = vand.u32 %v600, 4294901760
    %1743 = vmatmul.mubr.f32.gmra.mrb[0].mxu0 %v1742
    %v1744 = vpop.f32.mrb[0].mxu0
    %v1745 = vadd.f32 %v1576, %v1744
    %v1746 = vpop.f32.mrb[0].mxu0
    %1747 = vmatprep.mubr.f32.mxu0 0.0
    %v1748 = vand.u32 %v603, 4294901760
    %1749 = vmatmul.mubr.f32.gmra.mrb[0].mxu0 %v1748
    %v1750 = vpop.f32.mrb[0].mxu0
    %v1751 = vadd.f32 %v1582, %v1750
    %v1752 = vpop.f32.mrb[0].mxu0
    %1753 = vmatprep.mubr.f32.mxu0 0.0
    %v1754 = vand.u32 %v606, 4294901760
    %1755 = vmatmul.mubr.f32.gmra.mrb[0].mxu0 %v1754
    %v1756 = vpop.f32.mrb[0].mxu0
    %v1757 = vadd.f32 %v1588, %v1756
    %v1758 = vpop.f32.mrb[0].mxu0
    %1759 = vmatprep.mubr.f32.mxu0 0.0
    %v1760 = vand.u32 %v609, 4294901760
    %1761 = vmatmul.mubr.f32.gmra.mrb[0].mxu0 %v1760
    %v1762 = vpop.f32.mrb[0].mxu0
    %v1763 = vadd.f32 %v1594, %v1762
    %v1764 = vpop.f32.mrb[0].mxu0
    %1765 = vmatprep.mubr.f32.mxu0 0.0
    %v1766 = vand.u32 %v612, 4294901760
    %1767 = vmatmul.mubr.f32.gmra.mrb[0].mxu0 %v1766
    %v1768 = vpop.f32.mrb[0].mxu0
    %v1769 = vadd.f32 %v1600, %v1768
    %v1770 = vpop.f32.mrb[0].mxu0
    %1771 = vmatprep.mubr.f32.mxu0 0.0
    %v1772 = vand.u32 %v615, 4294901760
    %1773 = vmatmul.mubr.f32.gmra.mrb[0].mxu0 %v1772
    %v1774 = vpop.f32.mrb[0].mxu0
    %v1775 = vadd.f32 %v1606, %v1774
    %v1776 = vpop.f32.mrb[0].mxu0
    %1777 = vmatprep.mubr.f32.mxu0 0.0
    %v1778 = vand.u32 %v618, 4294901760
    %1779 = vmatmul.mubr.f32.gmra.mrb[0].mxu0 %v1778
    %v1780 = vpop.f32.mrb[0].mxu0
    %v1781 = vadd.f32 %v1612, %v1780
    %v1782 = vpop.f32.mrb[0].mxu0
    %1783 = vmatprep.mubr.f32.mxu0 0.0
    %v1784 = vand.u32 %v621, 4294901760
    %1785 = vmatmul.mubr.f32.gmra.mrb[0].mxu0 %v1784
    %v1786 = vpop.f32.mrb[0].mxu0
    %v1787 = vadd.f32 %v1618, %v1786
    %v1788 = vpop.f32.mrb[0].mxu0
    %1789 = vmatprep.mubr.f32.mxu0 0.0
    %v1790 = vand.u32 %v624, 4294901760
    %1791 = vmatmul.mubr.f32.gmra.mrb[0].mxu0 %v1790
    %v1792 = vpop.f32.mrb[0].mxu0
    %v1793 = vadd.f32 %v1624, %v1792
    %v1794 = vpop.f32.mrb[0].mxu0
    %1795 = vmatprep.mubr.f32.mxu0 0.0
    %v1796 = vand.u32 %v627, 4294901760
    %1797 = vmatmul.mubr.f32.gmra.mrb[0].mxu0 %v1796
    %v1798 = vpop.f32.mrb[0].mxu0
    %v1799 = vadd.f32 %v1630, %v1798
    %v1800 = vpop.f32.mrb[0].mxu0
    %1801 = vmatprep.mubr.f32.mxu0 0.0
    %v1802 = vand.u32 %v630, 4294901760
    %1803 = vmatmul.mubr.f32.gmra.mrb[0].mxu0 %v1802
    %v1804 = vpop.f32.mrb[0].mxu0
    %v1805 = vadd.f32 %v1636, %v1804
    %v1806 = vpop.f32.mrb[0].mxu0
    %1807 = vmatprep.mubr.f32.mxu0 0.0
    %v1808 = vand.u32 %v633, 4294901760
    %1809 = vmatmul.mubr.f32.gmra.mrb[0].mxu0 %v1808
    %v1810 = vpop.f32.mrb[0].mxu0
    %v1811 = vadd.f32 %v1642, %v1810
    %v1812 = vpop.f32.mrb[0].mxu0
    %1813 = vmatprep.mubr.f32.mxu0 0.0
    %v1814 = vand.u32 %v636, 4294901760
    %1815 = vmatmul.mubr.f32.gmra.mrb[0].mxu0 %v1814
    %v1816 = vpop.f32.mrb[0].mxu0
    %v1817 = vadd.f32 %v1648, %v1816
    %v1818 = vpop.f32.mrb[0].mxu0
    %1819 = vdwg.mxu0
    %v1821 = vsel %vm589, %v42, 0
    %v1824 = vsel %vm589, %v43, 0
    %v1827 = vsel %vm589, %v44, 0
    %v1830 = vsel %vm589, %v45, 0
    %v1833 = vsel %vm589, %v46, 0
    %v1836 = vsel %vm589, %v47, 0
    %v1839 = vsel %vm589, %v48, 0
    %v1842 = vsel %vm589, %v49, 0
    %v1845 = vsel %vm589, %v50, 0
    %v1848 = vsel %vm589, %v51, 0
    %v1851 = vsel %vm589, %v52, 0
    %v1854 = vsel %vm589, %v53, 0
    %v1857 = vsel %vm589, %v54, 0
    %v1860 = vsel %vm589, %v55, 0
    %v1863 = vsel %vm589, %v56, 0
    %v1866 = vsel %vm589, %v57, 0
    %1868 = vmatprep.subr.mxu0 0.0
    %v1869 = vand.u32 %v491, 4294901760
    %1870 = vmatpush1.msra.mxu0 %v1869
    %1871 = vmatprep.subr.mxu0 0.0
    %v1872 = vand.u32 %v492, 4294901760
    %1873 = vmatpush1.msra.mxu0 %v1872
    %1874 = vmatprep.subr.mxu0 0.0
    %v1875 = vand.u32 %v493, 4294901760
    %1876 = vmatpush1.msra.mxu0 %v1875
    %1877 = vmatprep.subr.mxu0 0.0
    %v1878 = vand.u32 %v494, 4294901760
    %1879 = vmatpush1.msra.mxu0 %v1878
    %1880 = vmatprep.subr.mxu0 0.0
    %v1881 = vand.u32 %v495, 4294901760
    %1882 = vmatpush1.msra.mxu0 %v1881
    %1883 = vmatprep.subr.mxu0 0.0
    %v1884 = vand.u32 %v496, 4294901760
    %1885 = vmatpush1.msra.mxu0 %v1884
    %1886 = vmatprep.subr.mxu0 0.0
    %v1887 = vand.u32 %v497, 4294901760
    %1888 = vmatpush1.msra.mxu0 %v1887
    %1889 = vmatprep.subr.mxu0 0.0
    %v1890 = vand.u32 %v498, 4294901760
    %1891 = vmatpush1.msra.mxu0 %v1890
    %1892 = vmatprep.subr.mxu0 0.0
    %1893 = vmatpush1.msra.mxu0 0.0
    %1894 = vmatprep.subr.mxu0 0.0
    %1895 = vmatpush1.msra.mxu0 0.0
    %1896 = vmatprep.subr.mxu0 0.0
    %1897 = vmatpush1.msra.mxu0 0.0
    %1898 = vmatprep.subr.mxu0 0.0
    %1899 = vmatpush1.msra.mxu0 0.0
    %1900 = vmatprep.subr.mxu0 0.0
    %1901 = vmatpush1.msra.mxu0 0.0
    %1902 = vmatprep.subr.mxu0 0.0
    %1903 = vmatpush1.msra.mxu0 0.0
    %1904 = vmatprep.subr.mxu0 0.0
    %1905 = vmatpush1.msra.mxu0 0.0
    %1906 = vmatprep.subr.mxu0 0.0
    %1907 = vmatpush1.msra.mxu0 0.0
    %1908 = vmatprep.subr.mxu0 0.0
    %1909 = vmatpush1.msra.mxu0 0.0
    %1910 = vmatprep.subr.mxu0 0.0
    %1911 = vmatpush1.msra.mxu0 0.0
    %1912 = vmatprep.subr.mxu0 0.0
    %1913 = vmatpush1.msra.mxu0 0.0
    %1914 = vmatprep.subr.mxu0 0.0
    %1915 = vmatpush1.msra.mxu0 0.0
    %1916 = vmatprep.subr.mxu0 0.0
    %1917 = vmatpush1.msra.mxu0 0.0
    %1918 = vmatprep.subr.mxu0 0.0
    %1919 = vmatpush1.msra.mxu0 0.0
    %1920 = vmatprep.subr.mxu0 0.0
    %1921 = vmatpush1.msra.mxu0 0.0
    %1922 = vmatprep.subr.mxu0 0.0
    %1923 = vmatpush1.msra.mxu0 0.0
    %1924 = vmatprep.subr.mxu0 0.0
    %1925 = vmatpush1.msra.mxu0 0.0
    %1926 = vmatprep.subr.mxu0 0.0
    %1927 = vmatpush1.msra.mxu0 0.0
    %1928 = vmatprep.subr.mxu0 0.0
    %1929 = vmatpush1.msra.mxu0 0.0
    %1930 = vmatprep.subr.mxu0 0.0
    %1931 = vmatpush1.msra.mxu0 0.0
    %1932 = vmatprep.subr.mxu0 0.0
    %1933 = vmatpush1.msra.mxu0 0.0
    %1934 = vmatprep.subr.mxu0 0.0
    %1935 = vmatpush1.msra.mxu0 0.0
    %1936 = vmatprep.subr.mxu0 0.0
    %1937 = vmatpush1.msra.mxu0 0.0
    %1938 = vmatprep.subr.mxu0 0.0
    %1939 = vmatpush1.msra.mxu0 0.0
    %1940 = vmatprep.mubr.f32.mxu0 0.0
    %v1941 = vand.u32 %v1821, 4294901760
    %v1942 = vsub.f32 %v1821, %v1941
    %v1943 = vand.u32 %v1942, 4294901760
    %v1944 = vsub.f32 %v1942, %v1943
    %v1945 = vand.u32 %v1944, 4294901760
    %1946 = vmatmul.mubr.f32.gmra.mrb[0].mxu0 %v1945
    %v1947 = vpop.f32.mrb[0].mxu0
    %v1948 = vadd.f32 %v1727, %v1947
    %v1949 = vpop.f32.mrb[0].mxu0
    %1950 = vmatprep.mubr.f32.mxu0 0.0
    %v1951 = vand.u32 %v1824, 4294901760
    %v1952 = vsub.f32 %v1824, %v1951
    %v1953 = vand.u32 %v1952, 4294901760
    %v1954 = vsub.f32 %v1952, %v1953
    %v1955 = vand.u32 %v1954, 4294901760
    %1956 = vmatmul.mubr.f32.gmra.mrb[0].mxu0 %v1955
    %v1957 = vpop.f32.mrb[0].mxu0
    %v1958 = vadd.f32 %v1733, %v1957
    %v1959 = vpop.f32.mrb[0].mxu0
    %1960 = vmatprep.mubr.f32.mxu0 0.0
    %v1961 = vand.u32 %v1827, 4294901760
    %v1962 = vsub.f32 %v1827, %v1961
    %v1963 = vand.u32 %v1962, 4294901760
    %v1964 = vsub.f32 %v1962, %v1963
    %v1965 = vand.u32 %v1964, 4294901760
    %1966 = vmatmul.mubr.f32.gmra.mrb[0].mxu0 %v1965
    %v1967 = vpop.f32.mrb[0].mxu0
    %v1968 = vadd.f32 %v1739, %v1967
    %v1969 = vpop.f32.mrb[0].mxu0
    %1970 = vmatprep.mubr.f32.mxu0 0.0
    %v1971 = vand.u32 %v1830, 4294901760
    %v1972 = vsub.f32 %v1830, %v1971
    %v1973 = vand.u32 %v1972, 4294901760
    %v1974 = vsub.f32 %v1972, %v1973
    %v1975 = vand.u32 %v1974, 4294901760
    %1976 = vmatmul.mubr.f32.gmra.mrb[0].mxu0 %v1975
    %v1977 = vpop.f32.mrb[0].mxu0
    %v1978 = vadd.f32 %v1745, %v1977
    %v1979 = vpop.f32.mrb[0].mxu0
    %1980 = vmatprep.mubr.f32.mxu0 0.0
    %v1981 = vand.u32 %v1833, 4294901760
    %v1982 = vsub.f32 %v1833, %v1981
    %v1983 = vand.u32 %v1982, 4294901760
    %v1984 = vsub.f32 %v1982, %v1983
    %v1985 = vand.u32 %v1984, 4294901760
    %1986 = vmatmul.mubr.f32.gmra.mrb[0].mxu0 %v1985
    %v1987 = vpop.f32.mrb[0].mxu0
    %v1988 = vadd.f32 %v1751, %v1987
    %v1989 = vpop.f32.mrb[0].mxu0
    %1990 = vmatprep.mubr.f32.mxu0 0.0
    %v1991 = vand.u32 %v1836, 4294901760
    %v1992 = vsub.f32 %v1836, %v1991
    %v1993 = vand.u32 %v1992, 4294901760
    %v1994 = vsub.f32 %v1992, %v1993
    %v1995 = vand.u32 %v1994, 4294901760
    %1996 = vmatmul.mubr.f32.gmra.mrb[0].mxu0 %v1995
    %v1997 = vpop.f32.mrb[0].mxu0
    %v1998 = vadd.f32 %v1757, %v1997
    %v1999 = vpop.f32.mrb[0].mxu0
    %2000 = vmatprep.mubr.f32.mxu0 0.0
    %v2001 = vand.u32 %v1839, 4294901760
    %v2002 = vsub.f32 %v1839, %v2001
    %v2003 = vand.u32 %v2002, 4294901760
    %v2004 = vsub.f32 %v2002, %v2003
    %v2005 = vand.u32 %v2004, 4294901760
    %2006 = vmatmul.mubr.f32.gmra.mrb[0].mxu0 %v2005
    %v2007 = vpop.f32.mrb[0].mxu0
    %v2008 = vadd.f32 %v1763, %v2007
    %v2009 = vpop.f32.mrb[0].mxu0
    %2010 = vmatprep.mubr.f32.mxu0 0.0
    %v2011 = vand.u32 %v1842, 4294901760
    %v2012 = vsub.f32 %v1842, %v2011
    %v2013 = vand.u32 %v2012, 4294901760
    %v2014 = vsub.f32 %v2012, %v2013
    %v2015 = vand.u32 %v2014, 4294901760
    %2016 = vmatmul.mubr.f32.gmra.mrb[0].mxu0 %v2015
    %v2017 = vpop.f32.mrb[0].mxu0
    %v2018 = vadd.f32 %v1769, %v2017
    %v2019 = vpop.f32.mrb[0].mxu0
    %2020 = vmatprep.mubr.f32.mxu0 0.0
    %v2021 = vand.u32 %v1845, 4294901760
    %v2022 = vsub.f32 %v1845, %v2021
    %v2023 = vand.u32 %v2022, 4294901760
    %v2024 = vsub.f32 %v2022, %v2023
    %v2025 = vand.u32 %v2024, 4294901760
    %2026 = vmatmul.mubr.f32.gmra.mrb[0].mxu0 %v2025
    %v2027 = vpop.f32.mrb[0].mxu0
    %v2028 = vadd.f32 %v1775, %v2027
    %v2029 = vpop.f32.mrb[0].mxu0
    %2030 = vmatprep.mubr.f32.mxu0 0.0
    %v2031 = vand.u32 %v1848, 4294901760
    %v2032 = vsub.f32 %v1848, %v2031
    %v2033 = vand.u32 %v2032, 4294901760
    %v2034 = vsub.f32 %v2032, %v2033
    %v2035 = vand.u32 %v2034, 4294901760
    %2036 = vmatmul.mubr.f32.gmra.mrb[0].mxu0 %v2035
    %v2037 = vpop.f32.mrb[0].mxu0
    %v2038 = vadd.f32 %v1781, %v2037
    %v2039 = vpop.f32.mrb[0].mxu0
    %2040 = vmatprep.mubr.f32.mxu0 0.0
    %v2041 = vand.u32 %v1851, 4294901760
    %v2042 = vsub.f32 %v1851, %v2041
    %v2043 = vand.u32 %v2042, 4294901760
    %v2044 = vsub.f32 %v2042, %v2043
    %v2045 = vand.u32 %v2044, 4294901760
    %2046 = vmatmul.mubr.f32.gmra.mrb[0].mxu0 %v2045
    %v2047 = vpop.f32.mrb[0].mxu0
    %v2048 = vadd.f32 %v1787, %v2047
    %v2049 = vpop.f32.mrb[0].mxu0
    %2050 = vmatprep.mubr.f32.mxu0 0.0
    %v2051 = vand.u32 %v1854, 4294901760
    %v2052 = vsub.f32 %v1854, %v2051
    %v2053 = vand.u32 %v2052, 4294901760
    %v2054 = vsub.f32 %v2052, %v2053
    %v2055 = vand.u32 %v2054, 4294901760
    %2056 = vmatmul.mubr.f32.gmra.mrb[0].mxu0 %v2055
    %v2057 = vpop.f32.mrb[0].mxu0
    %v2058 = vadd.f32 %v1793, %v2057
    %v2059 = vpop.f32.mrb[0].mxu0
    %2060 = vmatprep.mubr.f32.mxu0 0.0
    %v2061 = vand.u32 %v1857, 4294901760
    %v2062 = vsub.f32 %v1857, %v2061
    %v2063 = vand.u32 %v2062, 4294901760
    %v2064 = vsub.f32 %v2062, %v2063
    %v2065 = vand.u32 %v2064, 4294901760
    %2066 = vmatmul.mubr.f32.gmra.mrb[0].mxu0 %v2065
    %v2067 = vpop.f32.mrb[0].mxu0
    %v2068 = vadd.f32 %v1799, %v2067
    %v2069 = vpop.f32.mrb[0].mxu0
    %2070 = vmatprep.mubr.f32.mxu0 0.0
    %v2071 = vand.u32 %v1860, 4294901760
    %v2072 = vsub.f32 %v1860, %v2071
    %v2073 = vand.u32 %v2072, 4294901760
    %v2074 = vsub.f32 %v2072, %v2073
    %v2075 = vand.u32 %v2074, 4294901760
    %2076 = vmatmul.mubr.f32.gmra.mrb[0].mxu0 %v2075
    %v2077 = vpop.f32.mrb[0].mxu0
    %v2078 = vadd.f32 %v1805, %v2077
    %v2079 = vpop.f32.mrb[0].mxu0
    %2080 = vmatprep.mubr.f32.mxu0 0.0
    %v2081 = vand.u32 %v1863, 4294901760
    %v2082 = vsub.f32 %v1863, %v2081
    %v2083 = vand.u32 %v2082, 4294901760
    %v2084 = vsub.f32 %v2082, %v2083
    %v2085 = vand.u32 %v2084, 4294901760
    %2086 = vmatmul.mubr.f32.gmra.mrb[0].mxu0 %v2085
    %v2087 = vpop.f32.mrb[0].mxu0
    %v2088 = vadd.f32 %v1811, %v2087
    %v2089 = vpop.f32.mrb[0].mxu0
    %2090 = vmatprep.mubr.f32.mxu0 0.0
    %v2091 = vand.u32 %v1866, 4294901760
    %v2092 = vsub.f32 %v1866, %v2091
    %v2093 = vand.u32 %v2092, 4294901760
    %v2094 = vsub.f32 %v2092, %v2093
    %v2095 = vand.u32 %v2094, 4294901760
    %2096 = vmatmul.mubr.f32.gmra.mrb[0].mxu0 %v2095
    %v2097 = vpop.f32.mrb[0].mxu0
    %v2098 = vadd.f32 %v1817, %v2097
    %v2099 = vpop.f32.mrb[0].mxu0
    %2100 = vdwg.mxu0
    %2101 = vmatprep.subr.mxu0 0.0
    %v2102 = vand.u32 %v491, 4294901760
    %v2103 = vsub.f32 %v491, %v2102
    %v2104 = vand.u32 %v2103, 4294901760
    %v2105 = vsub.f32 %v2103, %v2104
    %v2106 = vand.u32 %v2105, 4294901760
    %2107 = vmatpush1.msra.mxu0 %v2106
    %2108 = vmatprep.subr.mxu0 0.0
    %v2109 = vand.u32 %v492, 4294901760
    %v2110 = vsub.f32 %v492, %v2109
    %v2111 = vand.u32 %v2110, 4294901760
    %v2112 = vsub.f32 %v2110, %v2111
    %v2113 = vand.u32 %v2112, 4294901760
    %2114 = vmatpush1.msra.mxu0 %v2113
    %2115 = vmatprep.subr.mxu0 0.0
    %v2116 = vand.u32 %v493, 4294901760
    %v2117 = vsub.f32 %v493, %v2116
    %v2118 = vand.u32 %v2117, 4294901760
    %v2119 = vsub.f32 %v2117, %v2118
    %v2120 = vand.u32 %v2119, 4294901760
    %2121 = vmatpush1.msra.mxu0 %v2120
    %2122 = vmatprep.subr.mxu0 0.0
    %v2123 = vand.u32 %v494, 4294901760
    %v2124 = vsub.f32 %v494, %v2123
    %v2125 = vand.u32 %v2124, 4294901760
    %v2126 = vsub.f32 %v2124, %v2125
    %v2127 = vand.u32 %v2126, 4294901760
    %2128 = vmatpush1.msra.mxu0 %v2127
    %2129 = vmatprep.subr.mxu0 0.0
    %v2130 = vand.u32 %v495, 4294901760
    %v2131 = vsub.f32 %v495, %v2130
    %v2132 = vand.u32 %v2131, 4294901760
    %v2133 = vsub.f32 %v2131, %v2132
    %v2134 = vand.u32 %v2133, 4294901760
    %2135 = vmatpush1.msra.mxu0 %v2134
    %2136 = vmatprep.subr.mxu0 0.0
    %v2137 = vand.u32 %v496, 4294901760
    %v2138 = vsub.f32 %v496, %v2137
    %v2139 = vand.u32 %v2138, 4294901760
    %v2140 = vsub.f32 %v2138, %v2139
    %v2141 = vand.u32 %v2140, 4294901760
    %2142 = vmatpush1.msra.mxu0 %v2141
    %2143 = vmatprep.subr.mxu0 0.0
    %v2144 = vand.u32 %v497, 4294901760
    %v2145 = vsub.f32 %v497, %v2144
    %v2146 = vand.u32 %v2145, 4294901760
    %v2147 = vsub.f32 %v2145, %v2146
    %v2148 = vand.u32 %v2147, 4294901760
    %2149 = vmatpush1.msra.mxu0 %v2148
    %2150 = vmatprep.subr.mxu0 0.0
    %v2151 = vand.u32 %v498, 4294901760
    %v2152 = vsub.f32 %v498, %v2151
    %v2153 = vand.u32 %v2152, 4294901760
    %v2154 = vsub.f32 %v2152, %v2153
    %v2155 = vand.u32 %v2154, 4294901760
    %2156 = vmatpush1.msra.mxu0 %v2155
    %2157 = vmatprep.subr.mxu0 0.0
    %2158 = vmatpush1.msra.mxu0 0.0
    %2159 = vmatprep.subr.mxu0 0.0
    %2160 = vmatpush1.msra.mxu0 0.0
    %2161 = vmatprep.subr.mxu0 0.0
    %2162 = vmatpush1.msra.mxu0 0.0
    %2163 = vmatprep.subr.mxu0 0.0
    %2164 = vmatpush1.msra.mxu0 0.0
    %2165 = vmatprep.subr.mxu0 0.0
    %2166 = vmatpush1.msra.mxu0 0.0
    %2167 = vmatprep.subr.mxu0 0.0
    %2168 = vmatpush1.msra.mxu0 0.0
    %2169 = vmatprep.subr.mxu0 0.0
    %2170 = vmatpush1.msra.mxu0 0.0
    %2171 = vmatprep.subr.mxu0 0.0
    %2172 = vmatpush1.msra.mxu0 0.0
    %2173 = vmatprep.subr.mxu0 0.0
    %2174 = vmatpush1.msra.mxu0 0.0
    %2175 = vmatprep.subr.mxu0 0.0
    %2176 = vmatpush1.msra.mxu0 0.0
    %2177 = vmatprep.subr.mxu0 0.0
    %2178 = vmatpush1.msra.mxu0 0.0
    %2179 = vmatprep.subr.mxu0 0.0
    %2180 = vmatpush1.msra.mxu0 0.0
    %2181 = vmatprep.subr.mxu0 0.0
    %2182 = vmatpush1.msra.mxu0 0.0
    %2183 = vmatprep.subr.mxu0 0.0
    %2184 = vmatpush1.msra.mxu0 0.0
    %2185 = vmatprep.subr.mxu0 0.0
    %2186 = vmatpush1.msra.mxu0 0.0
    %2187 = vmatprep.subr.mxu0 0.0
    %2188 = vmatpush1.msra.mxu0 0.0
    %2189 = vmatprep.subr.mxu0 0.0
    %2190 = vmatpush1.msra.mxu0 0.0
    %2191 = vmatprep.subr.mxu0 0.0
    %2192 = vmatpush1.msra.mxu0 0.0
    %2193 = vmatprep.subr.mxu0 0.0
    %2194 = vmatpush1.msra.mxu0 0.0
    %2195 = vmatprep.subr.mxu0 0.0
    %2196 = vmatpush1.msra.mxu0 0.0
    %2197 = vmatprep.subr.mxu0 0.0
    %2198 = vmatpush1.msra.mxu0 0.0
    %2199 = vmatprep.subr.mxu0 0.0
    %2200 = vmatpush1.msra.mxu0 0.0
    %2201 = vmatprep.subr.mxu0 0.0
    %2202 = vmatpush1.msra.mxu0 0.0
    %2203 = vmatprep.subr.mxu0 0.0
    %2204 = vmatpush1.msra.mxu0 0.0
    %2205 = vmatprep.mubr.f32.mxu0 0.0
    %v2206 = vand.u32 %v1821, 4294901760
    %2207 = vmatmul.mubr.f32.gmra.mrb[0].mxu0 %v2206
    %v2208 = vpop.f32.mrb[0].mxu0
    %v2209 = vadd.f32 %v1948, %v2208
    %v2210 = vpop.f32.mrb[0].mxu0
    %2211 = vmatprep.mubr.f32.mxu0 0.0
    %v2212 = vand.u32 %v1824, 4294901760
    %2213 = vmatmul.mubr.f32.gmra.mrb[0].mxu0 %v2212
    %v2214 = vpop.f32.mrb[0].mxu0
    %v2215 = vadd.f32 %v1958, %v2214
    %v2216 = vpop.f32.mrb[0].mxu0
    %2217 = vmatprep.mubr.f32.mxu0 0.0
    %v2218 = vand.u32 %v1827, 4294901760
    %2219 = vmatmul.mubr.f32.gmra.mrb[0].mxu0 %v2218
    %v2220 = vpop.f32.mrb[0].mxu0
    %v2221 = vadd.f32 %v1968, %v2220
    %v2222 = vpop.f32.mrb[0].mxu0
    %2223 = vmatprep.mubr.f32.mxu0 0.0
    %v2224 = vand.u32 %v1830, 4294901760
    %2225 = vmatmul.mubr.f32.gmra.mrb[0].mxu0 %v2224
    %v2226 = vpop.f32.mrb[0].mxu0
    %v2227 = vadd.f32 %v1978, %v2226
    %v2228 = vpop.f32.mrb[0].mxu0
    %2229 = vmatprep.mubr.f32.mxu0 0.0
    %v2230 = vand.u32 %v1833, 4294901760
    %2231 = vmatmul.mubr.f32.gmra.mrb[0].mxu0 %v2230
    %v2232 = vpop.f32.mrb[0].mxu0
    %v2233 = vadd.f32 %v1988, %v2232
    %v2234 = vpop.f32.mrb[0].mxu0
    %2235 = vmatprep.mubr.f32.mxu0 0.0
    %v2236 = vand.u32 %v1836, 4294901760
    %2237 = vmatmul.mubr.f32.gmra.mrb[0].mxu0 %v2236
    %v2238 = vpop.f32.mrb[0].mxu0
    %v2239 = vadd.f32 %v1998, %v2238
    %v2240 = vpop.f32.mrb[0].mxu0
    %2241 = vmatprep.mubr.f32.mxu0 0.0
    %v2242 = vand.u32 %v1839, 4294901760
    %2243 = vmatmul.mubr.f32.gmra.mrb[0].mxu0 %v2242
    %v2244 = vpop.f32.mrb[0].mxu0
    %v2245 = vadd.f32 %v2008, %v2244
    %v2246 = vpop.f32.mrb[0].mxu0
    %2247 = vmatprep.mubr.f32.mxu0 0.0
    %v2248 = vand.u32 %v1842, 4294901760
    %2249 = vmatmul.mubr.f32.gmra.mrb[0].mxu0 %v2248
    %v2250 = vpop.f32.mrb[0].mxu0
    %v2251 = vadd.f32 %v2018, %v2250
    %v2252 = vpop.f32.mrb[0].mxu0
    %2253 = vmatprep.mubr.f32.mxu0 0.0
    %v2254 = vand.u32 %v1845, 4294901760
    %2255 = vmatmul.mubr.f32.gmra.mrb[0].mxu0 %v2254
    %v2256 = vpop.f32.mrb[0].mxu0
    %v2257 = vadd.f32 %v2028, %v2256
    %v2258 = vpop.f32.mrb[0].mxu0
    %2259 = vmatprep.mubr.f32.mxu0 0.0
    %v2260 = vand.u32 %v1848, 4294901760
    %2261 = vmatmul.mubr.f32.gmra.mrb[0].mxu0 %v2260
    %v2262 = vpop.f32.mrb[0].mxu0
    %v2263 = vadd.f32 %v2038, %v2262
    %v2264 = vpop.f32.mrb[0].mxu0
    %2265 = vmatprep.mubr.f32.mxu0 0.0
    %v2266 = vand.u32 %v1851, 4294901760
    %2267 = vmatmul.mubr.f32.gmra.mrb[0].mxu0 %v2266
    %v2268 = vpop.f32.mrb[0].mxu0
    %v2269 = vadd.f32 %v2048, %v2268
    %v2270 = vpop.f32.mrb[0].mxu0
    %2271 = vmatprep.mubr.f32.mxu0 0.0
    %v2272 = vand.u32 %v1854, 4294901760
    %2273 = vmatmul.mubr.f32.gmra.mrb[0].mxu0 %v2272
    %v2274 = vpop.f32.mrb[0].mxu0
    %v2275 = vadd.f32 %v2058, %v2274
    %v2276 = vpop.f32.mrb[0].mxu0
    %2277 = vmatprep.mubr.f32.mxu0 0.0
    %v2278 = vand.u32 %v1857, 4294901760
    %2279 = vmatmul.mubr.f32.gmra.mrb[0].mxu0 %v2278
    %v2280 = vpop.f32.mrb[0].mxu0
    %v2281 = vadd.f32 %v2068, %v2280
    %v2282 = vpop.f32.mrb[0].mxu0
    %2283 = vmatprep.mubr.f32.mxu0 0.0
    %v2284 = vand.u32 %v1860, 4294901760
    %2285 = vmatmul.mubr.f32.gmra.mrb[0].mxu0 %v2284
    %v2286 = vpop.f32.mrb[0].mxu0
    %v2287 = vadd.f32 %v2078, %v2286
    %v2288 = vpop.f32.mrb[0].mxu0
    %2289 = vmatprep.mubr.f32.mxu0 0.0
    %v2290 = vand.u32 %v1863, 4294901760
    %2291 = vmatmul.mubr.f32.gmra.mrb[0].mxu0 %v2290
    %v2292 = vpop.f32.mrb[0].mxu0
    %v2293 = vadd.f32 %v2088, %v2292
    %v2294 = vpop.f32.mrb[0].mxu0
    %2295 = vmatprep.mubr.f32.mxu0 0.0
    %v2296 = vand.u32 %v1866, 4294901760
    %2297 = vmatmul.mubr.f32.gmra.mrb[0].mxu0 %v2296
    %v2298 = vpop.f32.mrb[0].mxu0
    %v2299 = vadd.f32 %v2098, %v2298
    %v2300 = vpop.f32.mrb[0].mxu0
    %2301 = vdwg.mxu0
    %2302 = vmatprep.subr.mxu0 0.0
    %v2303 = vand.u32 %v491, 4294901760
    %v2304 = vsub.f32 %v491, %v2303
    %2305 = vmatpush1.msra.mxu0 %v2304
    %2306 = vmatprep.subr.mxu0 0.0
    %v2307 = vand.u32 %v492, 4294901760
    %v2308 = vsub.f32 %v492, %v2307
    %2309 = vmatpush1.msra.mxu0 %v2308
    %2310 = vmatprep.subr.mxu0 0.0
    %v2311 = vand.u32 %v493, 4294901760
    %v2312 = vsub.f32 %v493, %v2311
    %2313 = vmatpush1.msra.mxu0 %v2312
    %2314 = vmatprep.subr.mxu0 0.0
    %v2315 = vand.u32 %v494, 4294901760
    %v2316 = vsub.f32 %v494, %v2315
    %2317 = vmatpush1.msra.mxu0 %v2316
    %2318 = vmatprep.subr.mxu0 0.0
    %v2319 = vand.u32 %v495, 4294901760
    %v2320 = vsub.f32 %v495, %v2319
    %2321 = vmatpush1.msra.mxu0 %v2320
    %2322 = vmatprep.subr.mxu0 0.0
    %v2323 = vand.u32 %v496, 4294901760
    %v2324 = vsub.f32 %v496, %v2323
    %2325 = vmatpush1.msra.mxu0 %v2324
    %2326 = vmatprep.subr.mxu0 0.0
    %v2327 = vand.u32 %v497, 4294901760
    %v2328 = vsub.f32 %v497, %v2327
    %2329 = vmatpush1.msra.mxu0 %v2328
    %2330 = vmatprep.subr.mxu0 0.0
    %v2331 = vand.u32 %v498, 4294901760
    %v2332 = vsub.f32 %v498, %v2331
    %2333 = vmatpush1.msra.mxu0 %v2332
    %2334 = vmatprep.subr.mxu0 0.0
    %2335 = vmatpush1.msra.mxu0 0.0
    %2336 = vmatprep.subr.mxu0 0.0
    %2337 = vmatpush1.msra.mxu0 0.0
    %2338 = vmatprep.subr.mxu0 0.0
    %2339 = vmatpush1.msra.mxu0 0.0
    %2340 = vmatprep.subr.mxu0 0.0
    %2341 = vmatpush1.msra.mxu0 0.0
    %2342 = vmatprep.subr.mxu0 0.0
    %2343 = vmatpush1.msra.mxu0 0.0
    %2344 = vmatprep.subr.mxu0 0.0
    %2345 = vmatpush1.msra.mxu0 0.0
    %2346 = vmatprep.subr.mxu0 0.0
    %2347 = vmatpush1.msra.mxu0 0.0
    %2348 = vmatprep.subr.mxu0 0.0
    %2349 = vmatpush1.msra.mxu0 0.0
    %2350 = vmatprep.subr.mxu0 0.0
    %2351 = vmatpush1.msra.mxu0 0.0
    %2352 = vmatprep.subr.mxu0 0.0
    %2353 = vmatpush1.msra.mxu0 0.0
    %2354 = vmatprep.subr.mxu0 0.0
    %2355 = vmatpush1.msra.mxu0 0.0
    %2356 = vmatprep.subr.mxu0 0.0
    %2357 = vmatpush1.msra.mxu0 0.0
    %2358 = vmatprep.subr.mxu0 0.0
    %2359 = vmatpush1.msra.mxu0 0.0
    %2360 = vmatprep.subr.mxu0 0.0
    %2361 = vmatpush1.msra.mxu0 0.0
    %2362 = vmatprep.subr.mxu0 0.0
    %2363 = vmatpush1.msra.mxu0 0.0
    %2364 = vmatprep.subr.mxu0 0.0
    %2365 = vmatpush1.msra.mxu0 0.0
    %2366 = vmatprep.subr.mxu0 0.0
    %2367 = vmatpush1.msra.mxu0 0.0
    %2368 = vmatprep.subr.mxu0 0.0
    %2369 = vmatpush1.msra.mxu0 0.0
    %2370 = vmatprep.subr.mxu0 0.0
    %2371 = vmatpush1.msra.mxu0 0.0
    %2372 = vmatprep.subr.mxu0 0.0
    %2373 = vmatpush1.msra.mxu0 0.0
    %2374 = vmatprep.subr.mxu0 0.0
    %2375 = vmatpush1.msra.mxu0 0.0
    %2376 = vmatprep.subr.mxu0 0.0
    %2377 = vmatpush1.msra.mxu0 0.0
    %2378 = vmatprep.subr.mxu0 0.0
    %2379 = vmatpush1.msra.mxu0 0.0
    %2380 = vmatprep.subr.mxu0 0.0
    %2381 = vmatpush1.msra.mxu0 0.0
    %2382 = vmatprep.mubr.f32.mxu0 0.0
    %v2383 = vand.u32 %v1821, 4294901760
    %v2384 = vsub.f32 %v1821, %v2383
    %2385 = vmatmul.mubr.f32.gmra.mrb[0].mxu0 %v2384
    %v2386 = vpop.f32.mrb[0].mxu0
    %v2387 = vadd.f32 %v2209, %v2386
    %v2388 = vpop.f32.mrb[0].mxu0
    %2389 = vmatprep.mubr.f32.mxu0 0.0
    %v2390 = vand.u32 %v1824, 4294901760
    %v2391 = vsub.f32 %v1824, %v2390
    %2392 = vmatmul.mubr.f32.gmra.mrb[0].mxu0 %v2391
    %v2393 = vpop.f32.mrb[0].mxu0
    %v2394 = vadd.f32 %v2215, %v2393
    %v2395 = vpop.f32.mrb[0].mxu0
    %2396 = vmatprep.mubr.f32.mxu0 0.0
    %v2397 = vand.u32 %v1827, 4294901760
    %v2398 = vsub.f32 %v1827, %v2397
    %2399 = vmatmul.mubr.f32.gmra.mrb[0].mxu0 %v2398
    %v2400 = vpop.f32.mrb[0].mxu0
    %v2401 = vadd.f32 %v2221, %v2400
    %v2402 = vpop.f32.mrb[0].mxu0
    %2403 = vmatprep.mubr.f32.mxu0 0.0
    %v2404 = vand.u32 %v1830, 4294901760
    %v2405 = vsub.f32 %v1830, %v2404
    %2406 = vmatmul.mubr.f32.gmra.mrb[0].mxu0 %v2405
    %v2407 = vpop.f32.mrb[0].mxu0
    %v2408 = vadd.f32 %v2227, %v2407
    %v2409 = vpop.f32.mrb[0].mxu0
    %2410 = vmatprep.mubr.f32.mxu0 0.0
    %v2411 = vand.u32 %v1833, 4294901760
    %v2412 = vsub.f32 %v1833, %v2411
    %2413 = vmatmul.mubr.f32.gmra.mrb[0].mxu0 %v2412
    %v2414 = vpop.f32.mrb[0].mxu0
    %v2415 = vadd.f32 %v2233, %v2414
    %v2416 = vpop.f32.mrb[0].mxu0
    %2417 = vmatprep.mubr.f32.mxu0 0.0
    %v2418 = vand.u32 %v1836, 4294901760
    %v2419 = vsub.f32 %v1836, %v2418
    %2420 = vmatmul.mubr.f32.gmra.mrb[0].mxu0 %v2419
    %v2421 = vpop.f32.mrb[0].mxu0
    %v2422 = vadd.f32 %v2239, %v2421
    %v2423 = vpop.f32.mrb[0].mxu0
    %2424 = vmatprep.mubr.f32.mxu0 0.0
    %v2425 = vand.u32 %v1839, 4294901760
    %v2426 = vsub.f32 %v1839, %v2425
    %2427 = vmatmul.mubr.f32.gmra.mrb[0].mxu0 %v2426
    %v2428 = vpop.f32.mrb[0].mxu0
    %v2429 = vadd.f32 %v2245, %v2428
    %v2430 = vpop.f32.mrb[0].mxu0
    %2431 = vmatprep.mubr.f32.mxu0 0.0
    %v2432 = vand.u32 %v1842, 4294901760
    %v2433 = vsub.f32 %v1842, %v2432
    %2434 = vmatmul.mubr.f32.gmra.mrb[0].mxu0 %v2433
    %v2435 = vpop.f32.mrb[0].mxu0
    %v2436 = vadd.f32 %v2251, %v2435
    %v2437 = vpop.f32.mrb[0].mxu0
    %2438 = vmatprep.mubr.f32.mxu0 0.0
    %v2439 = vand.u32 %v1845, 4294901760
    %v2440 = vsub.f32 %v1845, %v2439
    %2441 = vmatmul.mubr.f32.gmra.mrb[0].mxu0 %v2440
    %v2442 = vpop.f32.mrb[0].mxu0
    %v2443 = vadd.f32 %v2257, %v2442
    %v2444 = vpop.f32.mrb[0].mxu0
    %2445 = vmatprep.mubr.f32.mxu0 0.0
    %v2446 = vand.u32 %v1848, 4294901760
    %v2447 = vsub.f32 %v1848, %v2446
    %2448 = vmatmul.mubr.f32.gmra.mrb[0].mxu0 %v2447
    %v2449 = vpop.f32.mrb[0].mxu0
    %v2450 = vadd.f32 %v2263, %v2449
    %v2451 = vpop.f32.mrb[0].mxu0
    %2452 = vmatprep.mubr.f32.mxu0 0.0
    %v2453 = vand.u32 %v1851, 4294901760
    %v2454 = vsub.f32 %v1851, %v2453
    %2455 = vmatmul.mubr.f32.gmra.mrb[0].mxu0 %v2454
    %v2456 = vpop.f32.mrb[0].mxu0
    %v2457 = vadd.f32 %v2269, %v2456
    %v2458 = vpop.f32.mrb[0].mxu0
    %2459 = vmatprep.mubr.f32.mxu0 0.0
    %v2460 = vand.u32 %v1854, 4294901760
    %v2461 = vsub.f32 %v1854, %v2460
    %2462 = vmatmul.mubr.f32.gmra.mrb[0].mxu0 %v2461
    %v2463 = vpop.f32.mrb[0].mxu0
    %v2464 = vadd.f32 %v2275, %v2463
    %v2465 = vpop.f32.mrb[0].mxu0
    %2466 = vmatprep.mubr.f32.mxu0 0.0
    %v2467 = vand.u32 %v1857, 4294901760
    %v2468 = vsub.f32 %v1857, %v2467
    %2469 = vmatmul.mubr.f32.gmra.mrb[0].mxu0 %v2468
    %v2470 = vpop.f32.mrb[0].mxu0
    %v2471 = vadd.f32 %v2281, %v2470
    %v2472 = vpop.f32.mrb[0].mxu0
    %2473 = vmatprep.mubr.f32.mxu0 0.0
    %v2474 = vand.u32 %v1860, 4294901760
    %v2475 = vsub.f32 %v1860, %v2474
    %2476 = vmatmul.mubr.f32.gmra.mrb[0].mxu0 %v2475
    %v2477 = vpop.f32.mrb[0].mxu0
    %v2478 = vadd.f32 %v2287, %v2477
    %v2479 = vpop.f32.mrb[0].mxu0
    %2480 = vmatprep.mubr.f32.mxu0 0.0
    %v2481 = vand.u32 %v1863, 4294901760
    %v2482 = vsub.f32 %v1863, %v2481
    %2483 = vmatmul.mubr.f32.gmra.mrb[0].mxu0 %v2482
    %v2484 = vpop.f32.mrb[0].mxu0
    %v2485 = vadd.f32 %v2293, %v2484
    %v2486 = vpop.f32.mrb[0].mxu0
    %2487 = vmatprep.mubr.f32.mxu0 0.0
    %v2488 = vand.u32 %v1866, 4294901760
    %v2489 = vsub.f32 %v1866, %v2488
    %2490 = vmatmul.mubr.f32.gmra.mrb[0].mxu0 %v2489
    %v2491 = vpop.f32.mrb[0].mxu0
    %v2492 = vadd.f32 %v2299, %v2491
    %v2493 = vpop.f32.mrb[0].mxu0
    %2494 = vdwg.mxu0
    %2495 = vmatprep.subr.mxu0 0.0
    %v2496 = vand.u32 %v491, 4294901760
    %2497 = vmatpush1.msra.mxu0 %v2496
    %2498 = vmatprep.subr.mxu0 0.0
    %v2499 = vand.u32 %v492, 4294901760
    %2500 = vmatpush1.msra.mxu0 %v2499
    %2501 = vmatprep.subr.mxu0 0.0
    %v2502 = vand.u32 %v493, 4294901760
    %2503 = vmatpush1.msra.mxu0 %v2502
    %2504 = vmatprep.subr.mxu0 0.0
    %v2505 = vand.u32 %v494, 4294901760
    %2506 = vmatpush1.msra.mxu0 %v2505
    %2507 = vmatprep.subr.mxu0 0.0
    %v2508 = vand.u32 %v495, 4294901760
    %2509 = vmatpush1.msra.mxu0 %v2508
    %2510 = vmatprep.subr.mxu0 0.0
    %v2511 = vand.u32 %v496, 4294901760
    %2512 = vmatpush1.msra.mxu0 %v2511
    %2513 = vmatprep.subr.mxu0 0.0
    %v2514 = vand.u32 %v497, 4294901760
    %2515 = vmatpush1.msra.mxu0 %v2514
    %2516 = vmatprep.subr.mxu0 0.0
    %v2517 = vand.u32 %v498, 4294901760
    %2518 = vmatpush1.msra.mxu0 %v2517
    %2519 = vmatprep.subr.mxu0 0.0
    %2520 = vmatpush1.msra.mxu0 0.0
    %2521 = vmatprep.subr.mxu0 0.0
    %2522 = vmatpush1.msra.mxu0 0.0
    %2523 = vmatprep.subr.mxu0 0.0
    %2524 = vmatpush1.msra.mxu0 0.0
    %2525 = vmatprep.subr.mxu0 0.0
    %2526 = vmatpush1.msra.mxu0 0.0
    %2527 = vmatprep.subr.mxu0 0.0
    %2528 = vmatpush1.msra.mxu0 0.0
    %2529 = vmatprep.subr.mxu0 0.0
    %2530 = vmatpush1.msra.mxu0 0.0
    %2531 = vmatprep.subr.mxu0 0.0
    %2532 = vmatpush1.msra.mxu0 0.0
    %2533 = vmatprep.subr.mxu0 0.0
    %2534 = vmatpush1.msra.mxu0 0.0
    %2535 = vmatprep.subr.mxu0 0.0
    %2536 = vmatpush1.msra.mxu0 0.0
    %2537 = vmatprep.subr.mxu0 0.0
    %2538 = vmatpush1.msra.mxu0 0.0
    %2539 = vmatprep.subr.mxu0 0.0
    %2540 = vmatpush1.msra.mxu0 0.0
    %2541 = vmatprep.subr.mxu0 0.0
    %2542 = vmatpush1.msra.mxu0 0.0
    %2543 = vmatprep.subr.mxu0 0.0
    %2544 = vmatpush1.msra.mxu0 0.0
    %2545 = vmatprep.subr.mxu0 0.0
    %2546 = vmatpush1.msra.mxu0 0.0
    %2547 = vmatprep.subr.mxu0 0.0
    %2548 = vmatpush1.msra.mxu0 0.0
    %2549 = vmatprep.subr.mxu0 0.0
    %2550 = vmatpush1.msra.mxu0 0.0
    %2551 = vmatprep.subr.mxu0 0.0
    %2552 = vmatpush1.msra.mxu0 0.0
    %2553 = vmatprep.subr.mxu0 0.0
    %2554 = vmatpush1.msra.mxu0 0.0
    %2555 = vmatprep.subr.mxu0 0.0
    %2556 = vmatpush1.msra.mxu0 0.0
    %2557 = vmatprep.subr.mxu0 0.0
    %2558 = vmatpush1.msra.mxu0 0.0
    %2559 = vmatprep.subr.mxu0 0.0
    %2560 = vmatpush1.msra.mxu0 0.0
    %2561 = vmatprep.subr.mxu0 0.0
    %2562 = vmatpush1.msra.mxu0 0.0
    %2563 = vmatprep.subr.mxu0 0.0
    %2564 = vmatpush1.msra.mxu0 0.0
    %2565 = vmatprep.subr.mxu0 0.0
    %2566 = vmatpush1.msra.mxu0 0.0
    %2567 = vmatprep.mubr.f32.mxu0 0.0
    %v2568 = vand.u32 %v1821, 4294901760
    %v2569 = vsub.f32 %v1821, %v2568
    %v2570 = vand.u32 %v2569, 4294901760
    %2571 = vmatmul.mubr.f32.gmra.mrb[0].mxu0 %v2570
    %v2572 = vpop.f32.mrb[0].mxu0
    %v2573 = vadd.f32 %v2387, %v2572
    %v2574 = vpop.f32.mrb[0].mxu0
    %2575 = vmatprep.mubr.f32.mxu0 0.0
    %v2576 = vand.u32 %v1824, 4294901760
    %v2577 = vsub.f32 %v1824, %v2576
    %v2578 = vand.u32 %v2577, 4294901760
    %2579 = vmatmul.mubr.f32.gmra.mrb[0].mxu0 %v2578
    %v2580 = vpop.f32.mrb[0].mxu0
    %v2581 = vadd.f32 %v2394, %v2580
    %v2582 = vpop.f32.mrb[0].mxu0
    %2583 = vmatprep.mubr.f32.mxu0 0.0
    %v2584 = vand.u32 %v1827, 4294901760
    %v2585 = vsub.f32 %v1827, %v2584
    %v2586 = vand.u32 %v2585, 4294901760
    %2587 = vmatmul.mubr.f32.gmra.mrb[0].mxu0 %v2586
    %v2588 = vpop.f32.mrb[0].mxu0
    %v2589 = vadd.f32 %v2401, %v2588
    %v2590 = vpop.f32.mrb[0].mxu0
    %2591 = vmatprep.mubr.f32.mxu0 0.0
    %v2592 = vand.u32 %v1830, 4294901760
    %v2593 = vsub.f32 %v1830, %v2592
    %v2594 = vand.u32 %v2593, 4294901760
    %2595 = vmatmul.mubr.f32.gmra.mrb[0].mxu0 %v2594
    %v2596 = vpop.f32.mrb[0].mxu0
    %v2597 = vadd.f32 %v2408, %v2596
    %v2598 = vpop.f32.mrb[0].mxu0
    %2599 = vmatprep.mubr.f32.mxu0 0.0
    %v2600 = vand.u32 %v1833, 4294901760
    %v2601 = vsub.f32 %v1833, %v2600
    %v2602 = vand.u32 %v2601, 4294901760
    %2603 = vmatmul.mubr.f32.gmra.mrb[0].mxu0 %v2602
    %v2604 = vpop.f32.mrb[0].mxu0
    %v2605 = vadd.f32 %v2415, %v2604
    %v2606 = vpop.f32.mrb[0].mxu0
    %2607 = vmatprep.mubr.f32.mxu0 0.0
    %v2608 = vand.u32 %v1836, 4294901760
    %v2609 = vsub.f32 %v1836, %v2608
    %v2610 = vand.u32 %v2609, 4294901760
    %2611 = vmatmul.mubr.f32.gmra.mrb[0].mxu0 %v2610
    %v2612 = vpop.f32.mrb[0].mxu0
    %v2613 = vadd.f32 %v2422, %v2612
    %v2614 = vpop.f32.mrb[0].mxu0
    %2615 = vmatprep.mubr.f32.mxu0 0.0
    %v2616 = vand.u32 %v1839, 4294901760
    %v2617 = vsub.f32 %v1839, %v2616
    %v2618 = vand.u32 %v2617, 4294901760
    %2619 = vmatmul.mubr.f32.gmra.mrb[0].mxu0 %v2618
    %v2620 = vpop.f32.mrb[0].mxu0
    %v2621 = vadd.f32 %v2429, %v2620
    %v2622 = vpop.f32.mrb[0].mxu0
    %2623 = vmatprep.mubr.f32.mxu0 0.0
    %v2624 = vand.u32 %v1842, 4294901760
    %v2625 = vsub.f32 %v1842, %v2624
    %v2626 = vand.u32 %v2625, 4294901760
    %2627 = vmatmul.mubr.f32.gmra.mrb[0].mxu0 %v2626
    %v2628 = vpop.f32.mrb[0].mxu0
    %v2629 = vadd.f32 %v2436, %v2628
    %v2630 = vpop.f32.mrb[0].mxu0
    %2631 = vmatprep.mubr.f32.mxu0 0.0
    %v2632 = vand.u32 %v1845, 4294901760
    %v2633 = vsub.f32 %v1845, %v2632
    %v2634 = vand.u32 %v2633, 4294901760
    %2635 = vmatmul.mubr.f32.gmra.mrb[0].mxu0 %v2634
    %v2636 = vpop.f32.mrb[0].mxu0
    %v2637 = vadd.f32 %v2443, %v2636
    %v2638 = vpop.f32.mrb[0].mxu0
    %2639 = vmatprep.mubr.f32.mxu0 0.0
    %v2640 = vand.u32 %v1848, 4294901760
    %v2641 = vsub.f32 %v1848, %v2640
    %v2642 = vand.u32 %v2641, 4294901760
    %2643 = vmatmul.mubr.f32.gmra.mrb[0].mxu0 %v2642
    %v2644 = vpop.f32.mrb[0].mxu0
    %v2645 = vadd.f32 %v2450, %v2644
    %v2646 = vpop.f32.mrb[0].mxu0
    %2647 = vmatprep.mubr.f32.mxu0 0.0
    %v2648 = vand.u32 %v1851, 4294901760
    %v2649 = vsub.f32 %v1851, %v2648
    %v2650 = vand.u32 %v2649, 4294901760
    %2651 = vmatmul.mubr.f32.gmra.mrb[0].mxu0 %v2650
    %v2652 = vpop.f32.mrb[0].mxu0
    %v2653 = vadd.f32 %v2457, %v2652
    %v2654 = vpop.f32.mrb[0].mxu0
    %2655 = vmatprep.mubr.f32.mxu0 0.0
    %v2656 = vand.u32 %v1854, 4294901760
    %v2657 = vsub.f32 %v1854, %v2656
    %v2658 = vand.u32 %v2657, 4294901760
    %2659 = vmatmul.mubr.f32.gmra.mrb[0].mxu0 %v2658
    %v2660 = vpop.f32.mrb[0].mxu0
    %v2661 = vadd.f32 %v2464, %v2660
    %v2662 = vpop.f32.mrb[0].mxu0
    %2663 = vmatprep.mubr.f32.mxu0 0.0
    %v2664 = vand.u32 %v1857, 4294901760
    %v2665 = vsub.f32 %v1857, %v2664
    %v2666 = vand.u32 %v2665, 4294901760
    %2667 = vmatmul.mubr.f32.gmra.mrb[0].mxu0 %v2666
    %v2668 = vpop.f32.mrb[0].mxu0
    %v2669 = vadd.f32 %v2471, %v2668
    %v2670 = vpop.f32.mrb[0].mxu0
    %2671 = vmatprep.mubr.f32.mxu0 0.0
    %v2672 = vand.u32 %v1860, 4294901760
    %v2673 = vsub.f32 %v1860, %v2672
    %v2674 = vand.u32 %v2673, 4294901760
    %2675 = vmatmul.mubr.f32.gmra.mrb[0].mxu0 %v2674
    %v2676 = vpop.f32.mrb[0].mxu0
    %v2677 = vadd.f32 %v2478, %v2676
    %v2678 = vpop.f32.mrb[0].mxu0
    %2679 = vmatprep.mubr.f32.mxu0 0.0
    %v2680 = vand.u32 %v1863, 4294901760
    %v2681 = vsub.f32 %v1863, %v2680
    %v2682 = vand.u32 %v2681, 4294901760
    %2683 = vmatmul.mubr.f32.gmra.mrb[0].mxu0 %v2682
    %v2684 = vpop.f32.mrb[0].mxu0
    %v2685 = vadd.f32 %v2485, %v2684
    %v2686 = vpop.f32.mrb[0].mxu0
    %2687 = vmatprep.mubr.f32.mxu0 0.0
    %v2688 = vand.u32 %v1866, 4294901760
    %v2689 = vsub.f32 %v1866, %v2688
    %v2690 = vand.u32 %v2689, 4294901760
    %2691 = vmatmul.mubr.f32.gmra.mrb[0].mxu0 %v2690
    %v2692 = vpop.f32.mrb[0].mxu0
    %v2693 = vadd.f32 %v2492, %v2692
    %v2694 = vpop.f32.mrb[0].mxu0
    %2695 = vdwg.mxu0
    %2696 = vmatprep.subr.mxu0 0.0
    %v2697 = vand.u32 %v491, 4294901760
    %v2698 = vsub.f32 %v491, %v2697
    %v2699 = vand.u32 %v2698, 4294901760
    %2700 = vmatpush1.msra.mxu0 %v2699
    %2701 = vmatprep.subr.mxu0 0.0
    %v2702 = vand.u32 %v492, 4294901760
    %v2703 = vsub.f32 %v492, %v2702
    %v2704 = vand.u32 %v2703, 4294901760
    %2705 = vmatpush1.msra.mxu0 %v2704
    %2706 = vmatprep.subr.mxu0 0.0
    %v2707 = vand.u32 %v493, 4294901760
    %v2708 = vsub.f32 %v493, %v2707
    %v2709 = vand.u32 %v2708, 4294901760
    %2710 = vmatpush1.msra.mxu0 %v2709
    %2711 = vmatprep.subr.mxu0 0.0
    %v2712 = vand.u32 %v494, 4294901760
    %v2713 = vsub.f32 %v494, %v2712
    %v2714 = vand.u32 %v2713, 4294901760
    %2715 = vmatpush1.msra.mxu0 %v2714
    %2716 = vmatprep.subr.mxu0 0.0
    %v2717 = vand.u32 %v495, 4294901760
    %v2718 = vsub.f32 %v495, %v2717
    %v2719 = vand.u32 %v2718, 4294901760
    %2720 = vmatpush1.msra.mxu0 %v2719
    %2721 = vmatprep.subr.mxu0 0.0
    %v2722 = vand.u32 %v496, 4294901760
    %v2723 = vsub.f32 %v496, %v2722
    %v2724 = vand.u32 %v2723, 4294901760
    %2725 = vmatpush1.msra.mxu0 %v2724
    %2726 = vmatprep.subr.mxu0 0.0
    %v2727 = vand.u32 %v497, 4294901760
    %v2728 = vsub.f32 %v497, %v2727
    %v2729 = vand.u32 %v2728, 4294901760
    %2730 = vmatpush1.msra.mxu0 %v2729
    %2731 = vmatprep.subr.mxu0 0.0
    %v2732 = vand.u32 %v498, 4294901760
    %v2733 = vsub.f32 %v498, %v2732
    %v2734 = vand.u32 %v2733, 4294901760
    %2735 = vmatpush1.msra.mxu0 %v2734
    %2736 = vmatprep.subr.mxu0 0.0
    %2737 = vmatpush1.msra.mxu0 0.0
    %2738 = vmatprep.subr.mxu0 0.0
    %2739 = vmatpush1.msra.mxu0 0.0
    %2740 = vmatprep.subr.mxu0 0.0
    %2741 = vmatpush1.msra.mxu0 0.0
    %2742 = vmatprep.subr.mxu0 0.0
    %2743 = vmatpush1.msra.mxu0 0.0
    %2744 = vmatprep.subr.mxu0 0.0
    %2745 = vmatpush1.msra.mxu0 0.0
    %2746 = vmatprep.subr.mxu0 0.0
    %2747 = vmatpush1.msra.mxu0 0.0
    %2748 = vmatprep.subr.mxu0 0.0
    %2749 = vmatpush1.msra.mxu0 0.0
    %2750 = vmatprep.subr.mxu0 0.0
    %2751 = vmatpush1.msra.mxu0 0.0
    %2752 = vmatprep.subr.mxu0 0.0
    %2753 = vmatpush1.msra.mxu0 0.0
    %2754 = vmatprep.subr.mxu0 0.0
    %2755 = vmatpush1.msra.mxu0 0.0
    %2756 = vmatprep.subr.mxu0 0.0
    %2757 = vmatpush1.msra.mxu0 0.0
    %2758 = vmatprep.subr.mxu0 0.0
    %2759 = vmatpush1.msra.mxu0 0.0
    %2760 = vmatprep.subr.mxu0 0.0
    %2761 = vmatpush1.msra.mxu0 0.0
    %2762 = vmatprep.subr.mxu0 0.0
    %2763 = vmatpush1.msra.mxu0 0.0
    %2764 = vmatprep.subr.mxu0 0.0
    %2765 = vmatpush1.msra.mxu0 0.0
    %2766 = vmatprep.subr.mxu0 0.0
    %2767 = vmatpush1.msra.mxu0 0.0
    %2768 = vmatprep.subr.mxu0 0.0
    %2769 = vmatpush1.msra.mxu0 0.0
    %2770 = vmatprep.subr.mxu0 0.0
    %2771 = vmatpush1.msra.mxu0 0.0
    %2772 = vmatprep.subr.mxu0 0.0
    %2773 = vmatpush1.msra.mxu0 0.0
    %2774 = vmatprep.subr.mxu0 0.0
    %2775 = vmatpush1.msra.mxu0 0.0
    %2776 = vmatprep.subr.mxu0 0.0
    %2777 = vmatpush1.msra.mxu0 0.0
    %2778 = vmatprep.subr.mxu0 0.0
    %2779 = vmatpush1.msra.mxu0 0.0
    %2780 = vmatprep.subr.mxu0 0.0
    %2781 = vmatpush1.msra.mxu0 0.0
    %2782 = vmatprep.subr.mxu0 0.0
    %2783 = vmatpush1.msra.mxu0 0.0
    %2784 = vmatprep.mubr.f32.mxu0 0.0
    %v2785 = vand.u32 %v1821, 4294901760
    %2786 = vmatmul.mubr.f32.gmra.mrb[0].mxu0 %v2785
    %v2787 = vpop.f32.mrb[0].mxu0
    %v2788 = vadd.f32 %v2573, %v2787
    %v2789 = vpop.f32.mrb[0].mxu0
    %2790 = vmatprep.mubr.f32.mxu0 0.0
    %v2791 = vand.u32 %v1824, 4294901760
    %2792 = vmatmul.mubr.f32.gmra.mrb[0].mxu0 %v2791
    %v2793 = vpop.f32.mrb[0].mxu0
    %v2794 = vadd.f32 %v2581, %v2793
    %v2795 = vpop.f32.mrb[0].mxu0
    %2796 = vmatprep.mubr.f32.mxu0 0.0
    %v2797 = vand.u32 %v1827, 4294901760
    %2798 = vmatmul.mubr.f32.gmra.mrb[0].mxu0 %v2797
    %v2799 = vpop.f32.mrb[0].mxu0
    %v2800 = vadd.f32 %v2589, %v2799
    %v2801 = vpop.f32.mrb[0].mxu0
    %2802 = vmatprep.mubr.f32.mxu0 0.0
    %v2803 = vand.u32 %v1830, 4294901760
    %2804 = vmatmul.mubr.f32.gmra.mrb[0].mxu0 %v2803
    %v2805 = vpop.f32.mrb[0].mxu0
    %v2806 = vadd.f32 %v2597, %v2805
    %v2807 = vpop.f32.mrb[0].mxu0
    %2808 = vmatprep.mubr.f32.mxu0 0.0
    %v2809 = vand.u32 %v1833, 4294901760
    %2810 = vmatmul.mubr.f32.gmra.mrb[0].mxu0 %v2809
    %v2811 = vpop.f32.mrb[0].mxu0
    %v2812 = vadd.f32 %v2605, %v2811
    %v2813 = vpop.f32.mrb[0].mxu0
    %2814 = vmatprep.mubr.f32.mxu0 0.0
    %v2815 = vand.u32 %v1836, 4294901760
    %2816 = vmatmul.mubr.f32.gmra.mrb[0].mxu0 %v2815
    %v2817 = vpop.f32.mrb[0].mxu0
    %v2818 = vadd.f32 %v2613, %v2817
    %v2819 = vpop.f32.mrb[0].mxu0
    %2820 = vmatprep.mubr.f32.mxu0 0.0
    %v2821 = vand.u32 %v1839, 4294901760
    %2822 = vmatmul.mubr.f32.gmra.mrb[0].mxu0 %v2821
    %v2823 = vpop.f32.mrb[0].mxu0
    %v2824 = vadd.f32 %v2621, %v2823
    %v2825 = vpop.f32.mrb[0].mxu0
    %2826 = vmatprep.mubr.f32.mxu0 0.0
    %v2827 = vand.u32 %v1842, 4294901760
    %2828 = vmatmul.mubr.f32.gmra.mrb[0].mxu0 %v2827
    %v2829 = vpop.f32.mrb[0].mxu0
    %v2830 = vadd.f32 %v2629, %v2829
    %v2831 = vpop.f32.mrb[0].mxu0
    %2832 = vmatprep.mubr.f32.mxu0 0.0
    %v2833 = vand.u32 %v1845, 4294901760
    %2834 = vmatmul.mubr.f32.gmra.mrb[0].mxu0 %v2833
    %v2835 = vpop.f32.mrb[0].mxu0
    %v2836 = vadd.f32 %v2637, %v2835
    %v2837 = vpop.f32.mrb[0].mxu0
    %2838 = vmatprep.mubr.f32.mxu0 0.0
    %v2839 = vand.u32 %v1848, 4294901760
    %2840 = vmatmul.mubr.f32.gmra.mrb[0].mxu0 %v2839
    %v2841 = vpop.f32.mrb[0].mxu0
    %v2842 = vadd.f32 %v2645, %v2841
    %v2843 = vpop.f32.mrb[0].mxu0
    %2844 = vmatprep.mubr.f32.mxu0 0.0
    %v2845 = vand.u32 %v1851, 4294901760
    %2846 = vmatmul.mubr.f32.gmra.mrb[0].mxu0 %v2845
    %v2847 = vpop.f32.mrb[0].mxu0
    %v2848 = vadd.f32 %v2653, %v2847
    %v2849 = vpop.f32.mrb[0].mxu0
    %2850 = vmatprep.mubr.f32.mxu0 0.0
    %v2851 = vand.u32 %v1854, 4294901760
    %2852 = vmatmul.mubr.f32.gmra.mrb[0].mxu0 %v2851
    %v2853 = vpop.f32.mrb[0].mxu0
    %v2854 = vadd.f32 %v2661, %v2853
    %v2855 = vpop.f32.mrb[0].mxu0
    %2856 = vmatprep.mubr.f32.mxu0 0.0
    %v2857 = vand.u32 %v1857, 4294901760
    %2858 = vmatmul.mubr.f32.gmra.mrb[0].mxu0 %v2857
    %v2859 = vpop.f32.mrb[0].mxu0
    %v2860 = vadd.f32 %v2669, %v2859
    %v2861 = vpop.f32.mrb[0].mxu0
    %2862 = vmatprep.mubr.f32.mxu0 0.0
    %v2863 = vand.u32 %v1860, 4294901760
    %2864 = vmatmul.mubr.f32.gmra.mrb[0].mxu0 %v2863
    %v2865 = vpop.f32.mrb[0].mxu0
    %v2866 = vadd.f32 %v2677, %v2865
    %v2867 = vpop.f32.mrb[0].mxu0
    %2868 = vmatprep.mubr.f32.mxu0 0.0
    %v2869 = vand.u32 %v1863, 4294901760
    %2870 = vmatmul.mubr.f32.gmra.mrb[0].mxu0 %v2869
    %v2871 = vpop.f32.mrb[0].mxu0
    %v2872 = vadd.f32 %v2685, %v2871
    %v2873 = vpop.f32.mrb[0].mxu0
    %2874 = vmatprep.mubr.f32.mxu0 0.0
    %v2875 = vand.u32 %v1866, 4294901760
    %2876 = vmatmul.mubr.f32.gmra.mrb[0].mxu0 %v2875
    %v2877 = vpop.f32.mrb[0].mxu0
    %v2878 = vadd.f32 %v2693, %v2877
    %v2879 = vpop.f32.mrb[0].mxu0
    %2880 = vdwg.mxu0
    %2881 = vmatprep.subr.mxu0 0.0
    %v2882 = vand.u32 %v491, 4294901760
    %2883 = vmatpush1.msra.mxu0 %v2882
    %2884 = vmatprep.subr.mxu0 0.0
    %v2885 = vand.u32 %v492, 4294901760
    %2886 = vmatpush1.msra.mxu0 %v2885
    %2887 = vmatprep.subr.mxu0 0.0
    %v2888 = vand.u32 %v493, 4294901760
    %2889 = vmatpush1.msra.mxu0 %v2888
    %2890 = vmatprep.subr.mxu0 0.0
    %v2891 = vand.u32 %v494, 4294901760
    %2892 = vmatpush1.msra.mxu0 %v2891
    %2893 = vmatprep.subr.mxu0 0.0
    %v2894 = vand.u32 %v495, 4294901760
    %2895 = vmatpush1.msra.mxu0 %v2894
    %2896 = vmatprep.subr.mxu0 0.0
    %v2897 = vand.u32 %v496, 4294901760
    %2898 = vmatpush1.msra.mxu0 %v2897
    %2899 = vmatprep.subr.mxu0 0.0
    %v2900 = vand.u32 %v497, 4294901760
    %2901 = vmatpush1.msra.mxu0 %v2900
    %2902 = vmatprep.subr.mxu0 0.0
    %v2903 = vand.u32 %v498, 4294901760
    %2904 = vmatpush1.msra.mxu0 %v2903
    %2905 = vmatprep.subr.mxu0 0.0
    %2906 = vmatpush1.msra.mxu0 0.0
    %2907 = vmatprep.subr.mxu0 0.0
    %2908 = vmatpush1.msra.mxu0 0.0
    %2909 = vmatprep.subr.mxu0 0.0
    %2910 = vmatpush1.msra.mxu0 0.0
    %2911 = vmatprep.subr.mxu0 0.0
    %2912 = vmatpush1.msra.mxu0 0.0
    %2913 = vmatprep.subr.mxu0 0.0
    %2914 = vmatpush1.msra.mxu0 0.0
    %2915 = vmatprep.subr.mxu0 0.0
    %2916 = vmatpush1.msra.mxu0 0.0
    %2917 = vmatprep.subr.mxu0 0.0
    %2918 = vmatpush1.msra.mxu0 0.0
    %2919 = vmatprep.subr.mxu0 0.0
    %2920 = vmatpush1.msra.mxu0 0.0
    %2921 = vmatprep.subr.mxu0 0.0
    %2922 = vmatpush1.msra.mxu0 0.0
    %2923 = vmatprep.subr.mxu0 0.0
    %2924 = vmatpush1.msra.mxu0 0.0
    %2925 = vmatprep.subr.mxu0 0.0
    %2926 = vmatpush1.msra.mxu0 0.0
    %2927 = vmatprep.subr.mxu0 0.0
    %2928 = vmatpush1.msra.mxu0 0.0
    %2929 = vmatprep.subr.mxu0 0.0
    %2930 = vmatpush1.msra.mxu0 0.0
    %2931 = vmatprep.subr.mxu0 0.0
    %2932 = vmatpush1.msra.mxu0 0.0
    %2933 = vmatprep.subr.mxu0 0.0
    %2934 = vmatpush1.msra.mxu0 0.0
    %2935 = vmatprep.subr.mxu0 0.0
    %2936 = vmatpush1.msra.mxu0 0.0
    %2937 = vmatprep.subr.mxu0 0.0
    %2938 = vmatpush1.msra.mxu0 0.0
    %2939 = vmatprep.subr.mxu0 0.0
    %2940 = vmatpush1.msra.mxu0 0.0
    %2941 = vmatprep.subr.mxu0 0.0
    %2942 = vmatpush1.msra.mxu0 0.0
    %2943 = vmatprep.subr.mxu0 0.0
    %2944 = vmatpush1.msra.mxu0 0.0
    %2945 = vmatprep.subr.mxu0 0.0
    %2946 = vmatpush1.msra.mxu0 0.0
    %2947 = vmatprep.subr.mxu0 0.0
    %2948 = vmatpush1.msra.mxu0 0.0
    %2949 = vmatprep.subr.mxu0 0.0
    %2950 = vmatpush1.msra.mxu0 0.0
    %2951 = vmatprep.subr.mxu0 0.0
    %2952 = vmatpush1.msra.mxu0 0.0
    %2953 = vmatprep.mubr.f32.mxu0 0.0
    %v2954 = vand.u32 %v1821, 4294901760
    %2955 = vmatmul.mubr.f32.gmra.mrb[0].mxu0 %v2954
    %v2956 = vpop.f32.mrb[0].mxu0
    %v2957 = vadd.f32 %v2788, %v2956
    %v2958 = vpop.f32.mrb[0].mxu0
    %2959 = vmatprep.mubr.f32.mxu0 0.0
    %v2960 = vand.u32 %v1824, 4294901760
    %2961 = vmatmul.mubr.f32.gmra.mrb[0].mxu0 %v2960
    %v2962 = vpop.f32.mrb[0].mxu0
    %v2963 = vadd.f32 %v2794, %v2962
    %v2964 = vpop.f32.mrb[0].mxu0
    %2965 = vmatprep.mubr.f32.mxu0 0.0
    %v2966 = vand.u32 %v1827, 4294901760
    %2967 = vmatmul.mubr.f32.gmra.mrb[0].mxu0 %v2966
    %v2968 = vpop.f32.mrb[0].mxu0
    %v2969 = vadd.f32 %v2800, %v2968
    %v2970 = vpop.f32.mrb[0].mxu0
    %2971 = vmatprep.mubr.f32.mxu0 0.0
    %v2972 = vand.u32 %v1830, 4294901760
    %2973 = vmatmul.mubr.f32.gmra.mrb[0].mxu0 %v2972
    %v2974 = vpop.f32.mrb[0].mxu0
    %v2975 = vadd.f32 %v2806, %v2974
    %v2976 = vpop.f32.mrb[0].mxu0
    %2977 = vmatprep.mubr.f32.mxu0 0.0
    %v2978 = vand.u32 %v1833, 4294901760
    %2979 = vmatmul.mubr.f32.gmra.mrb[0].mxu0 %v2978
    %v2980 = vpop.f32.mrb[0].mxu0
    %v2981 = vadd.f32 %v2812, %v2980
    %v2982 = vpop.f32.mrb[0].mxu0
    %2983 = vmatprep.mubr.f32.mxu0 0.0
    %v2984 = vand.u32 %v1836, 4294901760
    %2985 = vmatmul.mubr.f32.gmra.mrb[0].mxu0 %v2984
    %v2986 = vpop.f32.mrb[0].mxu0
    %v2987 = vadd.f32 %v2818, %v2986
    %v2988 = vpop.f32.mrb[0].mxu0
    %2989 = vmatprep.mubr.f32.mxu0 0.0
    %v2990 = vand.u32 %v1839, 4294901760
    %2991 = vmatmul.mubr.f32.gmra.mrb[0].mxu0 %v2990
    %v2992 = vpop.f32.mrb[0].mxu0
    %v2993 = vadd.f32 %v2824, %v2992
    %v2994 = vpop.f32.mrb[0].mxu0
    %2995 = vmatprep.mubr.f32.mxu0 0.0
    %v2996 = vand.u32 %v1842, 4294901760
    %2997 = vmatmul.mubr.f32.gmra.mrb[0].mxu0 %v2996
    %v2998 = vpop.f32.mrb[0].mxu0
    %v2999 = vadd.f32 %v2830, %v2998
    %v3000 = vpop.f32.mrb[0].mxu0
    %3001 = vmatprep.mubr.f32.mxu0 0.0
    %v3002 = vand.u32 %v1845, 4294901760
    %3003 = vmatmul.mubr.f32.gmra.mrb[0].mxu0 %v3002
    %v3004 = vpop.f32.mrb[0].mxu0
    %v3005 = vadd.f32 %v2836, %v3004
    %v3006 = vpop.f32.mrb[0].mxu0
    %3007 = vmatprep.mubr.f32.mxu0 0.0
    %v3008 = vand.u32 %v1848, 4294901760
    %3009 = vmatmul.mubr.f32.gmra.mrb[0].mxu0 %v3008
    %v3010 = vpop.f32.mrb[0].mxu0
    %v3011 = vadd.f32 %v2842, %v3010
    %v3012 = vpop.f32.mrb[0].mxu0
    %3013 = vmatprep.mubr.f32.mxu0 0.0
    %v3014 = vand.u32 %v1851, 4294901760
    %3015 = vmatmul.mubr.f32.gmra.mrb[0].mxu0 %v3014
    %v3016 = vpop.f32.mrb[0].mxu0
    %v3017 = vadd.f32 %v2848, %v3016
    %v3018 = vpop.f32.mrb[0].mxu0
    %3019 = vmatprep.mubr.f32.mxu0 0.0
    %v3020 = vand.u32 %v1854, 4294901760
    %3021 = vmatmul.mubr.f32.gmra.mrb[0].mxu0 %v3020
    %v3022 = vpop.f32.mrb[0].mxu0
    %v3023 = vadd.f32 %v2854, %v3022
    %v3024 = vpop.f32.mrb[0].mxu0
    %3025 = vmatprep.mubr.f32.mxu0 0.0
    %v3026 = vand.u32 %v1857, 4294901760
    %3027 = vmatmul.mubr.f32.gmra.mrb[0].mxu0 %v3026
    %v3028 = vpop.f32.mrb[0].mxu0
    %v3029 = vadd.f32 %v2860, %v3028
    %v3030 = vpop.f32.mrb[0].mxu0
    %3031 = vmatprep.mubr.f32.mxu0 0.0
    %v3032 = vand.u32 %v1860, 4294901760
    %3033 = vmatmul.mubr.f32.gmra.mrb[0].mxu0 %v3032
    %v3034 = vpop.f32.mrb[0].mxu0
    %v3035 = vadd.f32 %v2866, %v3034
    %v3036 = vpop.f32.mrb[0].mxu0
    %3037 = vmatprep.mubr.f32.mxu0 0.0
    %v3038 = vand.u32 %v1863, 4294901760
    %3039 = vmatmul.mubr.f32.gmra.mrb[0].mxu0 %v3038
    %v3040 = vpop.f32.mrb[0].mxu0
    %v3041 = vadd.f32 %v2872, %v3040
    %v3042 = vpop.f32.mrb[0].mxu0
    %3043 = vmatprep.mubr.f32.mxu0 0.0
    %v3044 = vand.u32 %v1866, 4294901760
    %3045 = vmatmul.mubr.f32.gmra.mrb[0].mxu0 %v3044
    %v3046 = vpop.f32.mrb[0].mxu0
    %v3047 = vadd.f32 %v2878, %v3046
    %v3048 = vpop.f32.mrb[0].mxu0
    %3049 = vdwg.mxu0
    %v3050 = vsel %vm475, 1, 0
    %v3051 = vsel %vm476, 1, 0
    %v3052 = vsel %vm477, 1, 0
    %v3053 = vsel %vm478, 1, 0
    %v3054 = vsel %vm479, 1, 0
    %v3055 = vsel %vm480, 1, 0
    %v3056 = vsel %vm481, 1, 0
    %v3057 = vsel %vm482, 1, 0
    %v3058 = vsel %vm483, 1, 0
    %v3059 = vsel %vm484, 1, 0
    %v3060 = vsel %vm485, 1, 0
    %v3061 = vsel %vm486, 1, 0
    %v3062 = vsel %vm487, 1, 0
    %v3063 = vsel %vm488, 1, 0
    %v3064 = vsel %vm489, 1, 0
    %v3065 = vsel %vm490, 1, 0
    %vm3066 = vcmp.eq.s32.totalorder %v3050, 1
    %vm3067 = vcmp.eq.s32.totalorder %v3051, 1
    %vm3068 = vcmp.eq.s32.totalorder %v3052, 1
    %vm3069 = vcmp.eq.s32.totalorder %v3053, 1
    %vm3070 = vcmp.eq.s32.totalorder %v3054, 1
    %vm3071 = vcmp.eq.s32.totalorder %v3055, 1
    %vm3072 = vcmp.eq.s32.totalorder %v3056, 1
    %vm3073 = vcmp.eq.s32.totalorder %v3057, 1
    %vm3074 = vcmp.eq.s32.totalorder %v3058, 1
    %vm3075 = vcmp.eq.s32.totalorder %v3059, 1
    %vm3076 = vcmp.eq.s32.totalorder %v3060, 1
    %vm3077 = vcmp.eq.s32.totalorder %v3061, 1
    %vm3078 = vcmp.eq.s32.totalorder %v3062, 1
    %vm3079 = vcmp.eq.s32.totalorder %v3063, 1
    %vm3080 = vcmp.eq.s32.totalorder %v3064, 1
    %vm3081 = vcmp.eq.s32.totalorder %v3065, 1
    %v3082 = vsel %vm3066, %v43, 0.0
    %v3083 = vsel %vm3067, %v44, 0.0
    %v3084 = vsel %vm3068, %v45, 0.0
    %v3085 = vsel %vm3069, %v46, 0.0
    %v3086 = vsel %vm3070, %v47, 0.0
    %v3087 = vsel %vm3071, %v48, 0.0
    %v3088 = vsel %vm3072, %v49, 0.0
    %v3089 = vsel %vm3073, %v50, 0.0
    %v3090 = vsel %vm3074, %v51, 0.0
    %v3091 = vsel %vm3075, %v52, 0.0
    %v3092 = vsel %vm3076, %v53, 0.0
    %v3093 = vsel %vm3077, %v54, 0.0
    %v3094 = vsel %vm3078, %v55, 0.0
    %v3095 = vsel %vm3079, %v56, 0.0
    %v3096 = vsel %vm3080, %v57, 0.0
    %v3097 = vsel %vm3081, %v42, 0.0
    %s3098 = scalar_lea.vmem [#allocation4], 128
    %v3099 = vld [vmem:[%s3098] sm:$0xff]
    %v3100 = vld [vmem:[%s3098 + $0x8] sm:$0xff]
    %v3101 = vld [vmem:[%s3098 + $0x10] sm:$0xff]
    %v3102 = vld [vmem:[%s3098 + $0x18] sm:$0xff]
    %v3103 = vld [vmem:[%s3098 + $0x20] sm:$0xff]
    %v3104 = vld [vmem:[%s3098 + $0x28] sm:$0xff]
    %v3105 = vld [vmem:[%s3098 + $0x30] sm:$0xff]
    %v3106 = vld [vmem:[%s3098 + $0x38] sm:$0xff]
    %v3108 = vsel %vm589, %v3082, 0
    %v3111 = vsel %vm589, %v3083, 0
    %v3114 = vsel %vm589, %v3084, 0
    %v3117 = vsel %vm589, %v3085, 0
    %v3120 = vsel %vm589, %v3086, 0
    %v3123 = vsel %vm589, %v3087, 0
    %v3126 = vsel %vm589, %v3088, 0
    %v3129 = vsel %vm589, %v3089, 0
    %v3132 = vsel %vm589, %v3090, 0
    %v3135 = vsel %vm589, %v3091, 0
    %v3138 = vsel %vm589, %v3092, 0
    %v3141 = vsel %vm589, %v3093, 0
    %v3144 = vsel %vm589, %v3094, 0
    %v3147 = vsel %vm589, %v3095, 0
    %v3150 = vsel %vm589, %v3096, 0
    %v3153 = vsel %vm589, %v3097, 0
    %3155 = vmatprep.subr.mxu0 0.0
    %v3156 = vand.u32 %v3099, 4294901760
    %3157 = vmatpush1.msra.mxu0 %v3156
    %3158 = vmatprep.subr.mxu0 0.0
    %v3159 = vand.u32 %v3100, 4294901760
    %3160 = vmatpush1.msra.mxu0 %v3159
    %3161 = vmatprep.subr.mxu0 0.0
    %v3162 = vand.u32 %v3101, 4294901760
    %3163 = vmatpush1.msra.mxu0 %v3162
    %3164 = vmatprep.subr.mxu0 0.0
    %v3165 = vand.u32 %v3102, 4294901760
    %3166 = vmatpush1.msra.mxu0 %v3165
    %3167 = vmatprep.subr.mxu0 0.0
    %v3168 = vand.u32 %v3103, 4294901760
    %3169 = vmatpush1.msra.mxu0 %v3168
    %3170 = vmatprep.subr.mxu0 0.0
    %v3171 = vand.u32 %v3104, 4294901760
    %3172 = vmatpush1.msra.mxu0 %v3171
    %3173 = vmatprep.subr.mxu0 0.0
    %v3174 = vand.u32 %v3105, 4294901760
    %3175 = vmatpush1.msra.mxu0 %v3174
    %3176 = vmatprep.subr.mxu0 0.0
    %v3177 = vand.u32 %v3106, 4294901760
    %3178 = vmatpush1.msra.mxu0 %v3177
    %3179 = vmatprep.subr.mxu0 0.0
    %3180 = vmatpush1.msra.mxu0 0.0
    %3181 = vmatprep.subr.mxu0 0.0
    %3182 = vmatpush1.msra.mxu0 0.0
    %3183 = vmatprep.subr.mxu0 0.0
    %3184 = vmatpush1.msra.mxu0 0.0
    %3185 = vmatprep.subr.mxu0 0.0
    %3186 = vmatpush1.msra.mxu0 0.0
    %3187 = vmatprep.subr.mxu0 0.0
    %3188 = vmatpush1.msra.mxu0 0.0
    %3189 = vmatprep.subr.mxu0 0.0
    %3190 = vmatpush1.msra.mxu0 0.0
    %3191 = vmatprep.subr.mxu0 0.0
    %3192 = vmatpush1.msra.mxu0 0.0
    %3193 = vmatprep.subr.mxu0 0.0
    %3194 = vmatpush1.msra.mxu0 0.0
    %3195 = vmatprep.subr.mxu0 0.0
    %3196 = vmatpush1.msra.mxu0 0.0
    %3197 = vmatprep.subr.mxu0 0.0
    %3198 = vmatpush1.msra.mxu0 0.0
    %3199 = vmatprep.subr.mxu0 0.0
    %3200 = vmatpush1.msra.mxu0 0.0
    %3201 = vmatprep.subr.mxu0 0.0
    %3202 = vmatpush1.msra.mxu0 0.0
    %3203 = vmatprep.subr.mxu0 0.0
    %3204 = vmatpush1.msra.mxu0 0.0
    %3205 = vmatprep.subr.mxu0 0.0
    %3206 = vmatpush1.msra.mxu0 0.0
    %3207 = vmatprep.subr.mxu0 0.0
    %3208 = vmatpush1.msra.mxu0 0.0
    %3209 = vmatprep.subr.mxu0 0.0
    %3210 = vmatpush1.msra.mxu0 0.0
    %3211 = vmatprep.subr.mxu0 0.0
    %3212 = vmatpush1.msra.mxu0 0.0
    %3213 = vmatprep.subr.mxu0 0.0
    %3214 = vmatpush1.msra.mxu0 0.0
    %3215 = vmatprep.subr.mxu0 0.0
    %3216 = vmatpush1.msra.mxu0 0.0
    %3217 = vmatprep.subr.mxu0 0.0
    %3218 = vmatpush1.msra.mxu0 0.0
    %3219 = vmatprep.subr.mxu0 0.0
    %3220 = vmatpush1.msra.mxu0 0.0
    %3221 = vmatprep.subr.mxu0 0.0
    %3222 = vmatpush1.msra.mxu0 0.0
    %3223 = vmatprep.subr.mxu0 0.0
    %3224 = vmatpush1.msra.mxu0 0.0
    %3225 = vmatprep.subr.mxu0 0.0
    %3226 = vmatpush1.msra.mxu0 0.0
    %3227 = vmatprep.mubr.f32.mxu0 0.0
    %v3228 = vand.u32 %v3108, 4294901760
    %v3229 = vsub.f32 %v3108, %v3228
    %v3230 = vand.u32 %v3229, 4294901760
    %v3231 = vsub.f32 %v3229, %v3230
    %v3232 = vand.u32 %v3231, 4294901760
    %3233 = vmatmul.mubr.f32.gmra.mrb[0].mxu0 %v3232
    %v3234 = vpop.f32.mrb[0].mxu0
    %v3235 = vadd.f32 0.0, %v3234
    %v3236 = vpop.f32.mrb[0].mxu0
    %3237 = vmatprep.mubr.f32.mxu0 0.0
    %v3238 = vand.u32 %v3111, 4294901760
    %v3239 = vsub.f32 %v3111, %v3238
    %v3240 = vand.u32 %v3239, 4294901760
    %v3241 = vsub.f32 %v3239, %v3240
    %v3242 = vand.u32 %v3241, 4294901760
    %3243 = vmatmul.mubr.f32.gmra.mrb[0].mxu0 %v3242
    %v3244 = vpop.f32.mrb[0].mxu0
    %v3245 = vadd.f32 0.0, %v3244
    %v3246 = vpop.f32.mrb[0].mxu0
    %3247 = vmatprep.mubr.f32.mxu0 0.0
    %v3248 = vand.u32 %v3114, 4294901760
    %v3249 = vsub.f32 %v3114, %v3248
    %v3250 = vand.u32 %v3249, 4294901760
    %v3251 = vsub.f32 %v3249, %v3250
    %v3252 = vand.u32 %v3251, 4294901760
    %3253 = vmatmul.mubr.f32.gmra.mrb[0].mxu0 %v3252
    %v3254 = vpop.f32.mrb[0].mxu0
    %v3255 = vadd.f32 0.0, %v3254
    %v3256 = vpop.f32.mrb[0].mxu0
    %3257 = vmatprep.mubr.f32.mxu0 0.0
    %v3258 = vand.u32 %v3117, 4294901760
    %v3259 = vsub.f32 %v3117, %v3258
    %v3260 = vand.u32 %v3259, 4294901760
    %v3261 = vsub.f32 %v3259, %v3260
    %v3262 = vand.u32 %v3261, 4294901760
    %3263 = vmatmul.mubr.f32.gmra.mrb[0].mxu0 %v3262
    %v3264 = vpop.f32.mrb[0].mxu0
    %v3265 = vadd.f32 0.0, %v3264
    %v3266 = vpop.f32.mrb[0].mxu0
    %3267 = vmatprep.mubr.f32.mxu0 0.0
    %v3268 = vand.u32 %v3120, 4294901760
    %v3269 = vsub.f32 %v3120, %v3268
    %v3270 = vand.u32 %v3269, 4294901760
    %v3271 = vsub.f32 %v3269, %v3270
    %v3272 = vand.u32 %v3271, 4294901760
    %3273 = vmatmul.mubr.f32.gmra.mrb[0].mxu0 %v3272
    %v3274 = vpop.f32.mrb[0].mxu0
    %v3275 = vadd.f32 0.0, %v3274
    %v3276 = vpop.f32.mrb[0].mxu0
    %3277 = vmatprep.mubr.f32.mxu0 0.0
    %v3278 = vand.u32 %v3123, 4294901760
    %v3279 = vsub.f32 %v3123, %v3278
    %v3280 = vand.u32 %v3279, 4294901760
    %v3281 = vsub.f32 %v3279, %v3280
    %v3282 = vand.u32 %v3281, 4294901760
    %3283 = vmatmul.mubr.f32.gmra.mrb[0].mxu0 %v3282
    %v3284 = vpop.f32.mrb[0].mxu0
    %v3285 = vadd.f32 0.0, %v3284
    %v3286 = vpop.f32.mrb[0].mxu0
    %3287 = vmatprep.mubr.f32.mxu0 0.0
    %v3288 = vand.u32 %v3126, 4294901760
    %v3289 = vsub.f32 %v3126, %v3288
    %v3290 = vand.u32 %v3289, 4294901760
    %v3291 = vsub.f32 %v3289, %v3290
    %v3292 = vand.u32 %v3291, 4294901760
    %3293 = vmatmul.mubr.f32.gmra.mrb[0].mxu0 %v3292
    %v3294 = vpop.f32.mrb[0].mxu0
    %v3295 = vadd.f32 0.0, %v3294
    %v3296 = vpop.f32.mrb[0].mxu0
    %3297 = vmatprep.mubr.f32.mxu0 0.0
    %v3298 = vand.u32 %v3129, 4294901760
    %v3299 = vsub.f32 %v3129, %v3298
    %v3300 = vand.u32 %v3299, 4294901760
    %v3301 = vsub.f32 %v3299, %v3300
    %v3302 = vand.u32 %v3301, 4294901760
    %3303 = vmatmul.mubr.f32.gmra.mrb[0].mxu0 %v3302
    %v3304 = vpop.f32.mrb[0].mxu0
    %v3305 = vadd.f32 0.0, %v3304
    %v3306 = vpop.f32.mrb[0].mxu0
    %3307 = vmatprep.mubr.f32.mxu0 0.0
    %v3308 = vand.u32 %v3132, 4294901760
    %v3309 = vsub.f32 %v3132, %v3308
    %v3310 = vand.u32 %v3309, 4294901760
    %v3311 = vsub.f32 %v3309, %v3310
    %v3312 = vand.u32 %v3311, 4294901760
    %3313 = vmatmul.mubr.f32.gmra.mrb[0].mxu0 %v3312
    %v3314 = vpop.f32.mrb[0].mxu0
    %v3315 = vadd.f32 0.0, %v3314
    %v3316 = vpop.f32.mrb[0].mxu0
    %3317 = vmatprep.mubr.f32.mxu0 0.0
    %v3318 = vand.u32 %v3135, 4294901760
    %v3319 = vsub.f32 %v3135, %v3318
    %v3320 = vand.u32 %v3319, 4294901760
    %v3321 = vsub.f32 %v3319, %v3320
    %v3322 = vand.u32 %v3321, 4294901760
    %3323 = vmatmul.mubr.f32.gmra.mrb[0].mxu0 %v3322
    %v3324 = vpop.f32.mrb[0].mxu0
    %v3325 = vadd.f32 0.0, %v3324
    %v3326 = vpop.f32.mrb[0].mxu0
    %3327 = vmatprep.mubr.f32.mxu0 0.0
    %v3328 = vand.u32 %v3138, 4294901760
    %v3329 = vsub.f32 %v3138, %v3328
    %v3330 = vand.u32 %v3329, 4294901760
    %v3331 = vsub.f32 %v3329, %v3330
    %v3332 = vand.u32 %v3331, 4294901760
    %3333 = vmatmul.mubr.f32.gmra.mrb[0].mxu0 %v3332
    %v3334 = vpop.f32.mrb[0].mxu0
    %v3335 = vadd.f32 0.0, %v3334
    %v3336 = vpop.f32.mrb[0].mxu0
    %3337 = vmatprep.mubr.f32.mxu0 0.0
    %v3338 = vand.u32 %v3141, 4294901760
    %v3339 = vsub.f32 %v3141, %v3338
    %v3340 = vand.u32 %v3339, 4294901760
    %v3341 = vsub.f32 %v3339, %v3340
    %v3342 = vand.u32 %v3341, 4294901760
    %3343 = vmatmul.mubr.f32.gmra.mrb[0].mxu0 %v3342
    %v3344 = vpop.f32.mrb[0].mxu0
    %v3345 = vadd.f32 0.0, %v3344
    %v3346 = vpop.f32.mrb[0].mxu0
    %3347 = vmatprep.mubr.f32.mxu0 0.0
    %v3348 = vand.u32 %v3144, 4294901760
    %v3349 = vsub.f32 %v3144, %v3348
    %v3350 = vand.u32 %v3349, 4294901760
    %v3351 = vsub.f32 %v3349, %v3350
    %v3352 = vand.u32 %v3351, 4294901760
    %3353 = vmatmul.mubr.f32.gmra.mrb[0].mxu0 %v3352
    %v3354 = vpop.f32.mrb[0].mxu0
    %v3355 = vadd.f32 0.0, %v3354
    %v3356 = vpop.f32.mrb[0].mxu0
    %3357 = vmatprep.mubr.f32.mxu0 0.0
    %v3358 = vand.u32 %v3147, 4294901760
    %v3359 = vsub.f32 %v3147, %v3358
    %v3360 = vand.u32 %v3359, 4294901760
    %v3361 = vsub.f32 %v3359, %v3360
    %v3362 = vand.u32 %v3361, 4294901760
    %3363 = vmatmul.mubr.f32.gmra.mrb[0].mxu0 %v3362
    %v3364 = vpop.f32.mrb[0].mxu0
    %v3365 = vadd.f32 0.0, %v3364
    %v3366 = vpop.f32.mrb[0].mxu0
    %3367 = vmatprep.mubr.f32.mxu0 0.0
    %v3368 = vand.u32 %v3150, 4294901760
    %v3369 = vsub.f32 %v3150, %v3368
    %v3370 = vand.u32 %v3369, 4294901760
    %v3371 = vsub.f32 %v3369, %v3370
    %v3372 = vand.u32 %v3371, 4294901760
    %3373 = vmatmul.mubr.f32.gmra.mrb[0].mxu0 %v3372
    %v3374 = vpop.f32.mrb[0].mxu0
    %v3375 = vadd.f32 0.0, %v3374
    %v3376 = vpop.f32.mrb[0].mxu0
    %3377 = vmatprep.mubr.f32.mxu0 0.0
    %v3378 = vand.u32 %v3153, 4294901760
    %v3379 = vsub.f32 %v3153, %v3378
    %v3380 = vand.u32 %v3379, 4294901760
    %v3381 = vsub.f32 %v3379, %v3380
    %v3382 = vand.u32 %v3381, 4294901760
    %3383 = vmatmul.mubr.f32.gmra.mrb[0].mxu0 %v3382
    %v3384 = vpop.f32.mrb[0].mxu0
    %v3385 = vadd.f32 0.0, %v3384
    %v3386 = vpop.f32.mrb[0].mxu0
    %3387 = vdwg.mxu0
    %3388 = vmatprep.subr.mxu0 0.0
    %v3389 = vand.u32 %v3099, 4294901760
    %v3390 = vsub.f32 %v3099, %v3389
    %v3391 = vand.u32 %v3390, 4294901760
    %v3392 = vsub.f32 %v3390, %v3391
    %v3393 = vand.u32 %v3392, 4294901760
    %3394 = vmatpush1.msra.mxu0 %v3393
    %3395 = vmatprep.subr.mxu0 0.0
    %v3396 = vand.u32 %v3100, 4294901760
    %v3397 = vsub.f32 %v3100, %v3396
    %v3398 = vand.u32 %v3397, 4294901760
    %v3399 = vsub.f32 %v3397, %v3398
    %v3400 = vand.u32 %v3399, 4294901760
    %3401 = vmatpush1.msra.mxu0 %v3400
    %3402 = vmatprep.subr.mxu0 0.0
    %v3403 = vand.u32 %v3101, 4294901760
    %v3404 = vsub.f32 %v3101, %v3403
    %v3405 = vand.u32 %v3404, 4294901760
    %v3406 = vsub.f32 %v3404, %v3405
    %v3407 = vand.u32 %v3406, 4294901760
    %3408 = vmatpush1.msra.mxu0 %v3407
    %3409 = vmatprep.subr.mxu0 0.0
    %v3410 = vand.u32 %v3102, 4294901760
    %v3411 = vsub.f32 %v3102, %v3410
    %v3412 = vand.u32 %v3411, 4294901760
    %v3413 = vsub.f32 %v3411, %v3412
    %v3414 = vand.u32 %v3413, 4294901760
    %3415 = vmatpush1.msra.mxu0 %v3414
    %3416 = vmatprep.subr.mxu0 0.0
    %v3417 = vand.u32 %v3103, 4294901760
    %v3418 = vsub.f32 %v3103, %v3417
    %v3419 = vand.u32 %v3418, 4294901760
    %v3420 = vsub.f32 %v3418, %v3419
    %v3421 = vand.u32 %v3420, 4294901760
    %3422 = vmatpush1.msra.mxu0 %v3421
    %3423 = vmatprep.subr.mxu0 0.0
    %v3424 = vand.u32 %v3104, 4294901760
    %v3425 = vsub.f32 %v3104, %v3424
    %v3426 = vand.u32 %v3425, 4294901760
    %v3427 = vsub.f32 %v3425, %v3426
    %v3428 = vand.u32 %v3427, 4294901760
    %3429 = vmatpush1.msra.mxu0 %v3428
    %3430 = vmatprep.subr.mxu0 0.0
    %v3431 = vand.u32 %v3105, 4294901760
    %v3432 = vsub.f32 %v3105, %v3431
    %v3433 = vand.u32 %v3432, 4294901760
    %v3434 = vsub.f32 %v3432, %v3433
    %v3435 = vand.u32 %v3434, 4294901760
    %3436 = vmatpush1.msra.mxu0 %v3435
    %3437 = vmatprep.subr.mxu0 0.0
    %v3438 = vand.u32 %v3106, 4294901760
    %v3439 = vsub.f32 %v3106, %v3438
    %v3440 = vand.u32 %v3439, 4294901760
    %v3441 = vsub.f32 %v3439, %v3440
    %v3442 = vand.u32 %v3441, 4294901760
    %3443 = vmatpush1.msra.mxu0 %v3442
    %3444 = vmatprep.subr.mxu0 0.0
    %3445 = vmatpush1.msra.mxu0 0.0
    %3446 = vmatprep.subr.mxu0 0.0
    %3447 = vmatpush1.msra.mxu0 0.0
    %3448 = vmatprep.subr.mxu0 0.0
    %3449 = vmatpush1.msra.mxu0 0.0
    %3450 = vmatprep.subr.mxu0 0.0
    %3451 = vmatpush1.msra.mxu0 0.0
    %3452 = vmatprep.subr.mxu0 0.0
    %3453 = vmatpush1.msra.mxu0 0.0
    %3454 = vmatprep.subr.mxu0 0.0
    %3455 = vmatpush1.msra.mxu0 0.0
    %3456 = vmatprep.subr.mxu0 0.0
    %3457 = vmatpush1.msra.mxu0 0.0
    %3458 = vmatprep.subr.mxu0 0.0
    %3459 = vmatpush1.msra.mxu0 0.0
    %3460 = vmatprep.subr.mxu0 0.0
    %3461 = vmatpush1.msra.mxu0 0.0
    %3462 = vmatprep.subr.mxu0 0.0
    %3463 = vmatpush1.msra.mxu0 0.0
    %3464 = vmatprep.subr.mxu0 0.0
    %3465 = vmatpush1.msra.mxu0 0.0
    %3466 = vmatprep.subr.mxu0 0.0
    %3467 = vmatpush1.msra.mxu0 0.0
    %3468 = vmatprep.subr.mxu0 0.0
    %3469 = vmatpush1.msra.mxu0 0.0
    %3470 = vmatprep.subr.mxu0 0.0
    %3471 = vmatpush1.msra.mxu0 0.0
    %3472 = vmatprep.subr.mxu0 0.0
    %3473 = vmatpush1.msra.mxu0 0.0
    %3474 = vmatprep.subr.mxu0 0.0
    %3475 = vmatpush1.msra.mxu0 0.0
    %3476 = vmatprep.subr.mxu0 0.0
    %3477 = vmatpush1.msra.mxu0 0.0
    %3478 = vmatprep.subr.mxu0 0.0
    %3479 = vmatpush1.msra.mxu0 0.0
    %3480 = vmatprep.subr.mxu0 0.0
    %3481 = vmatpush1.msra.mxu0 0.0
    %3482 = vmatprep.subr.mxu0 0.0
    %3483 = vmatpush1.msra.mxu0 0.0
    %3484 = vmatprep.subr.mxu0 0.0
    %3485 = vmatpush1.msra.mxu0 0.0
    %3486 = vmatprep.subr.mxu0 0.0
    %3487 = vmatpush1.msra.mxu0 0.0
    %3488 = vmatprep.subr.mxu0 0.0
    %3489 = vmatpush1.msra.mxu0 0.0
    %3490 = vmatprep.subr.mxu0 0.0
    %3491 = vmatpush1.msra.mxu0 0.0
    %3492 = vmatprep.mubr.f32.mxu0 0.0
    %v3493 = vand.u32 %v3108, 4294901760
    %3494 = vmatmul.mubr.f32.gmra.mrb[0].mxu0 %v3493
    %v3495 = vpop.f32.mrb[0].mxu0
    %v3496 = vadd.f32 %v3235, %v3495
    %v3497 = vpop.f32.mrb[0].mxu0
    %3498 = vmatprep.mubr.f32.mxu0 0.0
    %v3499 = vand.u32 %v3111, 4294901760
    %3500 = vmatmul.mubr.f32.gmra.mrb[0].mxu0 %v3499
    %v3501 = vpop.f32.mrb[0].mxu0
    %v3502 = vadd.f32 %v3245, %v3501
    %v3503 = vpop.f32.mrb[0].mxu0
    %3504 = vmatprep.mubr.f32.mxu0 0.0
    %v3505 = vand.u32 %v3114, 4294901760
    %3506 = vmatmul.mubr.f32.gmra.mrb[0].mxu0 %v3505
    %v3507 = vpop.f32.mrb[0].mxu0
    %v3508 = vadd.f32 %v3255, %v3507
    %v3509 = vpop.f32.mrb[0].mxu0
    %3510 = vmatprep.mubr.f32.mxu0 0.0
    %v3511 = vand.u32 %v3117, 4294901760
    %3512 = vmatmul.mubr.f32.gmra.mrb[0].mxu0 %v3511
    %v3513 = vpop.f32.mrb[0].mxu0
    %v3514 = vadd.f32 %v3265, %v3513
    %v3515 = vpop.f32.mrb[0].mxu0
    %3516 = vmatprep.mubr.f32.mxu0 0.0
    %v3517 = vand.u32 %v3120, 4294901760
    %3518 = vmatmul.mubr.f32.gmra.mrb[0].mxu0 %v3517
    %v3519 = vpop.f32.mrb[0].mxu0
    %v3520 = vadd.f32 %v3275, %v3519
    %v3521 = vpop.f32.mrb[0].mxu0
    %3522 = vmatprep.mubr.f32.mxu0 0.0
    %v3523 = vand.u32 %v3123, 4294901760
    %3524 = vmatmul.mubr.f32.gmra.mrb[0].mxu0 %v3523
    %v3525 = vpop.f32.mrb[0].mxu0
    %v3526 = vadd.f32 %v3285, %v3525
    %v3527 = vpop.f32.mrb[0].mxu0
    %3528 = vmatprep.mubr.f32.mxu0 0.0
    %v3529 = vand.u32 %v3126, 4294901760
    %3530 = vmatmul.mubr.f32.gmra.mrb[0].mxu0 %v3529
    %v3531 = vpop.f32.mrb[0].mxu0
    %v3532 = vadd.f32 %v3295, %v3531
    %v3533 = vpop.f32.mrb[0].mxu0
    %3534 = vmatprep.mubr.f32.mxu0 0.0
    %v3535 = vand.u32 %v3129, 4294901760
    %3536 = vmatmul.mubr.f32.gmra.mrb[0].mxu0 %v3535
    %v3537 = vpop.f32.mrb[0].mxu0
    %v3538 = vadd.f32 %v3305, %v3537
    %v3539 = vpop.f32.mrb[0].mxu0
    %3540 = vmatprep.mubr.f32.mxu0 0.0
    %v3541 = vand.u32 %v3132, 4294901760
    %3542 = vmatmul.mubr.f32.gmra.mrb[0].mxu0 %v3541
    %v3543 = vpop.f32.mrb[0].mxu0
    %v3544 = vadd.f32 %v3315, %v3543
    %v3545 = vpop.f32.mrb[0].mxu0
    %3546 = vmatprep.mubr.f32.mxu0 0.0
    %v3547 = vand.u32 %v3135, 4294901760
    %3548 = vmatmul.mubr.f32.gmra.mrb[0].mxu0 %v3547
    %v3549 = vpop.f32.mrb[0].mxu0
    %v3550 = vadd.f32 %v3325, %v3549
    %v3551 = vpop.f32.mrb[0].mxu0
    %3552 = vmatprep.mubr.f32.mxu0 0.0
    %v3553 = vand.u32 %v3138, 4294901760
    %3554 = vmatmul.mubr.f32.gmra.mrb[0].mxu0 %v3553
    %v3555 = vpop.f32.mrb[0].mxu0
    %v3556 = vadd.f32 %v3335, %v3555
    %v3557 = vpop.f32.mrb[0].mxu0
    %3558 = vmatprep.mubr.f32.mxu0 0.0
    %v3559 = vand.u32 %v3141, 4294901760
    %3560 = vmatmul.mubr.f32.gmra.mrb[0].mxu0 %v3559
    %v3561 = vpop.f32.mrb[0].mxu0
    %v3562 = vadd.f32 %v3345, %v3561
    %v3563 = vpop.f32.mrb[0].mxu0
    %3564 = vmatprep.mubr.f32.mxu0 0.0
    %v3565 = vand.u32 %v3144, 4294901760
    %3566 = vmatmul.mubr.f32.gmra.mrb[0].mxu0 %v3565
    %v3567 = vpop.f32.mrb[0].mxu0
    %v3568 = vadd.f32 %v3355, %v3567
    %v3569 = vpop.f32.mrb[0].mxu0
    %3570 = vmatprep.mubr.f32.mxu0 0.0
    %v3571 = vand.u32 %v3147, 4294901760
    %3572 = vmatmul.mubr.f32.gmra.mrb[0].mxu0 %v3571
    %v3573 = vpop.f32.mrb[0].mxu0
    %v3574 = vadd.f32 %v3365, %v3573
    %v3575 = vpop.f32.mrb[0].mxu0
    %3576 = vmatprep.mubr.f32.mxu0 0.0
    %v3577 = vand.u32 %v3150, 4294901760
    %3578 = vmatmul.mubr.f32.gmra.mrb[0].mxu0 %v3577
    %v3579 = vpop.f32.mrb[0].mxu0
    %v3580 = vadd.f32 %v3375, %v3579
    %v3581 = vpop.f32.mrb[0].mxu0
    %3582 = vmatprep.mubr.f32.mxu0 0.0
    %v3583 = vand.u32 %v3153, 4294901760
    %3584 = vmatmul.mubr.f32.gmra.mrb[0].mxu0 %v3583
    %v3585 = vpop.f32.mrb[0].mxu0
    %v3586 = vadd.f32 %v3385, %v3585
    %v3587 = vpop.f32.mrb[0].mxu0
    %3588 = vdwg.mxu0
    %3589 = vmatprep.subr.mxu0 0.0
    %v3590 = vand.u32 %v3099, 4294901760
    %v3591 = vsub.f32 %v3099, %v3590
    %3592 = vmatpush1.msra.mxu0 %v3591
    %3593 = vmatprep.subr.mxu0 0.0
    %v3594 = vand.u32 %v3100, 4294901760
    %v3595 = vsub.f32 %v3100, %v3594
    %3596 = vmatpush1.msra.mxu0 %v3595
    %3597 = vmatprep.subr.mxu0 0.0
    %v3598 = vand.u32 %v3101, 4294901760
    %v3599 = vsub.f32 %v3101, %v3598
    %3600 = vmatpush1.msra.mxu0 %v3599
    %3601 = vmatprep.subr.mxu0 0.0
    %v3602 = vand.u32 %v3102, 4294901760
    %v3603 = vsub.f32 %v3102, %v3602
    %3604 = vmatpush1.msra.mxu0 %v3603
    %3605 = vmatprep.subr.mxu0 0.0
    %v3606 = vand.u32 %v3103, 4294901760
    %v3607 = vsub.f32 %v3103, %v3606
    %3608 = vmatpush1.msra.mxu0 %v3607
    %3609 = vmatprep.subr.mxu0 0.0
    %v3610 = vand.u32 %v3104, 4294901760
    %v3611 = vsub.f32 %v3104, %v3610
    %3612 = vmatpush1.msra.mxu0 %v3611
    %3613 = vmatprep.subr.mxu0 0.0
    %v3614 = vand.u32 %v3105, 4294901760
    %v3615 = vsub.f32 %v3105, %v3614
    %3616 = vmatpush1.msra.mxu0 %v3615
    %3617 = vmatprep.subr.mxu0 0.0
    %v3618 = vand.u32 %v3106, 4294901760
    %v3619 = vsub.f32 %v3106, %v3618
    %3620 = vmatpush1.msra.mxu0 %v3619
    %3621 = vmatprep.subr.mxu0 0.0
    %3622 = vmatpush1.msra.mxu0 0.0
    %3623 = vmatprep.subr.mxu0 0.0
    %3624 = vmatpush1.msra.mxu0 0.0
    %3625 = vmatprep.subr.mxu0 0.0
    %3626 = vmatpush1.msra.mxu0 0.0
    %3627 = vmatprep.subr.mxu0 0.0
    %3628 = vmatpush1.msra.mxu0 0.0
    %3629 = vmatprep.subr.mxu0 0.0
    %3630 = vmatpush1.msra.mxu0 0.0
    %3631 = vmatprep.subr.mxu0 0.0
    %3632 = vmatpush1.msra.mxu0 0.0
    %3633 = vmatprep.subr.mxu0 0.0
    %3634 = vmatpush1.msra.mxu0 0.0
    %3635 = vmatprep.subr.mxu0 0.0
    %3636 = vmatpush1.msra.mxu0 0.0
    %3637 = vmatprep.subr.mxu0 0.0
    %3638 = vmatpush1.msra.mxu0 0.0
    %3639 = vmatprep.subr.mxu0 0.0
    %3640 = vmatpush1.msra.mxu0 0.0
    %3641 = vmatprep.subr.mxu0 0.0
    %3642 = vmatpush1.msra.mxu0 0.0
    %3643 = vmatprep.subr.mxu0 0.0
    %3644 = vmatpush1.msra.mxu0 0.0
    %3645 = vmatprep.subr.mxu0 0.0
    %3646 = vmatpush1.msra.mxu0 0.0
    %3647 = vmatprep.subr.mxu0 0.0
    %3648 = vmatpush1.msra.mxu0 0.0
    %3649 = vmatprep.subr.mxu0 0.0
    %3650 = vmatpush1.msra.mxu0 0.0
    %3651 = vmatprep.subr.mxu0 0.0
    %3652 = vmatpush1.msra.mxu0 0.0
    %3653 = vmatprep.subr.mxu0 0.0
    %3654 = vmatpush1.msra.mxu0 0.0
    %3655 = vmatprep.subr.mxu0 0.0
    %3656 = vmatpush1.msra.mxu0 0.0
    %3657 = vmatprep.subr.mxu0 0.0
    %3658 = vmatpush1.msra.mxu0 0.0
    %3659 = vmatprep.subr.mxu0 0.0
    %3660 = vmatpush1.msra.mxu0 0.0
    %3661 = vmatprep.subr.mxu0 0.0
    %3662 = vmatpush1.msra.mxu0 0.0
    %3663 = vmatprep.subr.mxu0 0.0
    %3664 = vmatpush1.msra.mxu0 0.0
    %3665 = vmatprep.subr.mxu0 0.0
    %3666 = vmatpush1.msra.mxu0 0.0
    %3667 = vmatprep.subr.mxu0 0.0
    %3668 = vmatpush1.msra.mxu0 0.0
    %3669 = vmatprep.mubr.f32.mxu0 0.0
    %v3670 = vand.u32 %v3108, 4294901760
    %v3671 = vsub.f32 %v3108, %v3670
    %3672 = vmatmul.mubr.f32.gmra.mrb[0].mxu0 %v3671
    %v3673 = vpop.f32.mrb[0].mxu0
    %v3674 = vadd.f32 %v3496, %v3673
    %v3675 = vpop.f32.mrb[0].mxu0
    %3676 = vmatprep.mubr.f32.mxu0 0.0
    %v3677 = vand.u32 %v3111, 4294901760
    %v3678 = vsub.f32 %v3111, %v3677
    %3679 = vmatmul.mubr.f32.gmra.mrb[0].mxu0 %v3678
    %v3680 = vpop.f32.mrb[0].mxu0
    %v3681 = vadd.f32 %v3502, %v3680
    %v3682 = vpop.f32.mrb[0].mxu0
    %3683 = vmatprep.mubr.f32.mxu0 0.0
    %v3684 = vand.u32 %v3114, 4294901760
    %v3685 = vsub.f32 %v3114, %v3684
    %3686 = vmatmul.mubr.f32.gmra.mrb[0].mxu0 %v3685
    %v3687 = vpop.f32.mrb[0].mxu0
    %v3688 = vadd.f32 %v3508, %v3687
    %v3689 = vpop.f32.mrb[0].mxu0
    %3690 = vmatprep.mubr.f32.mxu0 0.0
    %v3691 = vand.u32 %v3117, 4294901760
    %v3692 = vsub.f32 %v3117, %v3691
    %3693 = vmatmul.mubr.f32.gmra.mrb[0].mxu0 %v3692
    %v3694 = vpop.f32.mrb[0].mxu0
    %v3695 = vadd.f32 %v3514, %v3694
    %v3696 = vpop.f32.mrb[0].mxu0
    %3697 = vmatprep.mubr.f32.mxu0 0.0
    %v3698 = vand.u32 %v3120, 4294901760
    %v3699 = vsub.f32 %v3120, %v3698
    %3700 = vmatmul.mubr.f32.gmra.mrb[0].mxu0 %v3699
    %v3701 = vpop.f32.mrb[0].mxu0
    %v3702 = vadd.f32 %v3520, %v3701
    %v3703 = vpop.f32.mrb[0].mxu0
    %3704 = vmatprep.mubr.f32.mxu0 0.0
    %v3705 = vand.u32 %v3123, 4294901760
    %v3706 = vsub.f32 %v3123, %v3705
    %3707 = vmatmul.mubr.f32.gmra.mrb[0].mxu0 %v3706
    %v3708 = vpop.f32.mrb[0].mxu0
    %v3709 = vadd.f32 %v3526, %v3708
    %v3710 = vpop.f32.mrb[0].mxu0
    %3711 = vmatprep.mubr.f32.mxu0 0.0
    %v3712 = vand.u32 %v3126, 4294901760
    %v3713 = vsub.f32 %v3126, %v3712
    %3714 = vmatmul.mubr.f32.gmra.mrb[0].mxu0 %v3713
    %v3715 = vpop.f32.mrb[0].mxu0
    %v3716 = vadd.f32 %v3532, %v3715
    %v3717 = vpop.f32.mrb[0].mxu0
    %3718 = vmatprep.mubr.f32.mxu0 0.0
    %v3719 = vand.u32 %v3129, 4294901760
    %v3720 = vsub.f32 %v3129, %v3719
    %3721 = vmatmul.mubr.f32.gmra.mrb[0].mxu0 %v3720
    %v3722 = vpop.f32.mrb[0].mxu0
    %v3723 = vadd.f32 %v3538, %v3722
    %v3724 = vpop.f32.mrb[0].mxu0
    %3725 = vmatprep.mubr.f32.mxu0 0.0
    %v3726 = vand.u32 %v3132, 4294901760
    %v3727 = vsub.f32 %v3132, %v3726
    %3728 = vmatmul.mubr.f32.gmra.mrb[0].mxu0 %v3727
    %v3729 = vpop.f32.mrb[0].mxu0
    %v3730 = vadd.f32 %v3544, %v3729
    %v3731 = vpop.f32.mrb[0].mxu0
    %3732 = vmatprep.mubr.f32.mxu0 0.0
    %v3733 = vand.u32 %v3135, 4294901760
    %v3734 = vsub.f32 %v3135, %v3733
    %3735 = vmatmul.mubr.f32.gmra.mrb[0].mxu0 %v3734
    %v3736 = vpop.f32.mrb[0].mxu0
    %v3737 = vadd.f32 %v3550, %v3736
    %v3738 = vpop.f32.mrb[0].mxu0
    %3739 = vmatprep.mubr.f32.mxu0 0.0
    %v3740 = vand.u32 %v3138, 4294901760
    %v3741 = vsub.f32 %v3138, %v3740
    %3742 = vmatmul.mubr.f32.gmra.mrb[0].mxu0 %v3741
    %v3743 = vpop.f32.mrb[0].mxu0
    %v3744 = vadd.f32 %v3556, %v3743
    %v3745 = vpop.f32.mrb[0].mxu0
    %3746 = vmatprep.mubr.f32.mxu0 0.0
    %v3747 = vand.u32 %v3141, 4294901760
    %v3748 = vsub.f32 %v3141, %v3747
    %3749 = vmatmul.mubr.f32.gmra.mrb[0].mxu0 %v3748
    %v3750 = vpop.f32.mrb[0].mxu0
    %v3751 = vadd.f32 %v3562, %v3750
    %v3752 = vpop.f32.mrb[0].mxu0
    %3753 = vmatprep.mubr.f32.mxu0 0.0
    %v3754 = vand.u32 %v3144, 4294901760
    %v3755 = vsub.f32 %v3144, %v3754
    %3756 = vmatmul.mubr.f32.gmra.mrb[0].mxu0 %v3755
    %v3757 = vpop.f32.mrb[0].mxu0
    %v3758 = vadd.f32 %v3568, %v3757
    %v3759 = vpop.f32.mrb[0].mxu0
    %3760 = vmatprep.mubr.f32.mxu0 0.0
    %v3761 = vand.u32 %v3147, 4294901760
    %v3762 = vsub.f32 %v3147, %v3761
    %3763 = vmatmul.mubr.f32.gmra.mrb[0].mxu0 %v3762
    %v3764 = vpop.f32.mrb[0].mxu0
    %v3765 = vadd.f32 %v3574, %v3764
    %v3766 = vpop.f32.mrb[0].mxu0
    %3767 = vmatprep.mubr.f32.mxu0 0.0
    %v3768 = vand.u32 %v3150, 4294901760
    %v3769 = vsub.f32 %v3150, %v3768
    %3770 = vmatmul.mubr.f32.gmra.mrb[0].mxu0 %v3769
    %v3771 = vpop.f32.mrb[0].mxu0
    %v3772 = vadd.f32 %v3580, %v3771
    %v3773 = vpop.f32.mrb[0].mxu0
    %3774 = vmatprep.mubr.f32.mxu0 0.0
    %v3775 = vand.u32 %v3153, 4294901760
    %v3776 = vsub.f32 %v3153, %v3775
    %3777 = vmatmul.mubr.f32.gmra.mrb[0].mxu0 %v3776
    %v3778 = vpop.f32.mrb[0].mxu0
    %v3779 = vadd.f32 %v3586, %v3778
    %v3780 = vpop.f32.mrb[0].mxu0
    %3781 = vdwg.mxu0
    %3782 = vmatprep.subr.mxu0 0.0
    %v3783 = vand.u32 %v3099, 4294901760
    %3784 = vmatpush1.msra.mxu0 %v3783
    %3785 = vmatprep.subr.mxu0 0.0
    %v3786 = vand.u32 %v3100, 4294901760
    %3787 = vmatpush1.msra.mxu0 %v3786
    %3788 = vmatprep.subr.mxu0 0.0
    %v3789 = vand.u32 %v3101, 4294901760
    %3790 = vmatpush1.msra.mxu0 %v3789
    %3791 = vmatprep.subr.mxu0 0.0
    %v3792 = vand.u32 %v3102, 4294901760
    %3793 = vmatpush1.msra.mxu0 %v3792
    %3794 = vmatprep.subr.mxu0 0.0
    %v3795 = vand.u32 %v3103, 4294901760
    %3796 = vmatpush1.msra.mxu0 %v3795
    %3797 = vmatprep.subr.mxu0 0.0
    %v3798 = vand.u32 %v3104, 4294901760
    %3799 = vmatpush1.msra.mxu0 %v3798
    %3800 = vmatprep.subr.mxu0 0.0
    %v3801 = vand.u32 %v3105, 4294901760
    %3802 = vmatpush1.msra.mxu0 %v3801
    %3803 = vmatprep.subr.mxu0 0.0
    %v3804 = vand.u32 %v3106, 4294901760
    %3805 = vmatpush1.msra.mxu0 %v3804
    %3806 = vmatprep.subr.mxu0 0.0
    %3807 = vmatpush1.msra.mxu0 0.0
    %3808 = vmatprep.subr.mxu0 0.0
    %3809 = vmatpush1.msra.mxu0 0.0
    %3810 = vmatprep.subr.mxu0 0.0
    %3811 = vmatpush1.msra.mxu0 0.0
    %3812 = vmatprep.subr.mxu0 0.0
    %3813 = vmatpush1.msra.mxu0 0.0
    %3814 = vmatprep.subr.mxu0 0.0
    %3815 = vmatpush1.msra.mxu0 0.0
    %3816 = vmatprep.subr.mxu0 0.0
    %3817 = vmatpush1.msra.mxu0 0.0
    %3818 = vmatprep.subr.mxu0 0.0
    %3819 = vmatpush1.msra.mxu0 0.0
    %3820 = vmatprep.subr.mxu0 0.0
    %3821 = vmatpush1.msra.mxu0 0.0
    %3822 = vmatprep.subr.mxu0 0.0
    %3823 = vmatpush1.msra.mxu0 0.0
    %3824 = vmatprep.subr.mxu0 0.0
    %3825 = vmatpush1.msra.mxu0 0.0
    %3826 = vmatprep.subr.mxu0 0.0
    %3827 = vmatpush1.msra.mxu0 0.0
    %3828 = vmatprep.subr.mxu0 0.0
    %3829 = vmatpush1.msra.mxu0 0.0
    %3830 = vmatprep.subr.mxu0 0.0
    %3831 = vmatpush1.msra.mxu0 0.0
    %3832 = vmatprep.subr.mxu0 0.0
    %3833 = vmatpush1.msra.mxu0 0.0
    %3834 = vmatprep.subr.mxu0 0.0
    %3835 = vmatpush1.msra.mxu0 0.0
    %3836 = vmatprep.subr.mxu0 0.0
    %3837 = vmatpush1.msra.mxu0 0.0
    %3838 = vmatprep.subr.mxu0 0.0
    %3839 = vmatpush1.msra.mxu0 0.0
    %3840 = vmatprep.subr.mxu0 0.0
    %3841 = vmatpush1.msra.mxu0 0.0
    %3842 = vmatprep.subr.mxu0 0.0
    %3843 = vmatpush1.msra.mxu0 0.0
    %3844 = vmatprep.subr.mxu0 0.0
    %3845 = vmatpush1.msra.mxu0 0.0
    %3846 = vmatprep.subr.mxu0 0.0
    %3847 = vmatpush1.msra.mxu0 0.0
    %3848 = vmatprep.subr.mxu0 0.0
    %3849 = vmatpush1.msra.mxu0 0.0
    %3850 = vmatprep.subr.mxu0 0.0
    %3851 = vmatpush1.msra.mxu0 0.0
    %3852 = vmatprep.subr.mxu0 0.0
    %3853 = vmatpush1.msra.mxu0 0.0
    %3854 = vmatprep.mubr.f32.mxu0 0.0
    %v3855 = vand.u32 %v3108, 4294901760
    %v3856 = vsub.f32 %v3108, %v3855
    %v3857 = vand.u32 %v3856, 4294901760
    %3858 = vmatmul.mubr.f32.gmra.mrb[0].mxu0 %v3857
    %v3859 = vpop.f32.mrb[0].mxu0
    %v3860 = vadd.f32 %v3674, %v3859
    %v3861 = vpop.f32.mrb[0].mxu0
    %3862 = vmatprep.mubr.f32.mxu0 0.0
    %v3863 = vand.u32 %v3111, 4294901760
    %v3864 = vsub.f32 %v3111, %v3863
    %v3865 = vand.u32 %v3864, 4294901760
    %3866 = vmatmul.mubr.f32.gmra.mrb[0].mxu0 %v3865
    %v3867 = vpop.f32.mrb[0].mxu0
    %v3868 = vadd.f32 %v3681, %v3867
    %v3869 = vpop.f32.mrb[0].mxu0
    %3870 = vmatprep.mubr.f32.mxu0 0.0
    %v3871 = vand.u32 %v3114, 4294901760
    %v3872 = vsub.f32 %v3114, %v3871
    %v3873 = vand.u32 %v3872, 4294901760
    %3874 = vmatmul.mubr.f32.gmra.mrb[0].mxu0 %v3873
    %v3875 = vpop.f32.mrb[0].mxu0
    %v3876 = vadd.f32 %v3688, %v3875
    %v3877 = vpop.f32.mrb[0].mxu0
    %3878 = vmatprep.mubr.f32.mxu0 0.0
    %v3879 = vand.u32 %v3117, 4294901760
    %v3880 = vsub.f32 %v3117, %v3879
    %v3881 = vand.u32 %v3880, 4294901760
    %3882 = vmatmul.mubr.f32.gmra.mrb[0].mxu0 %v3881
    %v3883 = vpop.f32.mrb[0].mxu0
    %v3884 = vadd.f32 %v3695, %v3883
    %v3885 = vpop.f32.mrb[0].mxu0
    %3886 = vmatprep.mubr.f32.mxu0 0.0
    %v3887 = vand.u32 %v3120, 4294901760
    %v3888 = vsub.f32 %v3120, %v3887
    %v3889 = vand.u32 %v3888, 4294901760
    %3890 = vmatmul.mubr.f32.gmra.mrb[0].mxu0 %v3889
    %v3891 = vpop.f32.mrb[0].mxu0
    %v3892 = vadd.f32 %v3702, %v3891
    %v3893 = vpop.f32.mrb[0].mxu0
    %3894 = vmatprep.mubr.f32.mxu0 0.0
    %v3895 = vand.u32 %v3123, 4294901760
    %v3896 = vsub.f32 %v3123, %v3895
    %v3897 = vand.u32 %v3896, 4294901760
    %3898 = vmatmul.mubr.f32.gmra.mrb[0].mxu0 %v3897
    %v3899 = vpop.f32.mrb[0].mxu0
    %v3900 = vadd.f32 %v3709, %v3899
    %v3901 = vpop.f32.mrb[0].mxu0
    %3902 = vmatprep.mubr.f32.mxu0 0.0
    %v3903 = vand.u32 %v3126, 4294901760
    %v3904 = vsub.f32 %v3126, %v3903
    %v3905 = vand.u32 %v3904, 4294901760
    %3906 = vmatmul.mubr.f32.gmra.mrb[0].mxu0 %v3905
    %v3907 = vpop.f32.mrb[0].mxu0
    %v3908 = vadd.f32 %v3716, %v3907
    %v3909 = vpop.f32.mrb[0].mxu0
    %3910 = vmatprep.mubr.f32.mxu0 0.0
    %v3911 = vand.u32 %v3129, 4294901760
    %v3912 = vsub.f32 %v3129, %v3911
    %v3913 = vand.u32 %v3912, 4294901760
    %3914 = vmatmul.mubr.f32.gmra.mrb[0].mxu0 %v3913
    %v3915 = vpop.f32.mrb[0].mxu0
    %v3916 = vadd.f32 %v3723, %v3915
    %v3917 = vpop.f32.mrb[0].mxu0
    %3918 = vmatprep.mubr.f32.mxu0 0.0
    %v3919 = vand.u32 %v3132, 4294901760
    %v3920 = vsub.f32 %v3132, %v3919
    %v3921 = vand.u32 %v3920, 4294901760
    %3922 = vmatmul.mubr.f32.gmra.mrb[0].mxu0 %v3921
    %v3923 = vpop.f32.mrb[0].mxu0
    %v3924 = vadd.f32 %v3730, %v3923
    %v3925 = vpop.f32.mrb[0].mxu0
    %3926 = vmatprep.mubr.f32.mxu0 0.0
    %v3927 = vand.u32 %v3135, 4294901760
    %v3928 = vsub.f32 %v3135, %v3927
    %v3929 = vand.u32 %v3928, 4294901760
    %3930 = vmatmul.mubr.f32.gmra.mrb[0].mxu0 %v3929
    %v3931 = vpop.f32.mrb[0].mxu0
    %v3932 = vadd.f32 %v3737, %v3931
    %v3933 = vpop.f32.mrb[0].mxu0
    %3934 = vmatprep.mubr.f32.mxu0 0.0
    %v3935 = vand.u32 %v3138, 4294901760
    %v3936 = vsub.f32 %v3138, %v3935
    %v3937 = vand.u32 %v3936, 4294901760
    %3938 = vmatmul.mubr.f32.gmra.mrb[0].mxu0 %v3937
    %v3939 = vpop.f32.mrb[0].mxu0
    %v3940 = vadd.f32 %v3744, %v3939
    %v3941 = vpop.f32.mrb[0].mxu0
    %3942 = vmatprep.mubr.f32.mxu0 0.0
    %v3943 = vand.u32 %v3141, 4294901760
    %v3944 = vsub.f32 %v3141, %v3943
    %v3945 = vand.u32 %v3944, 4294901760
    %3946 = vmatmul.mubr.f32.gmra.mrb[0].mxu0 %v3945
    %v3947 = vpop.f32.mrb[0].mxu0
    %v3948 = vadd.f32 %v3751, %v3947
    %v3949 = vpop.f32.mrb[0].mxu0
    %3950 = vmatprep.mubr.f32.mxu0 0.0
    %v3951 = vand.u32 %v3144, 4294901760
    %v3952 = vsub.f32 %v3144, %v3951
    %v3953 = vand.u32 %v3952, 4294901760
    %3954 = vmatmul.mubr.f32.gmra.mrb[0].mxu0 %v3953
    %v3955 = vpop.f32.mrb[0].mxu0
    %v3956 = vadd.f32 %v3758, %v3955
    %v3957 = vpop.f32.mrb[0].mxu0
    %3958 = vmatprep.mubr.f32.mxu0 0.0
    %v3959 = vand.u32 %v3147, 4294901760
    %v3960 = vsub.f32 %v3147, %v3959
    %v3961 = vand.u32 %v3960, 4294901760
    %3962 = vmatmul.mubr.f32.gmra.mrb[0].mxu0 %v3961
    %v3963 = vpop.f32.mrb[0].mxu0
    %v3964 = vadd.f32 %v3765, %v3963
    %v3965 = vpop.f32.mrb[0].mxu0
    %3966 = vmatprep.mubr.f32.mxu0 0.0
    %v3967 = vand.u32 %v3150, 4294901760
    %v3968 = vsub.f32 %v3150, %v3967
    %v3969 = vand.u32 %v3968, 4294901760
    %3970 = vmatmul.mubr.f32.gmra.mrb[0].mxu0 %v3969
    %v3971 = vpop.f32.mrb[0].mxu0
    %v3972 = vadd.f32 %v3772, %v3971
    %v3973 = vpop.f32.mrb[0].mxu0
    %3974 = vmatprep.mubr.f32.mxu0 0.0
    %v3975 = vand.u32 %v3153, 4294901760
    %v3976 = vsub.f32 %v3153, %v3975
    %v3977 = vand.u32 %v3976, 4294901760
    %3978 = vmatmul.mubr.f32.gmra.mrb[0].mxu0 %v3977
    %v3979 = vpop.f32.mrb[0].mxu0
    %v3980 = vadd.f32 %v3779, %v3979
    %v3981 = vpop.f32.mrb[0].mxu0
    %3982 = vdwg.mxu0
    %3983 = vmatprep.subr.mxu0 0.0
    %v3984 = vand.u32 %v3099, 4294901760
    %v3985 = vsub.f32 %v3099, %v3984
    %v3986 = vand.u32 %v3985, 4294901760
    %3987 = vmatpush1.msra.mxu0 %v3986
    %3988 = vmatprep.subr.mxu0 0.0
    %v3989 = vand.u32 %v3100, 4294901760
    %v3990 = vsub.f32 %v3100, %v3989
    %v3991 = vand.u32 %v3990, 4294901760
    %3992 = vmatpush1.msra.mxu0 %v3991
    %3993 = vmatprep.subr.mxu0 0.0
    %v3994 = vand.u32 %v3101, 4294901760
    %v3995 = vsub.f32 %v3101, %v3994
    %v3996 = vand.u32 %v3995, 4294901760
    %3997 = vmatpush1.msra.mxu0 %v3996
    %3998 = vmatprep.subr.mxu0 0.0
    %v3999 = vand.u32 %v3102, 4294901760
    %v4000 = vsub.f32 %v3102, %v3999
    %v4001 = vand.u32 %v4000, 4294901760
    %4002 = vmatpush1.msra.mxu0 %v4001
    %4003 = vmatprep.subr.mxu0 0.0
    %v4004 = vand.u32 %v3103, 4294901760
    %v4005 = vsub.f32 %v3103, %v4004
    %v4006 = vand.u32 %v4005, 4294901760
    %4007 = vmatpush1.msra.mxu0 %v4006
    %4008 = vmatprep.subr.mxu0 0.0
    %v4009 = vand.u32 %v3104, 4294901760
    %v4010 = vsub.f32 %v3104, %v4009
    %v4011 = vand.u32 %v4010, 4294901760
    %4012 = vmatpush1.msra.mxu0 %v4011
    %4013 = vmatprep.subr.mxu0 0.0
    %v4014 = vand.u32 %v3105, 4294901760
    %v4015 = vsub.f32 %v3105, %v4014
    %v4016 = vand.u32 %v4015, 4294901760
    %4017 = vmatpush1.msra.mxu0 %v4016
    %4018 = vmatprep.subr.mxu0 0.0
    %v4019 = vand.u32 %v3106, 4294901760
    %v4020 = vsub.f32 %v3106, %v4019
    %v4021 = vand.u32 %v4020, 4294901760
    %4022 = vmatpush1.msra.mxu0 %v4021
    %4023 = vmatprep.subr.mxu0 0.0
    %4024 = vmatpush1.msra.mxu0 0.0
    %4025 = vmatprep.subr.mxu0 0.0
    %4026 = vmatpush1.msra.mxu0 0.0
    %4027 = vmatprep.subr.mxu0 0.0
    %4028 = vmatpush1.msra.mxu0 0.0
    %4029 = vmatprep.subr.mxu0 0.0
    %4030 = vmatpush1.msra.mxu0 0.0
    %4031 = vmatprep.subr.mxu0 0.0
    %4032 = vmatpush1.msra.mxu0 0.0
    %4033 = vmatprep.subr.mxu0 0.0
    %4034 = vmatpush1.msra.mxu0 0.0
    %4035 = vmatprep.subr.mxu0 0.0
    %4036 = vmatpush1.msra.mxu0 0.0
    %4037 = vmatprep.subr.mxu0 0.0
    %4038 = vmatpush1.msra.mxu0 0.0
    %4039 = vmatprep.subr.mxu0 0.0
    %4040 = vmatpush1.msra.mxu0 0.0
    %4041 = vmatprep.subr.mxu0 0.0
    %4042 = vmatpush1.msra.mxu0 0.0
    %4043 = vmatprep.subr.mxu0 0.0
    %4044 = vmatpush1.msra.mxu0 0.0
    %4045 = vmatprep.subr.mxu0 0.0
    %4046 = vmatpush1.msra.mxu0 0.0
    %4047 = vmatprep.subr.mxu0 0.0
    %4048 = vmatpush1.msra.mxu0 0.0
    %4049 = vmatprep.subr.mxu0 0.0
    %4050 = vmatpush1.msra.mxu0 0.0
    %4051 = vmatprep.subr.mxu0 0.0
    %4052 = vmatpush1.msra.mxu0 0.0
    %4053 = vmatprep.subr.mxu0 0.0
    %4054 = vmatpush1.msra.mxu0 0.0
    %4055 = vmatprep.subr.mxu0 0.0
    %4056 = vmatpush1.msra.mxu0 0.0
    %4057 = vmatprep.subr.mxu0 0.0
    %4058 = vmatpush1.msra.mxu0 0.0
    %4059 = vmatprep.subr.mxu0 0.0
    %4060 = vmatpush1.msra.mxu0 0.0
    %4061 = vmatprep.subr.mxu0 0.0
    %4062 = vmatpush1.msra.mxu0 0.0
    %4063 = vmatprep.subr.mxu0 0.0
    %4064 = vmatpush1.msra.mxu0 0.0
    %4065 = vmatprep.subr.mxu0 0.0
    %4066 = vmatpush1.msra.mxu0 0.0
    %4067 = vmatprep.subr.mxu0 0.0
    %4068 = vmatpush1.msra.mxu0 0.0
    %4069 = vmatprep.subr.mxu0 0.0
    %4070 = vmatpush1.msra.mxu0 0.0
    %4071 = vmatprep.mubr.f32.mxu0 0.0
    %v4072 = vand.u32 %v3108, 4294901760
    %4073 = vmatmul.mubr.f32.gmra.mrb[0].mxu0 %v4072
    %v4074 = vpop.f32.mrb[0].mxu0
    %v4075 = vadd.f32 %v3860, %v4074
    %v4076 = vpop.f32.mrb[0].mxu0
    %4077 = vmatprep.mubr.f32.mxu0 0.0
    %v4078 = vand.u32 %v3111, 4294901760
    %4079 = vmatmul.mubr.f32.gmra.mrb[0].mxu0 %v4078
    %v4080 = vpop.f32.mrb[0].mxu0
    %v4081 = vadd.f32 %v3868, %v4080
    %v4082 = vpop.f32.mrb[0].mxu0
    %4083 = vmatprep.mubr.f32.mxu0 0.0
    %v4084 = vand.u32 %v3114, 4294901760
    %4085 = vmatmul.mubr.f32.gmra.mrb[0].mxu0 %v4084
    %v4086 = vpop.f32.mrb[0].mxu0
    %v4087 = vadd.f32 %v3876, %v4086
    %v4088 = vpop.f32.mrb[0].mxu0
    %4089 = vmatprep.mubr.f32.mxu0 0.0
    %v4090 = vand.u32 %v3117, 4294901760
    %4091 = vmatmul.mubr.f32.gmra.mrb[0].mxu0 %v4090
    %v4092 = vpop.f32.mrb[0].mxu0
    %v4093 = vadd.f32 %v3884, %v4092
    %v4094 = vpop.f32.mrb[0].mxu0
    %4095 = vmatprep.mubr.f32.mxu0 0.0
    %v4096 = vand.u32 %v3120, 4294901760
    %4097 = vmatmul.mubr.f32.gmra.mrb[0].mxu0 %v4096
    %v4098 = vpop.f32.mrb[0].mxu0
    %v4099 = vadd.f32 %v3892, %v4098
    %v4100 = vpop.f32.mrb[0].mxu0
    %4101 = vmatprep.mubr.f32.mxu0 0.0
    %v4102 = vand.u32 %v3123, 4294901760
    %4103 = vmatmul.mubr.f32.gmra.mrb[0].mxu0 %v4102
    %v4104 = vpop.f32.mrb[0].mxu0
    %v4105 = vadd.f32 %v3900, %v4104
    %v4106 = vpop.f32.mrb[0].mxu0
    %4107 = vmatprep.mubr.f32.mxu0 0.0
    %v4108 = vand.u32 %v3126, 4294901760
    %4109 = vmatmul.mubr.f32.gmra.mrb[0].mxu0 %v4108
    %v4110 = vpop.f32.mrb[0].mxu0
    %v4111 = vadd.f32 %v3908, %v4110
    %v4112 = vpop.f32.mrb[0].mxu0
    %4113 = vmatprep.mubr.f32.mxu0 0.0
    %v4114 = vand.u32 %v3129, 4294901760
    %4115 = vmatmul.mubr.f32.gmra.mrb[0].mxu0 %v4114
    %v4116 = vpop.f32.mrb[0].mxu0
    %v4117 = vadd.f32 %v3916, %v4116
    %v4118 = vpop.f32.mrb[0].mxu0
    %4119 = vmatprep.mubr.f32.mxu0 0.0
    %v4120 = vand.u32 %v3132, 4294901760
    %4121 = vmatmul.mubr.f32.gmra.mrb[0].mxu0 %v4120
    %v4122 = vpop.f32.mrb[0].mxu0
    %v4123 = vadd.f32 %v3924, %v4122
    %v4124 = vpop.f32.mrb[0].mxu0
    %4125 = vmatprep.mubr.f32.mxu0 0.0
    %v4126 = vand.u32 %v3135, 4294901760
    %4127 = vmatmul.mubr.f32.gmra.mrb[0].mxu0 %v4126
    %v4128 = vpop.f32.mrb[0].mxu0
    %v4129 = vadd.f32 %v3932, %v4128
    %v4130 = vpop.f32.mrb[0].mxu0
    %4131 = vmatprep.mubr.f32.mxu0 0.0
    %v4132 = vand.u32 %v3138, 4294901760
    %4133 = vmatmul.mubr.f32.gmra.mrb[0].mxu0 %v4132
    %v4134 = vpop.f32.mrb[0].mxu0
    %v4135 = vadd.f32 %v3940, %v4134
    %v4136 = vpop.f32.mrb[0].mxu0
    %4137 = vmatprep.mubr.f32.mxu0 0.0
    %v4138 = vand.u32 %v3141, 4294901760
    %4139 = vmatmul.mubr.f32.gmra.mrb[0].mxu0 %v4138
    %v4140 = vpop.f32.mrb[0].mxu0
    %v4141 = vadd.f32 %v3948, %v4140
    %v4142 = vpop.f32.mrb[0].mxu0
    %4143 = vmatprep.mubr.f32.mxu0 0.0
    %v4144 = vand.u32 %v3144, 4294901760
    %4145 = vmatmul.mubr.f32.gmra.mrb[0].mxu0 %v4144
    %v4146 = vpop.f32.mrb[0].mxu0
    %v4147 = vadd.f32 %v3956, %v4146
    %v4148 = vpop.f32.mrb[0].mxu0
    %4149 = vmatprep.mubr.f32.mxu0 0.0
    %v4150 = vand.u32 %v3147, 4294901760
    %4151 = vmatmul.mubr.f32.gmra.mrb[0].mxu0 %v4150
    %v4152 = vpop.f32.mrb[0].mxu0
    %v4153 = vadd.f32 %v3964, %v4152
    %v4154 = vpop.f32.mrb[0].mxu0
    %4155 = vmatprep.mubr.f32.mxu0 0.0
    %v4156 = vand.u32 %v3150, 4294901760
    %4157 = vmatmul.mubr.f32.gmra.mrb[0].mxu0 %v4156
    %v4158 = vpop.f32.mrb[0].mxu0
    %v4159 = vadd.f32 %v3972, %v4158
    %v4160 = vpop.f32.mrb[0].mxu0
    %4161 = vmatprep.mubr.f32.mxu0 0.0
    %v4162 = vand.u32 %v3153, 4294901760
    %4163 = vmatmul.mubr.f32.gmra.mrb[0].mxu0 %v4162
    %v4164 = vpop.f32.mrb[0].mxu0
    %v4165 = vadd.f32 %v3980, %v4164
    %v4166 = vpop.f32.mrb[0].mxu0
    %4167 = vdwg.mxu0
    %4168 = vmatprep.subr.mxu0 0.0
    %v4169 = vand.u32 %v3099, 4294901760
    %4170 = vmatpush1.msra.mxu0 %v4169
    %4171 = vmatprep.subr.mxu0 0.0
    %v4172 = vand.u32 %v3100, 4294901760
    %4173 = vmatpush1.msra.mxu0 %v4172
    %4174 = vmatprep.subr.mxu0 0.0
    %v4175 = vand.u32 %v3101, 4294901760
    %4176 = vmatpush1.msra.mxu0 %v4175
    %4177 = vmatprep.subr.mxu0 0.0
    %v4178 = vand.u32 %v3102, 4294901760
    %4179 = vmatpush1.msra.mxu0 %v4178
    %4180 = vmatprep.subr.mxu0 0.0
    %v4181 = vand.u32 %v3103, 4294901760
    %4182 = vmatpush1.msra.mxu0 %v4181
    %4183 = vmatprep.subr.mxu0 0.0
    %v4184 = vand.u32 %v3104, 4294901760
    %4185 = vmatpush1.msra.mxu0 %v4184
    %4186 = vmatprep.subr.mxu0 0.0
    %v4187 = vand.u32 %v3105, 4294901760
    %4188 = vmatpush1.msra.mxu0 %v4187
    %4189 = vmatprep.subr.mxu0 0.0
    %v4190 = vand.u32 %v3106, 4294901760
    %4191 = vmatpush1.msra.mxu0 %v4190
    %4192 = vmatprep.subr.mxu0 0.0
    %4193 = vmatpush1.msra.mxu0 0.0
    %4194 = vmatprep.subr.mxu0 0.0
    %4195 = vmatpush1.msra.mxu0 0.0
    %4196 = vmatprep.subr.mxu0 0.0
    %4197 = vmatpush1.msra.mxu0 0.0
    %4198 = vmatprep.subr.mxu0 0.0
    %4199 = vmatpush1.msra.mxu0 0.0
    %4200 = vmatprep.subr.mxu0 0.0
    %4201 = vmatpush1.msra.mxu0 0.0
    %4202 = vmatprep.subr.mxu0 0.0
    %4203 = vmatpush1.msra.mxu0 0.0
    %4204 = vmatprep.subr.mxu0 0.0
    %4205 = vmatpush1.msra.mxu0 0.0
    %4206 = vmatprep.subr.mxu0 0.0
    %4207 = vmatpush1.msra.mxu0 0.0
    %4208 = vmatprep.subr.mxu0 0.0
    %4209 = vmatpush1.msra.mxu0 0.0
    %4210 = vmatprep.subr.mxu0 0.0
    %4211 = vmatpush1.msra.mxu0 0.0
    %4212 = vmatprep.subr.mxu0 0.0
    %4213 = vmatpush1.msra.mxu0 0.0
    %4214 = vmatprep.subr.mxu0 0.0
    %4215 = vmatpush1.msra.mxu0 0.0
    %4216 = vmatprep.subr.mxu0 0.0
    %4217 = vmatpush1.msra.mxu0 0.0
    %4218 = vmatprep.subr.mxu0 0.0
    %4219 = vmatpush1.msra.mxu0 0.0
    %4220 = vmatprep.subr.mxu0 0.0
    %4221 = vmatpush1.msra.mxu0 0.0
    %4222 = vmatprep.subr.mxu0 0.0
    %4223 = vmatpush1.msra.mxu0 0.0
    %4224 = vmatprep.subr.mxu0 0.0
    %4225 = vmatpush1.msra.mxu0 0.0
    %4226 = vmatprep.subr.mxu0 0.0
    %4227 = vmatpush1.msra.mxu0 0.0
    %4228 = vmatprep.subr.mxu0 0.0
    %4229 = vmatpush1.msra.mxu0 0.0
    %4230 = vmatprep.subr.mxu0 0.0
    %4231 = vmatpush1.msra.mxu0 0.0
    %4232 = vmatprep.subr.mxu0 0.0
    %4233 = vmatpush1.msra.mxu0 0.0
    %4234 = vmatprep.subr.mxu0 0.0
    %4235 = vmatpush1.msra.mxu0 0.0
    %4236 = vmatprep.subr.mxu0 0.0
    %4237 = vmatpush1.msra.mxu0 0.0
    %4238 = vmatprep.subr.mxu0 0.0
    %4239 = vmatpush1.msra.mxu0 0.0
    %4240 = vmatprep.mubr.f32.mxu0 0.0
    %v4241 = vand.u32 %v3108, 4294901760
    %4242 = vmatmul.mubr.f32.gmra.mrb[0].mxu0 %v4241
    %v4243 = vpop.f32.mrb[0].mxu0
    %v4244 = vadd.f32 %v4075, %v4243
    %v4245 = vpop.f32.mrb[0].mxu0
    %4246 = vmatprep.mubr.f32.mxu0 0.0
    %v4247 = vand.u32 %v3111, 4294901760
    %4248 = vmatmul.mubr.f32.gmra.mrb[0].mxu0 %v4247
    %v4249 = vpop.f32.mrb[0].mxu0
    %v4250 = vadd.f32 %v4081, %v4249
    %v4251 = vpop.f32.mrb[0].mxu0
    %4252 = vmatprep.mubr.f32.mxu0 0.0
    %v4253 = vand.u32 %v3114, 4294901760
    %4254 = vmatmul.mubr.f32.gmra.mrb[0].mxu0 %v4253
    %v4255 = vpop.f32.mrb[0].mxu0
    %v4256 = vadd.f32 %v4087, %v4255
    %v4257 = vpop.f32.mrb[0].mxu0
    %4258 = vmatprep.mubr.f32.mxu0 0.0
    %v4259 = vand.u32 %v3117, 4294901760
    %4260 = vmatmul.mubr.f32.gmra.mrb[0].mxu0 %v4259
    %v4261 = vpop.f32.mrb[0].mxu0
    %v4262 = vadd.f32 %v4093, %v4261
    %v4263 = vpop.f32.mrb[0].mxu0
    %4264 = vmatprep.mubr.f32.mxu0 0.0
    %v4265 = vand.u32 %v3120, 4294901760
    %4266 = vmatmul.mubr.f32.gmra.mrb[0].mxu0 %v4265
    %v4267 = vpop.f32.mrb[0].mxu0
    %v4268 = vadd.f32 %v4099, %v4267
    %v4269 = vpop.f32.mrb[0].mxu0
    %4270 = vmatprep.mubr.f32.mxu0 0.0
    %v4271 = vand.u32 %v3123, 4294901760
    %4272 = vmatmul.mubr.f32.gmra.mrb[0].mxu0 %v4271
    %v4273 = vpop.f32.mrb[0].mxu0
    %v4274 = vadd.f32 %v4105, %v4273
    %v4275 = vpop.f32.mrb[0].mxu0
    %4276 = vmatprep.mubr.f32.mxu0 0.0
    %v4277 = vand.u32 %v3126, 4294901760
    %4278 = vmatmul.mubr.f32.gmra.mrb[0].mxu0 %v4277
    %v4279 = vpop.f32.mrb[0].mxu0
    %v4280 = vadd.f32 %v4111, %v4279
    %v4281 = vpop.f32.mrb[0].mxu0
    %4282 = vmatprep.mubr.f32.mxu0 0.0
    %v4283 = vand.u32 %v3129, 4294901760
    %4284 = vmatmul.mubr.f32.gmra.mrb[0].mxu0 %v4283
    %v4285 = vpop.f32.mrb[0].mxu0
    %v4286 = vadd.f32 %v4117, %v4285
    %v4287 = vpop.f32.mrb[0].mxu0
    %4288 = vmatprep.mubr.f32.mxu0 0.0
    %v4289 = vand.u32 %v3132, 4294901760
    %4290 = vmatmul.mubr.f32.gmra.mrb[0].mxu0 %v4289
    %v4291 = vpop.f32.mrb[0].mxu0
    %v4292 = vadd.f32 %v4123, %v4291
    %v4293 = vpop.f32.mrb[0].mxu0
    %4294 = vmatprep.mubr.f32.mxu0 0.0
    %v4295 = vand.u32 %v3135, 4294901760
    %4296 = vmatmul.mubr.f32.gmra.mrb[0].mxu0 %v4295
    %v4297 = vpop.f32.mrb[0].mxu0
    %v4298 = vadd.f32 %v4129, %v4297
    %v4299 = vpop.f32.mrb[0].mxu0
    %4300 = vmatprep.mubr.f32.mxu0 0.0
    %v4301 = vand.u32 %v3138, 4294901760
    %4302 = vmatmul.mubr.f32.gmra.mrb[0].mxu0 %v4301
    %v4303 = vpop.f32.mrb[0].mxu0
    %v4304 = vadd.f32 %v4135, %v4303
    %v4305 = vpop.f32.mrb[0].mxu0
    %4306 = vmatprep.mubr.f32.mxu0 0.0
    %v4307 = vand.u32 %v3141, 4294901760
    %4308 = vmatmul.mubr.f32.gmra.mrb[0].mxu0 %v4307
    %v4309 = vpop.f32.mrb[0].mxu0
    %v4310 = vadd.f32 %v4141, %v4309
    %v4311 = vpop.f32.mrb[0].mxu0
    %4312 = vmatprep.mubr.f32.mxu0 0.0
    %v4313 = vand.u32 %v3144, 4294901760
    %4314 = vmatmul.mubr.f32.gmra.mrb[0].mxu0 %v4313
    %v4315 = vpop.f32.mrb[0].mxu0
    %v4316 = vadd.f32 %v4147, %v4315
    %v4317 = vpop.f32.mrb[0].mxu0
    %4318 = vmatprep.mubr.f32.mxu0 0.0
    %v4319 = vand.u32 %v3147, 4294901760
    %4320 = vmatmul.mubr.f32.gmra.mrb[0].mxu0 %v4319
    %v4321 = vpop.f32.mrb[0].mxu0
    %v4322 = vadd.f32 %v4153, %v4321
    %v4323 = vpop.f32.mrb[0].mxu0
    %4324 = vmatprep.mubr.f32.mxu0 0.0
    %v4325 = vand.u32 %v3150, 4294901760
    %4326 = vmatmul.mubr.f32.gmra.mrb[0].mxu0 %v4325
    %v4327 = vpop.f32.mrb[0].mxu0
    %v4328 = vadd.f32 %v4159, %v4327
    %v4329 = vpop.f32.mrb[0].mxu0
    %4330 = vmatprep.mubr.f32.mxu0 0.0
    %v4331 = vand.u32 %v3153, 4294901760
    %4332 = vmatmul.mubr.f32.gmra.mrb[0].mxu0 %v4331
    %v4333 = vpop.f32.mrb[0].mxu0
    %v4334 = vadd.f32 %v4165, %v4333
    %v4335 = vpop.f32.mrb[0].mxu0
    %4336 = vdwg.mxu0
    %v4337 = vadd.f32 %v2957, %v4244
    %v4338 = vadd.f32 %v2963, %v4250
    %v4339 = vadd.f32 %v2969, %v4256
    %v4340 = vadd.f32 %v2975, %v4262
    %v4341 = vadd.f32 %v2981, %v4268
    %v4342 = vadd.f32 %v2987, %v4274
    %v4343 = vadd.f32 %v2993, %v4280
    %v4344 = vadd.f32 %v2999, %v4286
    %v4345 = vadd.f32 %v3005, %v4292
    %v4346 = vadd.f32 %v3011, %v4298
    %v4347 = vadd.f32 %v3017, %v4304
    %v4348 = vadd.f32 %v3023, %v4310
    %v4349 = vadd.f32 %v3029, %v4316
    %v4350 = vadd.f32 %v3035, %v4322
    %v4351 = vadd.f32 %v3041, %v4328
    %v4352 = vadd.f32 %v3047, %v4334
    %vm4353 = vmand %vm267, %vm475
    %vm4354 = vmand %vm268, %vm476
    %vm4355 = vmand %vm269, %vm477
    %vm4356 = vmand %vm270, %vm478
    %vm4357 = vmand %vm271, %vm479
    %vm4358 = vmand %vm272, %vm480
    %vm4359 = vmand %vm273, %vm481
    %vm4360 = vmand %vm274, %vm482
    %vm4361 = vmand %vm275, %vm483
    %vm4362 = vmand %vm276, %vm484
    %vm4363 = vmand %vm277, %vm485
    %vm4364 = vmand %vm278, %vm486
    %vm4365 = vmand %vm279, %vm487
    %vm4366 = vmand %vm280, %vm488
    %vm4367 = vmand %vm281, %vm489
    %vm4368 = vmand %vm282, %vm490
    %v4369 = vsel %vm4353, 1, 0
    %v4370 = vsel %vm4354, 1, 0
    %v4371 = vsel %vm4355, 1, 0
    %v4372 = vsel %vm4356, 1, 0
    %v4373 = vsel %vm4357, 1, 0
    %v4374 = vsel %vm4358, 1, 0
    %v4375 = vsel %vm4359, 1, 0
    %v4376 = vsel %vm4360, 1, 0
    %v4377 = vsel %vm4361, 1, 0
    %v4378 = vsel %vm4362, 1, 0
    %v4379 = vsel %vm4363, 1, 0
    %v4380 = vsel %vm4364, 1, 0
    %v4381 = vsel %vm4365, 1, 0
    %v4382 = vsel %vm4366, 1, 0
    %v4383 = vsel %vm4367, 1, 0
    %v4384 = vsel %vm4368, 1, 0
    %vm4385 = vcmp.eq.s32.totalorder %v4369, 1
    %vm4386 = vcmp.eq.s32.totalorder %v4370, 1
    %vm4387 = vcmp.eq.s32.totalorder %v4371, 1
    %vm4388 = vcmp.eq.s32.totalorder %v4372, 1
    %vm4389 = vcmp.eq.s32.totalorder %v4373, 1
    %vm4390 = vcmp.eq.s32.totalorder %v4374, 1
    %vm4391 = vcmp.eq.s32.totalorder %v4375, 1
    %vm4392 = vcmp.eq.s32.totalorder %v4376, 1
    %vm4393 = vcmp.eq.s32.totalorder %v4377, 1
    %vm4394 = vcmp.eq.s32.totalorder %v4378, 1
    %vm4395 = vcmp.eq.s32.totalorder %v4379, 1
    %vm4396 = vcmp.eq.s32.totalorder %v4380, 1
    %vm4397 = vcmp.eq.s32.totalorder %v4381, 1
    %vm4398 = vcmp.eq.s32.totalorder %v4382, 1
    %vm4399 = vcmp.eq.s32.totalorder %v4383, 1
    %vm4400 = vcmp.eq.s32.totalorder %v4384, 1
    %v4401 = vsel %vm4385, %v529, 0.0
    %v4402 = vsel %vm4386, %v528, 0.0
    %v4403 = vsel %vm4387, %v527, 0.0
    %v4404 = vsel %vm4388, %v526, 0.0
    %v4405 = vsel %vm4389, %v525, 0.0
    %v4406 = vsel %vm4390, %v524, 0.0
    %v4407 = vsel %vm4391, %v523, 0.0
    %v4408 = vsel %vm4392, %v522, 0.0
    %v4409 = vsel %vm4393, %v521, 0.0
    %v4410 = vsel %vm4394, %v520, 0.0
    %v4411 = vsel %vm4395, %v519, 0.0
    %v4412 = vsel %vm4396, %v518, 0.0
    %v4413 = vsel %vm4397, %v517, 0.0
    %v4414 = vsel %vm4398, %v516, 0.0
    %v4415 = vsel %vm4399, %v531, 0.0
    %v4416 = vsel %vm4400, %v530, 0.0
    %s4417 = scalar_lea.vmem [#allocation4], 192
    %v4418 = vld [vmem:[%s4417] sm:$0xff]
    %v4419 = vld [vmem:[%s4417 + $0x8] sm:$0xff]
    %v4420 = vld [vmem:[%s4417 + $0x10] sm:$0xff]
    %v4421 = vld [vmem:[%s4417 + $0x18] sm:$0xff]
    %v4422 = vld [vmem:[%s4417 + $0x20] sm:$0xff]
    %v4423 = vld [vmem:[%s4417 + $0x28] sm:$0xff]
    %v4424 = vld [vmem:[%s4417 + $0x30] sm:$0xff]
    %v4425 = vld [vmem:[%s4417 + $0x38] sm:$0xff]
    %v4427 = vsel %vm589, %v4401, 0
    %v4430 = vsel %vm589, %v4402, 0
    %v4433 = vsel %vm589, %v4403, 0
    %v4436 = vsel %vm589, %v4404, 0
    %v4439 = vsel %vm589, %v4405, 0
    %v4442 = vsel %vm589, %v4406, 0
    %v4445 = vsel %vm589, %v4407, 0
    %v4448 = vsel %vm589, %v4408, 0
    %v4451 = vsel %vm589, %v4409, 0
    %v4454 = vsel %vm589, %v4410, 0
    %v4457 = vsel %vm589, %v4411, 0
    %v4460 = vsel %vm589, %v4412, 0
    %v4463 = vsel %vm589, %v4413, 0
    %v4466 = vsel %vm589, %v4414, 0
    %v4469 = vsel %vm589, %v4415, 0
    %v4472 = vsel %vm589, %v4416, 0
    %4474 = vmatprep.subr.mxu0 0.0
    %v4475 = vand.u32 %v4418, 4294901760
    %4476 = vmatpush1.msra.mxu0 %v4475
    %4477 = vmatprep.subr.mxu0 0.0
    %v4478 = vand.u32 %v4419, 4294901760
    %4479 = vmatpush1.msra.mxu0 %v4478
    %4480 = vmatprep.subr.mxu0 0.0
    %v4481 = vand.u32 %v4420, 4294901760
    %4482 = vmatpush1.msra.mxu0 %v4481
    %4483 = vmatprep.subr.mxu0 0.0
    %v4484 = vand.u32 %v4421, 4294901760
    %4485 = vmatpush1.msra.mxu0 %v4484
    %4486 = vmatprep.subr.mxu0 0.0
    %v4487 = vand.u32 %v4422, 4294901760
    %4488 = vmatpush1.msra.mxu0 %v4487
    %4489 = vmatprep.subr.mxu0 0.0
    %v4490 = vand.u32 %v4423, 4294901760
    %4491 = vmatpush1.msra.mxu0 %v4490
    %4492 = vmatprep.subr.mxu0 0.0
    %v4493 = vand.u32 %v4424, 4294901760
    %4494 = vmatpush1.msra.mxu0 %v4493
    %4495 = vmatprep.subr.mxu0 0.0
    %v4496 = vand.u32 %v4425, 4294901760
    %4497 = vmatpush1.msra.mxu0 %v4496
    %4498 = vmatprep.subr.mxu0 0.0
    %4499 = vmatpush1.msra.mxu0 0.0
    %4500 = vmatprep.subr.mxu0 0.0
    %4501 = vmatpush1.msra.mxu0 0.0
    %4502 = vmatprep.subr.mxu0 0.0
    %4503 = vmatpush1.msra.mxu0 0.0
    %4504 = vmatprep.subr.mxu0 0.0
    %4505 = vmatpush1.msra.mxu0 0.0
    %4506 = vmatprep.subr.mxu0 0.0
    %4507 = vmatpush1.msra.mxu0 0.0
    %4508 = vmatprep.subr.mxu0 0.0
    %4509 = vmatpush1.msra.mxu0 0.0
    %4510 = vmatprep.subr.mxu0 0.0
    %4511 = vmatpush1.msra.mxu0 0.0
    %4512 = vmatprep.subr.mxu0 0.0
    %4513 = vmatpush1.msra.mxu0 0.0
    %4514 = vmatprep.subr.mxu0 0.0
    %4515 = vmatpush1.msra.mxu0 0.0
    %4516 = vmatprep.subr.mxu0 0.0
    %4517 = vmatpush1.msra.mxu0 0.0
    %4518 = vmatprep.subr.mxu0 0.0
    %4519 = vmatpush1.msra.mxu0 0.0
    %4520 = vmatprep.subr.mxu0 0.0
    %4521 = vmatpush1.msra.mxu0 0.0
    %4522 = vmatprep.subr.mxu0 0.0
    %4523 = vmatpush1.msra.mxu0 0.0
    %4524 = vmatprep.subr.mxu0 0.0
    %4525 = vmatpush1.msra.mxu0 0.0
    %4526 = vmatprep.subr.mxu0 0.0
    %4527 = vmatpush1.msra.mxu0 0.0
    %4528 = vmatprep.subr.mxu0 0.0
    %4529 = vmatpush1.msra.mxu0 0.0
    %4530 = vmatprep.subr.mxu0 0.0
    %4531 = vmatpush1.msra.mxu0 0.0
    %4532 = vmatprep.subr.mxu0 0.0
    %4533 = vmatpush1.msra.mxu0 0.0
    %4534 = vmatprep.subr.mxu0 0.0
    %4535 = vmatpush1.msra.mxu0 0.0
    %4536 = vmatprep.subr.mxu0 0.0
    %4537 = vmatpush1.msra.mxu0 0.0
    %4538 = vmatprep.subr.mxu0 0.0
    %4539 = vmatpush1.msra.mxu0 0.0
    %4540 = vmatprep.subr.mxu0 0.0
    %4541 = vmatpush1.msra.mxu0 0.0
    %4542 = vmatprep.subr.mxu0 0.0
    %4543 = vmatpush1.msra.mxu0 0.0
    %4544 = vmatprep.subr.mxu0 0.0
    %4545 = vmatpush1.msra.mxu0 0.0
    %4546 = vmatprep.mubr.f32.mxu0 0.0
    %v4547 = vand.u32 %v4427, 4294901760
    %v4548 = vsub.f32 %v4427, %v4547
    %v4549 = vand.u32 %v4548, 4294901760
    %v4550 = vsub.f32 %v4548, %v4549
    %v4551 = vand.u32 %v4550, 4294901760
    %4552 = vmatmul.mubr.f32.gmra.mrb[0].mxu0 %v4551
    %v4553 = vpop.f32.mrb[0].mxu0
    %v4554 = vadd.f32 0.0, %v4553
    %v4555 = vpop.f32.mrb[0].mxu0
    %4556 = vmatprep.mubr.f32.mxu0 0.0
    %v4557 = vand.u32 %v4430, 4294901760
    %v4558 = vsub.f32 %v4430, %v4557
    %v4559 = vand.u32 %v4558, 4294901760
    %v4560 = vsub.f32 %v4558, %v4559
    %v4561 = vand.u32 %v4560, 4294901760
    %4562 = vmatmul.mubr.f32.gmra.mrb[0].mxu0 %v4561
    %v4563 = vpop.f32.mrb[0].mxu0
    %v4564 = vadd.f32 0.0, %v4563
    %v4565 = vpop.f32.mrb[0].mxu0
    %4566 = vmatprep.mubr.f32.mxu0 0.0
    %v4567 = vand.u32 %v4433, 4294901760
    %v4568 = vsub.f32 %v4433, %v4567
    %v4569 = vand.u32 %v4568, 4294901760
    %v4570 = vsub.f32 %v4568, %v4569
    %v4571 = vand.u32 %v4570, 4294901760
    %4572 = vmatmul.mubr.f32.gmra.mrb[0].mxu0 %v4571
    %v4573 = vpop.f32.mrb[0].mxu0
    %v4574 = vadd.f32 0.0, %v4573
    %v4575 = vpop.f32.mrb[0].mxu0
    %4576 = vmatprep.mubr.f32.mxu0 0.0
    %v4577 = vand.u32 %v4436, 4294901760
    %v4578 = vsub.f32 %v4436, %v4577
    %v4579 = vand.u32 %v4578, 4294901760
    %v4580 = vsub.f32 %v4578, %v4579
    %v4581 = vand.u32 %v4580, 4294901760
    %4582 = vmatmul.mubr.f32.gmra.mrb[0].mxu0 %v4581
    %v4583 = vpop.f32.mrb[0].mxu0
    %v4584 = vadd.f32 0.0, %v4583
    %v4585 = vpop.f32.mrb[0].mxu0
    %4586 = vmatprep.mubr.f32.mxu0 0.0
    %v4587 = vand.u32 %v4439, 4294901760
    %v4588 = vsub.f32 %v4439, %v4587
    %v4589 = vand.u32 %v4588, 4294901760
    %v4590 = vsub.f32 %v4588, %v4589
    %v4591 = vand.u32 %v4590, 4294901760
    %4592 = vmatmul.mubr.f32.gmra.mrb[0].mxu0 %v4591
    %v4593 = vpop.f32.mrb[0].mxu0
    %v4594 = vadd.f32 0.0, %v4593
    %v4595 = vpop.f32.mrb[0].mxu0
    %4596 = vmatprep.mubr.f32.mxu0 0.0
    %v4597 = vand.u32 %v4442, 4294901760
    %v4598 = vsub.f32 %v4442, %v4597
    %v4599 = vand.u32 %v4598, 4294901760
    %v4600 = vsub.f32 %v4598, %v4599
    %v4601 = vand.u32 %v4600, 4294901760
    %4602 = vmatmul.mubr.f32.gmra.mrb[0].mxu0 %v4601
    %v4603 = vpop.f32.mrb[0].mxu0
    %v4604 = vadd.f32 0.0, %v4603
    %v4605 = vpop.f32.mrb[0].mxu0
    %4606 = vmatprep.mubr.f32.mxu0 0.0
    %v4607 = vand.u32 %v4445, 4294901760
    %v4608 = vsub.f32 %v4445, %v4607
    %v4609 = vand.u32 %v4608, 4294901760
    %v4610 = vsub.f32 %v4608, %v4609
    %v4611 = vand.u32 %v4610, 4294901760
    %4612 = vmatmul.mubr.f32.gmra.mrb[0].mxu0 %v4611
    %v4613 = vpop.f32.mrb[0].mxu0
    %v4614 = vadd.f32 0.0, %v4613
    %v4615 = vpop.f32.mrb[0].mxu0
    %4616 = vmatprep.mubr.f32.mxu0 0.0
    %v4617 = vand.u32 %v4448, 4294901760
    %v4618 = vsub.f32 %v4448, %v4617
    %v4619 = vand.u32 %v4618, 4294901760
    %v4620 = vsub.f32 %v4618, %v4619
    %v4621 = vand.u32 %v4620, 4294901760
    %4622 = vmatmul.mubr.f32.gmra.mrb[0].mxu0 %v4621
    %v4623 = vpop.f32.mrb[0].mxu0
    %v4624 = vadd.f32 0.0, %v4623
    %v4625 = vpop.f32.mrb[0].mxu0
    %4626 = vmatprep.mubr.f32.mxu0 0.0
    %v4627 = vand.u32 %v4451, 4294901760
    %v4628 = vsub.f32 %v4451, %v4627
    %v4629 = vand.u32 %v4628, 4294901760
    %v4630 = vsub.f32 %v4628, %v4629
    %v4631 = vand.u32 %v4630, 4294901760
    %4632 = vmatmul.mubr.f32.gmra.mrb[0].mxu0 %v4631
    %v4633 = vpop.f32.mrb[0].mxu0
    %v4634 = vadd.f32 0.0, %v4633
    %v4635 = vpop.f32.mrb[0].mxu0
    %4636 = vmatprep.mubr.f32.mxu0 0.0
    %v4637 = vand.u32 %v4454, 4294901760
    %v4638 = vsub.f32 %v4454, %v4637
    %v4639 = vand.u32 %v4638, 4294901760
    %v4640 = vsub.f32 %v4638, %v4639
    %v4641 = vand.u32 %v4640, 4294901760
    %4642 = vmatmul.mubr.f32.gmra.mrb[0].mxu0 %v4641
    %v4643 = vpop.f32.mrb[0].mxu0
    %v4644 = vadd.f32 0.0, %v4643
    %v4645 = vpop.f32.mrb[0].mxu0
    %4646 = vmatprep.mubr.f32.mxu0 0.0
    %v4647 = vand.u32 %v4457, 4294901760
    %v4648 = vsub.f32 %v4457, %v4647
    %v4649 = vand.u32 %v4648, 4294901760
    %v4650 = vsub.f32 %v4648, %v4649
    %v4651 = vand.u32 %v4650, 4294901760
    %4652 = vmatmul.mubr.f32.gmra.mrb[0].mxu0 %v4651
    %v4653 = vpop.f32.mrb[0].mxu0
    %v4654 = vadd.f32 0.0, %v4653
    %v4655 = vpop.f32.mrb[0].mxu0
    %4656 = vmatprep.mubr.f32.mxu0 0.0
    %v4657 = vand.u32 %v4460, 4294901760
    %v4658 = vsub.f32 %v4460, %v4657
    %v4659 = vand.u32 %v4658, 4294901760
    %v4660 = vsub.f32 %v4658, %v4659
    %v4661 = vand.u32 %v4660, 4294901760
    %4662 = vmatmul.mubr.f32.gmra.mrb[0].mxu0 %v4661
    %v4663 = vpop.f32.mrb[0].mxu0
    %v4664 = vadd.f32 0.0, %v4663
    %v4665 = vpop.f32.mrb[0].mxu0
    %4666 = vmatprep.mubr.f32.mxu0 0.0
    %v4667 = vand.u32 %v4463, 4294901760
    %v4668 = vsub.f32 %v4463, %v4667
    %v4669 = vand.u32 %v4668, 4294901760
    %v4670 = vsub.f32 %v4668, %v4669
    %v4671 = vand.u32 %v4670, 4294901760
    %4672 = vmatmul.mubr.f32.gmra.mrb[0].mxu0 %v4671
    %v4673 = vpop.f32.mrb[0].mxu0
    %v4674 = vadd.f32 0.0, %v4673
    %v4675 = vpop.f32.mrb[0].mxu0
    %4676 = vmatprep.mubr.f32.mxu0 0.0
    %v4677 = vand.u32 %v4466, 4294901760
    %v4678 = vsub.f32 %v4466, %v4677
    %v4679 = vand.u32 %v4678, 4294901760
    %v4680 = vsub.f32 %v4678, %v4679
    %v4681 = vand.u32 %v4680, 4294901760
    %4682 = vmatmul.mubr.f32.gmra.mrb[0].mxu0 %v4681
    %v4683 = vpop.f32.mrb[0].mxu0
    %v4684 = vadd.f32 0.0, %v4683
    %v4685 = vpop.f32.mrb[0].mxu0
    %4686 = vmatprep.mubr.f32.mxu0 0.0
    %v4687 = vand.u32 %v4469, 4294901760
    %v4688 = vsub.f32 %v4469, %v4687
    %v4689 = vand.u32 %v4688, 4294901760
    %v4690 = vsub.f32 %v4688, %v4689
    %v4691 = vand.u32 %v4690, 4294901760
    %4692 = vmatmul.mubr.f32.gmra.mrb[0].mxu0 %v4691
    %v4693 = vpop.f32.mrb[0].mxu0
    %v4694 = vadd.f32 0.0, %v4693
    %v4695 = vpop.f32.mrb[0].mxu0
    %4696 = vmatprep.mubr.f32.mxu0 0.0
    %v4697 = vand.u32 %v4472, 4294901760
    %v4698 = vsub.f32 %v4472, %v4697
    %v4699 = vand.u32 %v4698, 4294901760
    %v4700 = vsub.f32 %v4698, %v4699
    %v4701 = vand.u32 %v4700, 4294901760
    %4702 = vmatmul.mubr.f32.gmra.mrb[0].mxu0 %v4701
    %v4703 = vpop.f32.mrb[0].mxu0
    %v4704 = vadd.f32 0.0, %v4703
    %v4705 = vpop.f32.mrb[0].mxu0
    %4706 = vdwg.mxu0
    %4707 = vmatprep.subr.mxu0 0.0
    %v4708 = vand.u32 %v4418, 4294901760
    %v4709 = vsub.f32 %v4418, %v4708
    %v4710 = vand.u32 %v4709, 4294901760
    %v4711 = vsub.f32 %v4709, %v4710
    %v4712 = vand.u32 %v4711, 4294901760
    %4713 = vmatpush1.msra.mxu0 %v4712
    %4714 = vmatprep.subr.mxu0 0.0
    %v4715 = vand.u32 %v4419, 4294901760
    %v4716 = vsub.f32 %v4419, %v4715
    %v4717 = vand.u32 %v4716, 4294901760
    %v4718 = vsub.f32 %v4716, %v4717
    %v4719 = vand.u32 %v4718, 4294901760
    %4720 = vmatpush1.msra.mxu0 %v4719
    %4721 = vmatprep.subr.mxu0 0.0
    %v4722 = vand.u32 %v4420, 4294901760
    %v4723 = vsub.f32 %v4420, %v4722
    %v4724 = vand.u32 %v4723, 4294901760
    %v4725 = vsub.f32 %v4723, %v4724
    %v4726 = vand.u32 %v4725, 4294901760
    %4727 = vmatpush1.msra.mxu0 %v4726
    %4728 = vmatprep.subr.mxu0 0.0
    %v4729 = vand.u32 %v4421, 4294901760
    %v4730 = vsub.f32 %v4421, %v4729
    %v4731 = vand.u32 %v4730, 4294901760
    %v4732 = vsub.f32 %v4730, %v4731
    %v4733 = vand.u32 %v4732, 4294901760
    %4734 = vmatpush1.msra.mxu0 %v4733
    %4735 = vmatprep.subr.mxu0 0.0
    %v4736 = vand.u32 %v4422, 4294901760
    %v4737 = vsub.f32 %v4422, %v4736
    %v4738 = vand.u32 %v4737, 4294901760
    %v4739 = vsub.f32 %v4737, %v4738
    %v4740 = vand.u32 %v4739, 4294901760
    %4741 = vmatpush1.msra.mxu0 %v4740
    %4742 = vmatprep.subr.mxu0 0.0
    %v4743 = vand.u32 %v4423, 4294901760
    %v4744 = vsub.f32 %v4423, %v4743
    %v4745 = vand.u32 %v4744, 4294901760
    %v4746 = vsub.f32 %v4744, %v4745
    %v4747 = vand.u32 %v4746, 4294901760
    %4748 = vmatpush1.msra.mxu0 %v4747
    %4749 = vmatprep.subr.mxu0 0.0
    %v4750 = vand.u32 %v4424, 4294901760
    %v4751 = vsub.f32 %v4424, %v4750
    %v4752 = vand.u32 %v4751, 4294901760
    %v4753 = vsub.f32 %v4751, %v4752
    %v4754 = vand.u32 %v4753, 4294901760
    %4755 = vmatpush1.msra.mxu0 %v4754
    %4756 = vmatprep.subr.mxu0 0.0
    %v4757 = vand.u32 %v4425, 4294901760
    %v4758 = vsub.f32 %v4425, %v4757
    %v4759 = vand.u32 %v4758, 4294901760
    %v4760 = vsub.f32 %v4758, %v4759
    %v4761 = vand.u32 %v4760, 4294901760
    %4762 = vmatpush1.msra.mxu0 %v4761
    %4763 = vmatprep.subr.mxu0 0.0
    %4764 = vmatpush1.msra.mxu0 0.0
    %4765 = vmatprep.subr.mxu0 0.0
    %4766 = vmatpush1.msra.mxu0 0.0
    %4767 = vmatprep.subr.mxu0 0.0
    %4768 = vmatpush1.msra.mxu0 0.0
    %4769 = vmatprep.subr.mxu0 0.0
    %4770 = vmatpush1.msra.mxu0 0.0
    %4771 = vmatprep.subr.mxu0 0.0
    %4772 = vmatpush1.msra.mxu0 0.0
    %4773 = vmatprep.subr.mxu0 0.0
    %4774 = vmatpush1.msra.mxu0 0.0
    %4775 = vmatprep.subr.mxu0 0.0
    %4776 = vmatpush1.msra.mxu0 0.0
    %4777 = vmatprep.subr.mxu0 0.0
    %4778 = vmatpush1.msra.mxu0 0.0
    %4779 = vmatprep.subr.mxu0 0.0
    %4780 = vmatpush1.msra.mxu0 0.0
    %4781 = vmatprep.subr.mxu0 0.0
    %4782 = vmatpush1.msra.mxu0 0.0
    %4783 = vmatprep.subr.mxu0 0.0
    %4784 = vmatpush1.msra.mxu0 0.0
    %4785 = vmatprep.subr.mxu0 0.0
    %4786 = vmatpush1.msra.mxu0 0.0
    %4787 = vmatprep.subr.mxu0 0.0
    %4788 = vmatpush1.msra.mxu0 0.0
    %4789 = vmatprep.subr.mxu0 0.0
    %4790 = vmatpush1.msra.mxu0 0.0
    %4791 = vmatprep.subr.mxu0 0.0
    %4792 = vmatpush1.msra.mxu0 0.0
    %4793 = vmatprep.subr.mxu0 0.0
    %4794 = vmatpush1.msra.mxu0 0.0
    %4795 = vmatprep.subr.mxu0 0.0
    %4796 = vmatpush1.msra.mxu0 0.0
    %4797 = vmatprep.subr.mxu0 0.0
    %4798 = vmatpush1.msra.mxu0 0.0
    %4799 = vmatprep.subr.mxu0 0.0
    %4800 = vmatpush1.msra.mxu0 0.0
    %4801 = vmatprep.subr.mxu0 0.0
    %4802 = vmatpush1.msra.mxu0 0.0
    %4803 = vmatprep.subr.mxu0 0.0
    %4804 = vmatpush1.msra.mxu0 0.0
    %4805 = vmatprep.subr.mxu0 0.0
    %4806 = vmatpush1.msra.mxu0 0.0
    %4807 = vmatprep.subr.mxu0 0.0
    %4808 = vmatpush1.msra.mxu0 0.0
    %4809 = vmatprep.subr.mxu0 0.0
    %4810 = vmatpush1.msra.mxu0 0.0
    %4811 = vmatprep.mubr.f32.mxu0 0.0
    %v4812 = vand.u32 %v4427, 4294901760
    %4813 = vmatmul.mubr.f32.gmra.mrb[0].mxu0 %v4812
    %v4814 = vpop.f32.mrb[0].mxu0
    %v4815 = vadd.f32 %v4554, %v4814
    %v4816 = vpop.f32.mrb[0].mxu0
    %4817 = vmatprep.mubr.f32.mxu0 0.0
    %v4818 = vand.u32 %v4430, 4294901760
    %4819 = vmatmul.mubr.f32.gmra.mrb[0].mxu0 %v4818
    %v4820 = vpop.f32.mrb[0].mxu0
    %v4821 = vadd.f32 %v4564, %v4820
    %v4822 = vpop.f32.mrb[0].mxu0
    %4823 = vmatprep.mubr.f32.mxu0 0.0
    %v4824 = vand.u32 %v4433, 4294901760
    %4825 = vmatmul.mubr.f32.gmra.mrb[0].mxu0 %v4824
    %v4826 = vpop.f32.mrb[0].mxu0
    %v4827 = vadd.f32 %v4574, %v4826
    %v4828 = vpop.f32.mrb[0].mxu0
    %4829 = vmatprep.mubr.f32.mxu0 0.0
    %v4830 = vand.u32 %v4436, 4294901760
    %4831 = vmatmul.mubr.f32.gmra.mrb[0].mxu0 %v4830
    %v4832 = vpop.f32.mrb[0].mxu0
    %v4833 = vadd.f32 %v4584, %v4832
    %v4834 = vpop.f32.mrb[0].mxu0
    %4835 = vmatprep.mubr.f32.mxu0 0.0
    %v4836 = vand.u32 %v4439, 4294901760
    %4837 = vmatmul.mubr.f32.gmra.mrb[0].mxu0 %v4836
    %v4838 = vpop.f32.mrb[0].mxu0
    %v4839 = vadd.f32 %v4594, %v4838
    %v4840 = vpop.f32.mrb[0].mxu0
    %4841 = vmatprep.mubr.f32.mxu0 0.0
    %v4842 = vand.u32 %v4442, 4294901760
    %4843 = vmatmul.mubr.f32.gmra.mrb[0].mxu0 %v4842
    %v4844 = vpop.f32.mrb[0].mxu0
    %v4845 = vadd.f32 %v4604, %v4844
    %v4846 = vpop.f32.mrb[0].mxu0
    %4847 = vmatprep.mubr.f32.mxu0 0.0
    %v4848 = vand.u32 %v4445, 4294901760
    %4849 = vmatmul.mubr.f32.gmra.mrb[0].mxu0 %v4848
    %v4850 = vpop.f32.mrb[0].mxu0
    %v4851 = vadd.f32 %v4614, %v4850
    %v4852 = vpop.f32.mrb[0].mxu0
    %4853 = vmatprep.mubr.f32.mxu0 0.0
    %v4854 = vand.u32 %v4448, 4294901760
    %4855 = vmatmul.mubr.f32.gmra.mrb[0].mxu0 %v4854
    %v4856 = vpop.f32.mrb[0].mxu0
    %v4857 = vadd.f32 %v4624, %v4856
    %v4858 = vpop.f32.mrb[0].mxu0
    %4859 = vmatprep.mubr.f32.mxu0 0.0
    %v4860 = vand.u32 %v4451, 4294901760
    %4861 = vmatmul.mubr.f32.gmra.mrb[0].mxu0 %v4860
    %v4862 = vpop.f32.mrb[0].mxu0
    %v4863 = vadd.f32 %v4634, %v4862
    %v4864 = vpop.f32.mrb[0].mxu0
    %4865 = vmatprep.mubr.f32.mxu0 0.0
    %v4866 = vand.u32 %v4454, 4294901760
    %4867 = vmatmul.mubr.f32.gmra.mrb[0].mxu0 %v4866
    %v4868 = vpop.f32.mrb[0].mxu0
    %v4869 = vadd.f32 %v4644, %v4868
    %v4870 = vpop.f32.mrb[0].mxu0
    %4871 = vmatprep.mubr.f32.mxu0 0.0
    %v4872 = vand.u32 %v4457, 4294901760
    %4873 = vmatmul.mubr.f32.gmra.mrb[0].mxu0 %v4872
    %v4874 = vpop.f32.mrb[0].mxu0
    %v4875 = vadd.f32 %v4654, %v4874
    %v4876 = vpop.f32.mrb[0].mxu0
    %4877 = vmatprep.mubr.f32.mxu0 0.0
    %v4878 = vand.u32 %v4460, 4294901760
    %4879 = vmatmul.mubr.f32.gmra.mrb[0].mxu0 %v4878
    %v4880 = vpop.f32.mrb[0].mxu0
    %v4881 = vadd.f32 %v4664, %v4880
    %v4882 = vpop.f32.mrb[0].mxu0
    %4883 = vmatprep.mubr.f32.mxu0 0.0
    %v4884 = vand.u32 %v4463, 4294901760
    %4885 = vmatmul.mubr.f32.gmra.mrb[0].mxu0 %v4884
    %v4886 = vpop.f32.mrb[0].mxu0
    %v4887 = vadd.f32 %v4674, %v4886
    %v4888 = vpop.f32.mrb[0].mxu0
    %4889 = vmatprep.mubr.f32.mxu0 0.0
    %v4890 = vand.u32 %v4466, 4294901760
    %4891 = vmatmul.mubr.f32.gmra.mrb[0].mxu0 %v4890
    %v4892 = vpop.f32.mrb[0].mxu0
    %v4893 = vadd.f32 %v4684, %v4892
    %v4894 = vpop.f32.mrb[0].mxu0
    %4895 = vmatprep.mubr.f32.mxu0 0.0
    %v4896 = vand.u32 %v4469, 4294901760
    %4897 = vmatmul.mubr.f32.gmra.mrb[0].mxu0 %v4896
    %v4898 = vpop.f32.mrb[0].mxu0
    %v4899 = vadd.f32 %v4694, %v4898
    %v4900 = vpop.f32.mrb[0].mxu0
    %4901 = vmatprep.mubr.f32.mxu0 0.0
    %v4902 = vand.u32 %v4472, 4294901760
    %4903 = vmatmul.mubr.f32.gmra.mrb[0].mxu0 %v4902
    %v4904 = vpop.f32.mrb[0].mxu0
    %v4905 = vadd.f32 %v4704, %v4904
    %v4906 = vpop.f32.mrb[0].mxu0
    %4907 = vdwg.mxu0
    %4908 = vmatprep.subr.mxu0 0.0
    %v4909 = vand.u32 %v4418, 4294901760
    %v4910 = vsub.f32 %v4418, %v4909
    %4911 = vmatpush1.msra.mxu0 %v4910
    %4912 = vmatprep.subr.mxu0 0.0
    %v4913 = vand.u32 %v4419, 4294901760
    %v4914 = vsub.f32 %v4419, %v4913
    %4915 = vmatpush1.msra.mxu0 %v4914
    %4916 = vmatprep.subr.mxu0 0.0
    %v4917 = vand.u32 %v4420, 4294901760
    %v4918 = vsub.f32 %v4420, %v4917
    %4919 = vmatpush1.msra.mxu0 %v4918
    %4920 = vmatprep.subr.mxu0 0.0
    %v4921 = vand.u32 %v4421, 4294901760
    %v4922 = vsub.f32 %v4421, %v4921
    %4923 = vmatpush1.msra.mxu0 %v4922
    %4924 = vmatprep.subr.mxu0 0.0
    %v4925 = vand.u32 %v4422, 4294901760
    %v4926 = vsub.f32 %v4422, %v4925
    %4927 = vmatpush1.msra.mxu0 %v4926
    %4928 = vmatprep.subr.mxu0 0.0
    %v4929 = vand.u32 %v4423, 4294901760
    %v4930 = vsub.f32 %v4423, %v4929
    %4931 = vmatpush1.msra.mxu0 %v4930
    %4932 = vmatprep.subr.mxu0 0.0
    %v4933 = vand.u32 %v4424, 4294901760
    %v4934 = vsub.f32 %v4424, %v4933
    %4935 = vmatpush1.msra.mxu0 %v4934
    %4936 = vmatprep.subr.mxu0 0.0
    %v4937 = vand.u32 %v4425, 4294901760
    %v4938 = vsub.f32 %v4425, %v4937
    %4939 = vmatpush1.msra.mxu0 %v4938
    %4940 = vmatprep.subr.mxu0 0.0
    %4941 = vmatpush1.msra.mxu0 0.0
    %4942 = vmatprep.subr.mxu0 0.0
    %4943 = vmatpush1.msra.mxu0 0.0
    %4944 = vmatprep.subr.mxu0 0.0
    %4945 = vmatpush1.msra.mxu0 0.0
    %4946 = vmatprep.subr.mxu0 0.0
    %4947 = vmatpush1.msra.mxu0 0.0
    %4948 = vmatprep.subr.mxu0 0.0
    %4949 = vmatpush1.msra.mxu0 0.0
    %4950 = vmatprep.subr.mxu0 0.0
    %4951 = vmatpush1.msra.mxu0 0.0
    %4952 = vmatprep.subr.mxu0 0.0
    %4953 = vmatpush1.msra.mxu0 0.0
    %4954 = vmatprep.subr.mxu0 0.0
    %4955 = vmatpush1.msra.mxu0 0.0
    %4956 = vmatprep.subr.mxu0 0.0
    %4957 = vmatpush1.msra.mxu0 0.0
    %4958 = vmatprep.subr.mxu0 0.0
    %4959 = vmatpush1.msra.mxu0 0.0
    %4960 = vmatprep.subr.mxu0 0.0
    %4961 = vmatpush1.msra.mxu0 0.0
    %4962 = vmatprep.subr.mxu0 0.0
    %4963 = vmatpush1.msra.mxu0 0.0
    %4964 = vmatprep.subr.mxu0 0.0
    %4965 = vmatpush1.msra.mxu0 0.0
    %4966 = vmatprep.subr.mxu0 0.0
    %4967 = vmatpush1.msra.mxu0 0.0
    %4968 = vmatprep.subr.mxu0 0.0
    %4969 = vmatpush1.msra.mxu0 0.0
    %4970 = vmatprep.subr.mxu0 0.0
    %4971 = vmatpush1.msra.mxu0 0.0
    %4972 = vmatprep.subr.mxu0 0.0
    %4973 = vmatpush1.msra.mxu0 0.0
    %4974 = vmatprep.subr.mxu0 0.0
    %4975 = vmatpush1.msra.mxu0 0.0
    %4976 = vmatprep.subr.mxu0 0.0
    %4977 = vmatpush1.msra.mxu0 0.0
    %4978 = vmatprep.subr.mxu0 0.0
    %4979 = vmatpush1.msra.mxu0 0.0
    %4980 = vmatprep.subr.mxu0 0.0
    %4981 = vmatpush1.msra.mxu0 0.0
    %4982 = vmatprep.subr.mxu0 0.0
    %4983 = vmatpush1.msra.mxu0 0.0
    %4984 = vmatprep.subr.mxu0 0.0
    %4985 = vmatpush1.msra.mxu0 0.0
    %4986 = vmatprep.subr.mxu0 0.0
    %4987 = vmatpush1.msra.mxu0 0.0
    %4988 = vmatprep.mubr.f32.mxu0 0.0
    %v4989 = vand.u32 %v4427, 4294901760
    %v4990 = vsub.f32 %v4427, %v4989
    %4991 = vmatmul.mubr.f32.gmra.mrb[0].mxu0 %v4990
    %v4992 = vpop.f32.mrb[0].mxu0
    %v4993 = vadd.f32 %v4815, %v4992
    %v4994 = vpop.f32.mrb[0].mxu0
    %4995 = vmatprep.mubr.f32.mxu0 0.0
    %v4996 = vand.u32 %v4430, 4294901760
    %v4997 = vsub.f32 %v4430, %v4996
    %4998 = vmatmul.mubr.f32.gmra.mrb[0].mxu0 %v4997
    %v4999 = vpop.f32.mrb[0].mxu0
    %v5000 = vadd.f32 %v4821, %v4999
    %v5001 = vpop.f32.mrb[0].mxu0
    %5002 = vmatprep.mubr.f32.mxu0 0.0
    %v5003 = vand.u32 %v4433, 4294901760
    %v5004 = vsub.f32 %v4433, %v5003
    %5005 = vmatmul.mubr.f32.gmra.mrb[0].mxu0 %v5004
    %v5006 = vpop.f32.mrb[0].mxu0
    %v5007 = vadd.f32 %v4827, %v5006
    %v5008 = vpop.f32.mrb[0].mxu0
    %5009 = vmatprep.mubr.f32.mxu0 0.0
    %v5010 = vand.u32 %v4436, 4294901760
    %v5011 = vsub.f32 %v4436, %v5010
    %5012 = vmatmul.mubr.f32.gmra.mrb[0].mxu0 %v5011
    %v5013 = vpop.f32.mrb[0].mxu0
    %v5014 = vadd.f32 %v4833, %v5013
    %v5015 = vpop.f32.mrb[0].mxu0
    %5016 = vmatprep.mubr.f32.mxu0 0.0
    %v5017 = vand.u32 %v4439, 4294901760
    %v5018 = vsub.f32 %v4439, %v5017
    %5019 = vmatmul.mubr.f32.gmra.mrb[0].mxu0 %v5018
    %v5020 = vpop.f32.mrb[0].mxu0
    %v5021 = vadd.f32 %v4839, %v5020
    %v5022 = vpop.f32.mrb[0].mxu0
    %5023 = vmatprep.mubr.f32.mxu0 0.0
    %v5024 = vand.u32 %v4442, 4294901760
    %v5025 = vsub.f32 %v4442, %v5024
    %5026 = vmatmul.mubr.f32.gmra.mrb[0].mxu0 %v5025
    %v5027 = vpop.f32.mrb[0].mxu0
    %v5028 = vadd.f32 %v4845, %v5027
    %v5029 = vpop.f32.mrb[0].mxu0
    %5030 = vmatprep.mubr.f32.mxu0 0.0
    %v5031 = vand.u32 %v4445, 4294901760
    %v5032 = vsub.f32 %v4445, %v5031
    %5033 = vmatmul.mubr.f32.gmra.mrb[0].mxu0 %v5032
    %v5034 = vpop.f32.mrb[0].mxu0
    %v5035 = vadd.f32 %v4851, %v5034
    %v5036 = vpop.f32.mrb[0].mxu0
    %5037 = vmatprep.mubr.f32.mxu0 0.0
    %v5038 = vand.u32 %v4448, 4294901760
    %v5039 = vsub.f32 %v4448, %v5038
    %5040 = vmatmul.mubr.f32.gmra.mrb[0].mxu0 %v5039
    %v5041 = vpop.f32.mrb[0].mxu0
    %v5042 = vadd.f32 %v4857, %v5041
    %v5043 = vpop.f32.mrb[0].mxu0
    %5044 = vmatprep.mubr.f32.mxu0 0.0
    %v5045 = vand.u32 %v4451, 4294901760
    %v5046 = vsub.f32 %v4451, %v5045
    %5047 = vmatmul.mubr.f32.gmra.mrb[0].mxu0 %v5046
    %v5048 = vpop.f32.mrb[0].mxu0
    %v5049 = vadd.f32 %v4863, %v5048
    %v5050 = vpop.f32.mrb[0].mxu0
    %5051 = vmatprep.mubr.f32.mxu0 0.0
    %v5052 = vand.u32 %v4454, 4294901760
    %v5053 = vsub.f32 %v4454, %v5052
    %5054 = vmatmul.mubr.f32.gmra.mrb[0].mxu0 %v5053
    %v5055 = vpop.f32.mrb[0].mxu0
    %v5056 = vadd.f32 %v4869, %v5055
    %v5057 = vpop.f32.mrb[0].mxu0
    %5058 = vmatprep.mubr.f32.mxu0 0.0
    %v5059 = vand.u32 %v4457, 4294901760
    %v5060 = vsub.f32 %v4457, %v5059
    %5061 = vmatmul.mubr.f32.gmra.mrb[0].mxu0 %v5060
    %v5062 = vpop.f32.mrb[0].mxu0
    %v5063 = vadd.f32 %v4875, %v5062
    %v5064 = vpop.f32.mrb[0].mxu0
    %5065 = vmatprep.mubr.f32.mxu0 0.0
    %v5066 = vand.u32 %v4460, 4294901760
    %v5067 = vsub.f32 %v4460, %v5066
    %5068 = vmatmul.mubr.f32.gmra.mrb[0].mxu0 %v5067
    %v5069 = vpop.f32.mrb[0].mxu0
    %v5070 = vadd.f32 %v4881, %v5069
    %v5071 = vpop.f32.mrb[0].mxu0
    %5072 = vmatprep.mubr.f32.mxu0 0.0
    %v5073 = vand.u32 %v4463, 4294901760
    %v5074 = vsub.f32 %v4463, %v5073
    %5075 = vmatmul.mubr.f32.gmra.mrb[0].mxu0 %v5074
    %v5076 = vpop.f32.mrb[0].mxu0
    %v5077 = vadd.f32 %v4887, %v5076
    %v5078 = vpop.f32.mrb[0].mxu0
    %5079 = vmatprep.mubr.f32.mxu0 0.0
    %v5080 = vand.u32 %v4466, 4294901760
    %v5081 = vsub.f32 %v4466, %v5080
    %5082 = vmatmul.mubr.f32.gmra.mrb[0].mxu0 %v5081
    %v5083 = vpop.f32.mrb[0].mxu0
    %v5084 = vadd.f32 %v4893, %v5083
    %v5085 = vpop.f32.mrb[0].mxu0
    %5086 = vmatprep.mubr.f32.mxu0 0.0
    %v5087 = vand.u32 %v4469, 4294901760
    %v5088 = vsub.f32 %v4469, %v5087
    %5089 = vmatmul.mubr.f32.gmra.mrb[0].mxu0 %v5088
    %v5090 = vpop.f32.mrb[0].mxu0
    %v5091 = vadd.f32 %v4899, %v5090
    %v5092 = vpop.f32.mrb[0].mxu0
    %5093 = vmatprep.mubr.f32.mxu0 0.0
    %v5094 = vand.u32 %v4472, 4294901760
    %v5095 = vsub.f32 %v4472, %v5094
    %5096 = vmatmul.mubr.f32.gmra.mrb[0].mxu0 %v5095
    %v5097 = vpop.f32.mrb[0].mxu0
    %v5098 = vadd.f32 %v4905, %v5097
    %v5099 = vpop.f32.mrb[0].mxu0
    %5100 = vdwg.mxu0
    %5101 = vmatprep.subr.mxu0 0.0
    %v5102 = vand.u32 %v4418, 4294901760
    %5103 = vmatpush1.msra.mxu0 %v5102
    %5104 = vmatprep.subr.mxu0 0.0
    %v5105 = vand.u32 %v4419, 4294901760
    %5106 = vmatpush1.msra.mxu0 %v5105
    %5107 = vmatprep.subr.mxu0 0.0
    %v5108 = vand.u32 %v4420, 4294901760
    %5109 = vmatpush1.msra.mxu0 %v5108
    %5110 = vmatprep.subr.mxu0 0.0
    %v5111 = vand.u32 %v4421, 4294901760
    %5112 = vmatpush1.msra.mxu0 %v5111
    %5113 = vmatprep.subr.mxu0 0.0
    %v5114 = vand.u32 %v4422, 4294901760
    %5115 = vmatpush1.msra.mxu0 %v5114
    %5116 = vmatprep.subr.mxu0 0.0
    %v5117 = vand.u32 %v4423, 4294901760
    %5118 = vmatpush1.msra.mxu0 %v5117
    %5119 = vmatprep.subr.mxu0 0.0
    %v5120 = vand.u32 %v4424, 4294901760
    %5121 = vmatpush1.msra.mxu0 %v5120
    %5122 = vmatprep.subr.mxu0 0.0
    %v5123 = vand.u32 %v4425, 4294901760
    %5124 = vmatpush1.msra.mxu0 %v5123
    %5125 = vmatprep.subr.mxu0 0.0
    %5126 = vmatpush1.msra.mxu0 0.0
    %5127 = vmatprep.subr.mxu0 0.0
    %5128 = vmatpush1.msra.mxu0 0.0
    %5129 = vmatprep.subr.mxu0 0.0
    %5130 = vmatpush1.msra.mxu0 0.0
    %5131 = vmatprep.subr.mxu0 0.0
    %5132 = vmatpush1.msra.mxu0 0.0
    %5133 = vmatprep.subr.mxu0 0.0
    %5134 = vmatpush1.msra.mxu0 0.0
    %5135 = vmatprep.subr.mxu0 0.0
    %5136 = vmatpush1.msra.mxu0 0.0
    %5137 = vmatprep.subr.mxu0 0.0
    %5138 = vmatpush1.msra.mxu0 0.0
    %5139 = vmatprep.subr.mxu0 0.0
    %5140 = vmatpush1.msra.mxu0 0.0
    %5141 = vmatprep.subr.mxu0 0.0
    %5142 = vmatpush1.msra.mxu0 0.0
    %5143 = vmatprep.subr.mxu0 0.0
    %5144 = vmatpush1.msra.mxu0 0.0
    %5145 = vmatprep.subr.mxu0 0.0
    %5146 = vmatpush1.msra.mxu0 0.0
    %5147 = vmatprep.subr.mxu0 0.0
    %5148 = vmatpush1.msra.mxu0 0.0
    %5149 = vmatprep.subr.mxu0 0.0
    %5150 = vmatpush1.msra.mxu0 0.0
    %5151 = vmatprep.subr.mxu0 0.0
    %5152 = vmatpush1.msra.mxu0 0.0
    %5153 = vmatprep.subr.mxu0 0.0
    %5154 = vmatpush1.msra.mxu0 0.0
    %5155 = vmatprep.subr.mxu0 0.0
    %5156 = vmatpush1.msra.mxu0 0.0
    %5157 = vmatprep.subr.mxu0 0.0
    %5158 = vmatpush1.msra.mxu0 0.0
    %5159 = vmatprep.subr.mxu0 0.0
    %5160 = vmatpush1.msra.mxu0 0.0
    %5161 = vmatprep.subr.mxu0 0.0
    %5162 = vmatpush1.msra.mxu0 0.0
    %5163 = vmatprep.subr.mxu0 0.0
    %5164 = vmatpush1.msra.mxu0 0.0
    %5165 = vmatprep.subr.mxu0 0.0
    %5166 = vmatpush1.msra.mxu0 0.0
    %5167 = vmatprep.subr.mxu0 0.0
    %5168 = vmatpush1.msra.mxu0 0.0
    %5169 = vmatprep.subr.mxu0 0.0
    %5170 = vmatpush1.msra.mxu0 0.0
    %5171 = vmatprep.subr.mxu0 0.0
    %5172 = vmatpush1.msra.mxu0 0.0
    %5173 = vmatprep.mubr.f32.mxu0 0.0
    %v5174 = vand.u32 %v4427, 4294901760
    %v5175 = vsub.f32 %v4427, %v5174
    %v5176 = vand.u32 %v5175, 4294901760
    %5177 = vmatmul.mubr.f32.gmra.mrb[0].mxu0 %v5176
    %v5178 = vpop.f32.mrb[0].mxu0
    %v5179 = vadd.f32 %v4993, %v5178
    %v5180 = vpop.f32.mrb[0].mxu0
    %5181 = vmatprep.mubr.f32.mxu0 0.0
    %v5182 = vand.u32 %v4430, 4294901760
    %v5183 = vsub.f32 %v4430, %v5182
    %v5184 = vand.u32 %v5183, 4294901760
    %5185 = vmatmul.mubr.f32.gmra.mrb[0].mxu0 %v5184
    %v5186 = vpop.f32.mrb[0].mxu0
    %v5187 = vadd.f32 %v5000, %v5186
    %v5188 = vpop.f32.mrb[0].mxu0
    %5189 = vmatprep.mubr.f32.mxu0 0.0
    %v5190 = vand.u32 %v4433, 4294901760
    %v5191 = vsub.f32 %v4433, %v5190
    %v5192 = vand.u32 %v5191, 4294901760
    %5193 = vmatmul.mubr.f32.gmra.mrb[0].mxu0 %v5192
    %v5194 = vpop.f32.mrb[0].mxu0
    %v5195 = vadd.f32 %v5007, %v5194
    %v5196 = vpop.f32.mrb[0].mxu0
    %5197 = vmatprep.mubr.f32.mxu0 0.0
    %v5198 = vand.u32 %v4436, 4294901760
    %v5199 = vsub.f32 %v4436, %v5198
    %v5200 = vand.u32 %v5199, 4294901760
    %5201 = vmatmul.mubr.f32.gmra.mrb[0].mxu0 %v5200
    %v5202 = vpop.f32.mrb[0].mxu0
    %v5203 = vadd.f32 %v5014, %v5202
    %v5204 = vpop.f32.mrb[0].mxu0
    %5205 = vmatprep.mubr.f32.mxu0 0.0
    %v5206 = vand.u32 %v4439, 4294901760
    %v5207 = vsub.f32 %v4439, %v5206
    %v5208 = vand.u32 %v5207, 4294901760
    %5209 = vmatmul.mubr.f32.gmra.mrb[0].mxu0 %v5208
    %v5210 = vpop.f32.mrb[0].mxu0
    %v5211 = vadd.f32 %v5021, %v5210
    %v5212 = vpop.f32.mrb[0].mxu0
    %5213 = vmatprep.mubr.f32.mxu0 0.0
    %v5214 = vand.u32 %v4442, 4294901760
    %v5215 = vsub.f32 %v4442, %v5214
    %v5216 = vand.u32 %v5215, 4294901760
    %5217 = vmatmul.mubr.f32.gmra.mrb[0].mxu0 %v5216
    %v5218 = vpop.f32.mrb[0].mxu0
    %v5219 = vadd.f32 %v5028, %v5218
    %v5220 = vpop.f32.mrb[0].mxu0
    %5221 = vmatprep.mubr.f32.mxu0 0.0
    %v5222 = vand.u32 %v4445, 4294901760
    %v5223 = vsub.f32 %v4445, %v5222
    %v5224 = vand.u32 %v5223, 4294901760
    %5225 = vmatmul.mubr.f32.gmra.mrb[0].mxu0 %v5224
    %v5226 = vpop.f32.mrb[0].mxu0
    %v5227 = vadd.f32 %v5035, %v5226
    %v5228 = vpop.f32.mrb[0].mxu0
    %5229 = vmatprep.mubr.f32.mxu0 0.0
    %v5230 = vand.u32 %v4448, 4294901760
    %v5231 = vsub.f32 %v4448, %v5230
    %v5232 = vand.u32 %v5231, 4294901760
    %5233 = vmatmul.mubr.f32.gmra.mrb[0].mxu0 %v5232
    %v5234 = vpop.f32.mrb[0].mxu0
    %v5235 = vadd.f32 %v5042, %v5234
    %v5236 = vpop.f32.mrb[0].mxu0
    %5237 = vmatprep.mubr.f32.mxu0 0.0
    %v5238 = vand.u32 %v4451, 4294901760
    %v5239 = vsub.f32 %v4451, %v5238
    %v5240 = vand.u32 %v5239, 4294901760
    %5241 = vmatmul.mubr.f32.gmra.mrb[0].mxu0 %v5240
    %v5242 = vpop.f32.mrb[0].mxu0
    %v5243 = vadd.f32 %v5049, %v5242
    %v5244 = vpop.f32.mrb[0].mxu0
    %5245 = vmatprep.mubr.f32.mxu0 0.0
    %v5246 = vand.u32 %v4454, 4294901760
    %v5247 = vsub.f32 %v4454, %v5246
    %v5248 = vand.u32 %v5247, 4294901760
    %5249 = vmatmul.mubr.f32.gmra.mrb[0].mxu0 %v5248
    %v5250 = vpop.f32.mrb[0].mxu0
    %v5251 = vadd.f32 %v5056, %v5250
    %v5252 = vpop.f32.mrb[0].mxu0
    %5253 = vmatprep.mubr.f32.mxu0 0.0
    %v5254 = vand.u32 %v4457, 4294901760
    %v5255 = vsub.f32 %v4457, %v5254
    %v5256 = vand.u32 %v5255, 4294901760
    %5257 = vmatmul.mubr.f32.gmra.mrb[0].mxu0 %v5256
    %v5258 = vpop.f32.mrb[0].mxu0
    %v5259 = vadd.f32 %v5063, %v5258
    %v5260 = vpop.f32.mrb[0].mxu0
    %5261 = vmatprep.mubr.f32.mxu0 0.0
    %v5262 = vand.u32 %v4460, 4294901760
    %v5263 = vsub.f32 %v4460, %v5262
    %v5264 = vand.u32 %v5263, 4294901760
    %5265 = vmatmul.mubr.f32.gmra.mrb[0].mxu0 %v5264
    %v5266 = vpop.f32.mrb[0].mxu0
    %v5267 = vadd.f32 %v5070, %v5266
    %v5268 = vpop.f32.mrb[0].mxu0
    %5269 = vmatprep.mubr.f32.mxu0 0.0
    %v5270 = vand.u32 %v4463, 4294901760
    %v5271 = vsub.f32 %v4463, %v5270
    %v5272 = vand.u32 %v5271, 4294901760
    %5273 = vmatmul.mubr.f32.gmra.mrb[0].mxu0 %v5272
    %v5274 = vpop.f32.mrb[0].mxu0
    %v5275 = vadd.f32 %v5077, %v5274
    %v5276 = vpop.f32.mrb[0].mxu0
    %5277 = vmatprep.mubr.f32.mxu0 0.0
    %v5278 = vand.u32 %v4466, 4294901760
    %v5279 = vsub.f32 %v4466, %v5278
    %v5280 = vand.u32 %v5279, 4294901760
    %5281 = vmatmul.mubr.f32.gmra.mrb[0].mxu0 %v5280
    %v5282 = vpop.f32.mrb[0].mxu0
    %v5283 = vadd.f32 %v5084, %v5282
    %v5284 = vpop.f32.mrb[0].mxu0
    %5285 = vmatprep.mubr.f32.mxu0 0.0
    %v5286 = vand.u32 %v4469, 4294901760
    %v5287 = vsub.f32 %v4469, %v5286
    %v5288 = vand.u32 %v5287, 4294901760
    %5289 = vmatmul.mubr.f32.gmra.mrb[0].mxu0 %v5288
    %v5290 = vpop.f32.mrb[0].mxu0
    %v5291 = vadd.f32 %v5091, %v5290
    %v5292 = vpop.f32.mrb[0].mxu0
    %5293 = vmatprep.mubr.f32.mxu0 0.0
    %v5294 = vand.u32 %v4472, 4294901760
    %v5295 = vsub.f32 %v4472, %v5294
    %v5296 = vand.u32 %v5295, 4294901760
    %5297 = vmatmul.mubr.f32.gmra.mrb[0].mxu0 %v5296
    %v5298 = vpop.f32.mrb[0].mxu0
    %v5299 = vadd.f32 %v5098, %v5298
    %v5300 = vpop.f32.mrb[0].mxu0
    %5301 = vdwg.mxu0
    %5302 = vmatprep.subr.mxu0 0.0
    %v5303 = vand.u32 %v4418, 4294901760
    %v5304 = vsub.f32 %v4418, %v5303
    %v5305 = vand.u32 %v5304, 4294901760
    %5306 = vmatpush1.msra.mxu0 %v5305
    %5307 = vmatprep.subr.mxu0 0.0
    %v5308 = vand.u32 %v4419, 4294901760
    %v5309 = vsub.f32 %v4419, %v5308
    %v5310 = vand.u32 %v5309, 4294901760
    %5311 = vmatpush1.msra.mxu0 %v5310
    %5312 = vmatprep.subr.mxu0 0.0
    %v5313 = vand.u32 %v4420, 4294901760
    %v5314 = vsub.f32 %v4420, %v5313
    %v5315 = vand.u32 %v5314, 4294901760
    %5316 = vmatpush1.msra.mxu0 %v5315
    %5317 = vmatprep.subr.mxu0 0.0
    %v5318 = vand.u32 %v4421, 4294901760
    %v5319 = vsub.f32 %v4421, %v5318
    %v5320 = vand.u32 %v5319, 4294901760
    %5321 = vmatpush1.msra.mxu0 %v5320
    %5322 = vmatprep.subr.mxu0 0.0
    %v5323 = vand.u32 %v4422, 4294901760
    %v5324 = vsub.f32 %v4422, %v5323
    %v5325 = vand.u32 %v5324, 4294901760
    %5326 = vmatpush1.msra.mxu0 %v5325
    %5327 = vmatprep.subr.mxu0 0.0
    %v5328 = vand.u32 %v4423, 4294901760
    %v5329 = vsub.f32 %v4423, %v5328
    %v5330 = vand.u32 %v5329, 4294901760
    %5331 = vmatpush1.msra.mxu0 %v5330
    %5332 = vmatprep.subr.mxu0 0.0
    %v5333 = vand.u32 %v4424, 4294901760
    %v5334 = vsub.f32 %v4424, %v5333
    %v5335 = vand.u32 %v5334, 4294901760
    %5336 = vmatpush1.msra.mxu0 %v5335
    %5337 = vmatprep.subr.mxu0 0.0
    %v5338 = vand.u32 %v4425, 4294901760
    %v5339 = vsub.f32 %v4425, %v5338
    %v5340 = vand.u32 %v5339, 4294901760
    %5341 = vmatpush1.msra.mxu0 %v5340
    %5342 = vmatprep.subr.mxu0 0.0
    %5343 = vmatpush1.msra.mxu0 0.0
    %5344 = vmatprep.subr.mxu0 0.0
    %5345 = vmatpush1.msra.mxu0 0.0
    %5346 = vmatprep.subr.mxu0 0.0
    %5347 = vmatpush1.msra.mxu0 0.0
    %5348 = vmatprep.subr.mxu0 0.0
    %5349 = vmatpush1.msra.mxu0 0.0
    %5350 = vmatprep.subr.mxu0 0.0
    %5351 = vmatpush1.msra.mxu0 0.0
    %5352 = vmatprep.subr.mxu0 0.0
    %5353 = vmatpush1.msra.mxu0 0.0
    %5354 = vmatprep.subr.mxu0 0.0
    %5355 = vmatpush1.msra.mxu0 0.0
    %5356 = vmatprep.subr.mxu0 0.0
    %5357 = vmatpush1.msra.mxu0 0.0
    %5358 = vmatprep.subr.mxu0 0.0
    %5359 = vmatpush1.msra.mxu0 0.0
    %5360 = vmatprep.subr.mxu0 0.0
    %5361 = vmatpush1.msra.mxu0 0.0
    %5362 = vmatprep.subr.mxu0 0.0
    %5363 = vmatpush1.msra.mxu0 0.0
    %5364 = vmatprep.subr.mxu0 0.0
    %5365 = vmatpush1.msra.mxu0 0.0
    %5366 = vmatprep.subr.mxu0 0.0
    %5367 = vmatpush1.msra.mxu0 0.0
    %5368 = vmatprep.subr.mxu0 0.0
    %5369 = vmatpush1.msra.mxu0 0.0
    %5370 = vmatprep.subr.mxu0 0.0
    %5371 = vmatpush1.msra.mxu0 0.0
    %5372 = vmatprep.subr.mxu0 0.0
    %5373 = vmatpush1.msra.mxu0 0.0
    %5374 = vmatprep.subr.mxu0 0.0
    %5375 = vmatpush1.msra.mxu0 0.0
    %5376 = vmatprep.subr.mxu0 0.0
    %5377 = vmatpush1.msra.mxu0 0.0
    %5378 = vmatprep.subr.mxu0 0.0
    %5379 = vmatpush1.msra.mxu0 0.0
    %5380 = vmatprep.subr.mxu0 0.0
    %5381 = vmatpush1.msra.mxu0 0.0
    %5382 = vmatprep.subr.mxu0 0.0
    %5383 = vmatpush1.msra.mxu0 0.0
    %5384 = vmatprep.subr.mxu0 0.0
    %5385 = vmatpush1.msra.mxu0 0.0
    %5386 = vmatprep.subr.mxu0 0.0
    %5387 = vmatpush1.msra.mxu0 0.0
    %5388 = vmatprep.subr.mxu0 0.0
    %5389 = vmatpush1.msra.mxu0 0.0
    %5390 = vmatprep.mubr.f32.mxu0 0.0
    %v5391 = vand.u32 %v4427, 4294901760
    %5392 = vmatmul.mubr.f32.gmra.mrb[0].mxu0 %v5391
    %v5393 = vpop.f32.mrb[0].mxu0
    %v5394 = vadd.f32 %v5179, %v5393
    %v5395 = vpop.f32.mrb[0].mxu0
    %5396 = vmatprep.mubr.f32.mxu0 0.0
    %v5397 = vand.u32 %v4430, 4294901760
    %5398 = vmatmul.mubr.f32.gmra.mrb[0].mxu0 %v5397
    %v5399 = vpop.f32.mrb[0].mxu0
    %v5400 = vadd.f32 %v5187, %v5399
    %v5401 = vpop.f32.mrb[0].mxu0
    %5402 = vmatprep.mubr.f32.mxu0 0.0
    %v5403 = vand.u32 %v4433, 4294901760
    %5404 = vmatmul.mubr.f32.gmra.mrb[0].mxu0 %v5403
    %v5405 = vpop.f32.mrb[0].mxu0
    %v5406 = vadd.f32 %v5195, %v5405
    %v5407 = vpop.f32.mrb[0].mxu0
    %5408 = vmatprep.mubr.f32.mxu0 0.0
    %v5409 = vand.u32 %v4436, 4294901760
    %5410 = vmatmul.mubr.f32.gmra.mrb[0].mxu0 %v5409
    %v5411 = vpop.f32.mrb[0].mxu0
    %v5412 = vadd.f32 %v5203, %v5411
    %v5413 = vpop.f32.mrb[0].mxu0
    %5414 = vmatprep.mubr.f32.mxu0 0.0
    %v5415 = vand.u32 %v4439, 4294901760
    %5416 = vmatmul.mubr.f32.gmra.mrb[0].mxu0 %v5415
    %v5417 = vpop.f32.mrb[0].mxu0
    %v5418 = vadd.f32 %v5211, %v5417
    %v5419 = vpop.f32.mrb[0].mxu0
    %5420 = vmatprep.mubr.f32.mxu0 0.0
    %v5421 = vand.u32 %v4442, 4294901760
    %5422 = vmatmul.mubr.f32.gmra.mrb[0].mxu0 %v5421
    %v5423 = vpop.f32.mrb[0].mxu0
    %v5424 = vadd.f32 %v5219, %v5423
    %v5425 = vpop.f32.mrb[0].mxu0
    %5426 = vmatprep.mubr.f32.mxu0 0.0
    %v5427 = vand.u32 %v4445, 4294901760
    %5428 = vmatmul.mubr.f32.gmra.mrb[0].mxu0 %v5427
    %v5429 = vpop.f32.mrb[0].mxu0
    %v5430 = vadd.f32 %v5227, %v5429
    %v5431 = vpop.f32.mrb[0].mxu0
    %5432 = vmatprep.mubr.f32.mxu0 0.0
    %v5433 = vand.u32 %v4448, 4294901760
    %5434 = vmatmul.mubr.f32.gmra.mrb[0].mxu0 %v5433
    %v5435 = vpop.f32.mrb[0].mxu0
    %v5436 = vadd.f32 %v5235, %v5435
    %v5437 = vpop.f32.mrb[0].mxu0
    %5438 = vmatprep.mubr.f32.mxu0 0.0
    %v5439 = vand.u32 %v4451, 4294901760
    %5440 = vmatmul.mubr.f32.gmra.mrb[0].mxu0 %v5439
    %v5441 = vpop.f32.mrb[0].mxu0
    %v5442 = vadd.f32 %v5243, %v5441
    %v5443 = vpop.f32.mrb[0].mxu0
    %5444 = vmatprep.mubr.f32.mxu0 0.0
    %v5445 = vand.u32 %v4454, 4294901760
    %5446 = vmatmul.mubr.f32.gmra.mrb[0].mxu0 %v5445
    %v5447 = vpop.f32.mrb[0].mxu0
    %v5448 = vadd.f32 %v5251, %v5447
    %v5449 = vpop.f32.mrb[0].mxu0
    %5450 = vmatprep.mubr.f32.mxu0 0.0
    %v5451 = vand.u32 %v4457, 4294901760
    %5452 = vmatmul.mubr.f32.gmra.mrb[0].mxu0 %v5451
    %v5453 = vpop.f32.mrb[0].mxu0
    %v5454 = vadd.f32 %v5259, %v5453
    %v5455 = vpop.f32.mrb[0].mxu0
    %5456 = vmatprep.mubr.f32.mxu0 0.0
    %v5457 = vand.u32 %v4460, 4294901760
    %5458 = vmatmul.mubr.f32.gmra.mrb[0].mxu0 %v5457
    %v5459 = vpop.f32.mrb[0].mxu0
    %v5460 = vadd.f32 %v5267, %v5459
    %v5461 = vpop.f32.mrb[0].mxu0
    %5462 = vmatprep.mubr.f32.mxu0 0.0
    %v5463 = vand.u32 %v4463, 4294901760
    %5464 = vmatmul.mubr.f32.gmra.mrb[0].mxu0 %v5463
    %v5465 = vpop.f32.mrb[0].mxu0
    %v5466 = vadd.f32 %v5275, %v5465
    %v5467 = vpop.f32.mrb[0].mxu0
    %5468 = vmatprep.mubr.f32.mxu0 0.0
    %v5469 = vand.u32 %v4466, 4294901760
    %5470 = vmatmul.mubr.f32.gmra.mrb[0].mxu0 %v5469
    %v5471 = vpop.f32.mrb[0].mxu0
    %v5472 = vadd.f32 %v5283, %v5471
    %v5473 = vpop.f32.mrb[0].mxu0
    %5474 = vmatprep.mubr.f32.mxu0 0.0
    %v5475 = vand.u32 %v4469, 4294901760
    %5476 = vmatmul.mubr.f32.gmra.mrb[0].mxu0 %v5475
    %v5477 = vpop.f32.mrb[0].mxu0
    %v5478 = vadd.f32 %v5291, %v5477
    %v5479 = vpop.f32.mrb[0].mxu0
    %5480 = vmatprep.mubr.f32.mxu0 0.0
    %v5481 = vand.u32 %v4472, 4294901760
    %5482 = vmatmul.mubr.f32.gmra.mrb[0].mxu0 %v5481
    %v5483 = vpop.f32.mrb[0].mxu0
    %v5484 = vadd.f32 %v5299, %v5483
    %v5485 = vpop.f32.mrb[0].mxu0
    %5486 = vdwg.mxu0
    %5487 = vmatprep.subr.mxu0 0.0
    %v5488 = vand.u32 %v4418, 4294901760
    %5489 = vmatpush1.msra.mxu0 %v5488
    %5490 = vmatprep.subr.mxu0 0.0
    %v5491 = vand.u32 %v4419, 4294901760
    %5492 = vmatpush1.msra.mxu0 %v5491
    %5493 = vmatprep.subr.mxu0 0.0
    %v5494 = vand.u32 %v4420, 4294901760
    %5495 = vmatpush1.msra.mxu0 %v5494
    %5496 = vmatprep.subr.mxu0 0.0
    %v5497 = vand.u32 %v4421, 4294901760
    %5498 = vmatpush1.msra.mxu0 %v5497
    %5499 = vmatprep.subr.mxu0 0.0
    %v5500 = vand.u32 %v4422, 4294901760
    %5501 = vmatpush1.msra.mxu0 %v5500
    %5502 = vmatprep.subr.mxu0 0.0
    %v5503 = vand.u32 %v4423, 4294901760
    %5504 = vmatpush1.msra.mxu0 %v5503
    %5505 = vmatprep.subr.mxu0 0.0
    %v5506 = vand.u32 %v4424, 4294901760
    %5507 = vmatpush1.msra.mxu0 %v5506
    %5508 = vmatprep.subr.mxu0 0.0
    %v5509 = vand.u32 %v4425, 4294901760
    %5510 = vmatpush1.msra.mxu0 %v5509
    %5511 = vmatprep.subr.mxu0 0.0
    %5512 = vmatpush1.msra.mxu0 0.0
    %5513 = vmatprep.subr.mxu0 0.0
    %5514 = vmatpush1.msra.mxu0 0.0
    %5515 = vmatprep.subr.mxu0 0.0
    %5516 = vmatpush1.msra.mxu0 0.0
    %5517 = vmatprep.subr.mxu0 0.0
    %5518 = vmatpush1.msra.mxu0 0.0
    %5519 = vmatprep.subr.mxu0 0.0
    %5520 = vmatpush1.msra.mxu0 0.0
    %5521 = vmatprep.subr.mxu0 0.0
    %5522 = vmatpush1.msra.mxu0 0.0
    %5523 = vmatprep.subr.mxu0 0.0
    %5524 = vmatpush1.msra.mxu0 0.0
    %5525 = vmatprep.subr.mxu0 0.0
    %5526 = vmatpush1.msra.mxu0 0.0
    %5527 = vmatprep.subr.mxu0 0.0
    %5528 = vmatpush1.msra.mxu0 0.0
    %5529 = vmatprep.subr.mxu0 0.0
    %5530 = vmatpush1.msra.mxu0 0.0
    %5531 = vmatprep.subr.mxu0 0.0
    %5532 = vmatpush1.msra.mxu0 0.0
    %5533 = vmatprep.subr.mxu0 0.0
    %5534 = vmatpush1.msra.mxu0 0.0
    %5535 = vmatprep.subr.mxu0 0.0
    %5536 = vmatpush1.msra.mxu0 0.0
    %5537 = vmatprep.subr.mxu0 0.0
    %5538 = vmatpush1.msra.mxu0 0.0
    %5539 = vmatprep.subr.mxu0 0.0
    %5540 = vmatpush1.msra.mxu0 0.0
    %5541 = vmatprep.subr.mxu0 0.0
    %5542 = vmatpush1.msra.mxu0 0.0
    %5543 = vmatprep.subr.mxu0 0.0
    %5544 = vmatpush1.msra.mxu0 0.0
    %5545 = vmatprep.subr.mxu0 0.0
    %5546 = vmatpush1.msra.mxu0 0.0
    %5547 = vmatprep.subr.mxu0 0.0
    %5548 = vmatpush1.msra.mxu0 0.0
    %5549 = vmatprep.subr.mxu0 0.0
    %5550 = vmatpush1.msra.mxu0 0.0
    %5551 = vmatprep.subr.mxu0 0.0
    %5552 = vmatpush1.msra.mxu0 0.0
    %5553 = vmatprep.subr.mxu0 0.0
    %5554 = vmatpush1.msra.mxu0 0.0
    %5555 = vmatprep.subr.mxu0 0.0
    %5556 = vmatpush1.msra.mxu0 0.0
    %5557 = vmatprep.subr.mxu0 0.0
    %5558 = vmatpush1.msra.mxu0 0.0
    %5559 = vmatprep.mubr.f32.mxu0 0.0
    %v5560 = vand.u32 %v4427, 4294901760
    %5561 = vmatmul.mubr.f32.gmra.mrb[0].mxu0 %v5560
    %v5562 = vpop.f32.mrb[0].mxu0
    %v5563 = vadd.f32 %v5394, %v5562
    %v5564 = vpop.f32.mrb[0].mxu0
    %5565 = vmatprep.mubr.f32.mxu0 0.0
    %v5566 = vand.u32 %v4430, 4294901760
    %5567 = vmatmul.mubr.f32.gmra.mrb[0].mxu0 %v5566
    %v5568 = vpop.f32.mrb[0].mxu0
    %v5569 = vadd.f32 %v5400, %v5568
    %v5570 = vpop.f32.mrb[0].mxu0
    %5571 = vmatprep.mubr.f32.mxu0 0.0
    %v5572 = vand.u32 %v4433, 4294901760
    %5573 = vmatmul.mubr.f32.gmra.mrb[0].mxu0 %v5572
    %v5574 = vpop.f32.mrb[0].mxu0
    %v5575 = vadd.f32 %v5406, %v5574
    %v5576 = vpop.f32.mrb[0].mxu0
    %5577 = vmatprep.mubr.f32.mxu0 0.0
    %v5578 = vand.u32 %v4436, 4294901760
    %5579 = vmatmul.mubr.f32.gmra.mrb[0].mxu0 %v5578
    %v5580 = vpop.f32.mrb[0].mxu0
    %v5581 = vadd.f32 %v5412, %v5580
    %v5582 = vpop.f32.mrb[0].mxu0
    %5583 = vmatprep.mubr.f32.mxu0 0.0
    %v5584 = vand.u32 %v4439, 4294901760
    %5585 = vmatmul.mubr.f32.gmra.mrb[0].mxu0 %v5584
    %v5586 = vpop.f32.mrb[0].mxu0
    %v5587 = vadd.f32 %v5418, %v5586
    %v5588 = vpop.f32.mrb[0].mxu0
    %5589 = vmatprep.mubr.f32.mxu0 0.0
    %v5590 = vand.u32 %v4442, 4294901760
    %5591 = vmatmul.mubr.f32.gmra.mrb[0].mxu0 %v5590
    %v5592 = vpop.f32.mrb[0].mxu0
    %v5593 = vadd.f32 %v5424, %v5592
    %v5594 = vpop.f32.mrb[0].mxu0
    %5595 = vmatprep.mubr.f32.mxu0 0.0
    %v5596 = vand.u32 %v4445, 4294901760
    %5597 = vmatmul.mubr.f32.gmra.mrb[0].mxu0 %v5596
    %v5598 = vpop.f32.mrb[0].mxu0
    %v5599 = vadd.f32 %v5430, %v5598
    %v5600 = vpop.f32.mrb[0].mxu0
    %5601 = vmatprep.mubr.f32.mxu0 0.0
    %v5602 = vand.u32 %v4448, 4294901760
    %5603 = vmatmul.mubr.f32.gmra.mrb[0].mxu0 %v5602
    %v5604 = vpop.f32.mrb[0].mxu0
    %v5605 = vadd.f32 %v5436, %v5604
    %v5606 = vpop.f32.mrb[0].mxu0
    %5607 = vmatprep.mubr.f32.mxu0 0.0
    %v5608 = vand.u32 %v4451, 4294901760
    %5609 = vmatmul.mubr.f32.gmra.mrb[0].mxu0 %v5608
    %v5610 = vpop.f32.mrb[0].mxu0
    %v5611 = vadd.f32 %v5442, %v5610
    %v5612 = vpop.f32.mrb[0].mxu0
    %5613 = vmatprep.mubr.f32.mxu0 0.0
    %v5614 = vand.u32 %v4454, 4294901760
    %5615 = vmatmul.mubr.f32.gmra.mrb[0].mxu0 %v5614
    %v5616 = vpop.f32.mrb[0].mxu0
    %v5617 = vadd.f32 %v5448, %v5616
    %v5618 = vpop.f32.mrb[0].mxu0
    %5619 = vmatprep.mubr.f32.mxu0 0.0
    %v5620 = vand.u32 %v4457, 4294901760
    %5621 = vmatmul.mubr.f32.gmra.mrb[0].mxu0 %v5620
    %v5622 = vpop.f32.mrb[0].mxu0
    %v5623 = vadd.f32 %v5454, %v5622
    %v5624 = vpop.f32.mrb[0].mxu0
    %5625 = vmatprep.mubr.f32.mxu0 0.0
    %v5626 = vand.u32 %v4460, 4294901760
    %5627 = vmatmul.mubr.f32.gmra.mrb[0].mxu0 %v5626
    %v5628 = vpop.f32.mrb[0].mxu0
    %v5629 = vadd.f32 %v5460, %v5628
    %v5630 = vpop.f32.mrb[0].mxu0
    %5631 = vmatprep.mubr.f32.mxu0 0.0
    %v5632 = vand.u32 %v4463, 4294901760
    %5633 = vmatmul.mubr.f32.gmra.mrb[0].mxu0 %v5632
    %v5634 = vpop.f32.mrb[0].mxu0
    %v5635 = vadd.f32 %v5466, %v5634
    %v5636 = vpop.f32.mrb[0].mxu0
    %5637 = vmatprep.mubr.f32.mxu0 0.0
    %v5638 = vand.u32 %v4466, 4294901760
    %5639 = vmatmul.mubr.f32.gmra.mrb[0].mxu0 %v5638
    %v5640 = vpop.f32.mrb[0].mxu0
    %v5641 = vadd.f32 %v5472, %v5640
    %v5642 = vpop.f32.mrb[0].mxu0
    %5643 = vmatprep.mubr.f32.mxu0 0.0
    %v5644 = vand.u32 %v4469, 4294901760
    %5645 = vmatmul.mubr.f32.gmra.mrb[0].mxu0 %v5644
    %v5646 = vpop.f32.mrb[0].mxu0
    %v5647 = vadd.f32 %v5478, %v5646
    %v5648 = vpop.f32.mrb[0].mxu0
    %5649 = vmatprep.mubr.f32.mxu0 0.0
    %v5650 = vand.u32 %v4472, 4294901760
    %5651 = vmatmul.mubr.f32.gmra.mrb[0].mxu0 %v5650
    %v5652 = vpop.f32.mrb[0].mxu0
    %v5653 = vadd.f32 %v5484, %v5652
    %v5654 = vpop.f32.mrb[0].mxu0
    %5655 = vdwg.mxu0
    %v5656 = vadd.f32 %v4337, %v5563
    %v5657 = vadd.f32 %v4338, %v5569
    %v5658 = vadd.f32 %v4339, %v5575
    %v5659 = vadd.f32 %v4340, %v5581
    %v5660 = vadd.f32 %v4341, %v5587
    %v5661 = vadd.f32 %v4342, %v5593
    %v5662 = vadd.f32 %v4343, %v5599
    %v5663 = vadd.f32 %v4344, %v5605
    %v5664 = vadd.f32 %v4345, %v5611
    %v5665 = vadd.f32 %v4346, %v5617
    %v5666 = vadd.f32 %v4347, %v5623
    %v5667 = vadd.f32 %v4348, %v5629
    %v5668 = vadd.f32 %v4349, %v5635
    %v5669 = vadd.f32 %v4350, %v5641
    %v5670 = vadd.f32 %v4351, %v5647
    %v5671 = vadd.f32 %v4352, %v5653
    %v5672 = vld [vmem:[%s2] sm:$0x1]
    %v5674 = vlaneseq
    %v5675 = vshrl.u32 %v5674, 7
    %v5676 = vsub.s32 0, %v5675
    %v5677 = vrot.slane %v5672, %v5676
    %v5679 = vadd.f32 %v5656, %v5677
    %v5680 = vadd.f32 %v5657, %v5677
    %v5681 = vadd.f32 %v5658, %v5677
    %v5682 = vadd.f32 %v5659, %v5677
    %v5683 = vadd.f32 %v5660, %v5677
    %v5684 = vadd.f32 %v5661, %v5677
    %v5685 = vadd.f32 %v5662, %v5677
    %v5686 = vadd.f32 %v5663, %v5677
    %v5687 = vadd.f32 %v5664, %v5677
    %v5688 = vadd.f32 %v5665, %v5677
    %v5689 = vadd.f32 %v5666, %v5677
    %v5690 = vadd.f32 %v5667, %v5677
    %v5691 = vadd.f32 %v5668, %v5677
    %v5692 = vadd.f32 %v5669, %v5677
    %v5693 = vadd.f32 %v5670, %v5677
    %v5694 = vadd.f32 %v5671, %v5677
    %v5695 = vxor.u32 %v5679, 2147483648
    %v5696 = vxor.u32 %v5680, 2147483648
    %v5697 = vxor.u32 %v5681, 2147483648
    %v5698 = vxor.u32 %v5682, 2147483648
    %v5699 = vxor.u32 %v5683, 2147483648
    %v5700 = vxor.u32 %v5684, 2147483648
    %v5701 = vxor.u32 %v5685, 2147483648
    %v5702 = vxor.u32 %v5686, 2147483648
    %v5703 = vxor.u32 %v5687, 2147483648
    %v5704 = vxor.u32 %v5688, 2147483648
    %v5705 = vxor.u32 %v5689, 2147483648
    %v5706 = vxor.u32 %v5690, 2147483648
    %v5707 = vxor.u32 %v5691, 2147483648
    %v5708 = vxor.u32 %v5692, 2147483648
    %v5709 = vxor.u32 %v5693, 2147483648
    %v5710 = vxor.u32 %v5694, 2147483648
    %v5711 = vmul.f32 %v5695, 1.442695
    %v5712 = vpow.pop %v5711
    %v5713 = vmul.f32 %v5696, 1.442695
    %v5714 = vpow.pop %v5713
    %v5715 = vmul.f32 %v5697, 1.442695
    %v5716 = vpow.pop %v5715
    %v5717 = vmul.f32 %v5698, 1.442695
    %v5718 = vpow.pop %v5717
    %v5719 = vmul.f32 %v5699, 1.442695
    %v5720 = vpow.pop %v5719
    %v5721 = vmul.f32 %v5700, 1.442695
    %v5722 = vpow.pop %v5721
    %v5723 = vmul.f32 %v5701, 1.442695
    %v5724 = vpow.pop %v5723
    %v5725 = vmul.f32 %v5702, 1.442695
    %v5726 = vpow.pop %v5725
    %v5727 = vmul.f32 %v5703, 1.442695
    %v5728 = vpow.pop %v5727
    %v5729 = vmul.f32 %v5704, 1.442695
    %v5730 = vpow.pop %v5729
    %v5731 = vmul.f32 %v5705, 1.442695
    %v5732 = vpow.pop %v5731
    %v5733 = vmul.f32 %v5706, 1.442695
    %v5734 = vpow.pop %v5733
    %v5735 = vmul.f32 %v5707, 1.442695
    %v5736 = vpow.pop %v5735
    %v5737 = vmul.f32 %v5708, 1.442695
    %v5738 = vpow.pop %v5737
    %v5739 = vmul.f32 %v5709, 1.442695
    %v5740 = vpow.pop %v5739
    %v5741 = vmul.f32 %v5710, 1.442695
    %v5742 = vpow.pop %v5741
    %v5743 = vadd.f32 %v5712, 1.0
    %v5744 = vadd.f32 %v5714, 1.0
    %v5745 = vadd.f32 %v5716, 1.0
    %v5746 = vadd.f32 %v5718, 1.0
    %v5747 = vadd.f32 %v5720, 1.0
    %v5748 = vadd.f32 %v5722, 1.0
    %v5749 = vadd.f32 %v5724, 1.0
    %v5750 = vadd.f32 %v5726, 1.0
    %v5751 = vadd.f32 %v5728, 1.0
    %v5752 = vadd.f32 %v5730, 1.0
    %v5753 = vadd.f32 %v5732, 1.0
    %v5754 = vadd.f32 %v5734, 1.0
    %v5755 = vadd.f32 %v5736, 1.0
    %v5756 = vadd.f32 %v5738, 1.0
    %v5757 = vadd.f32 %v5740, 1.0
    %v5758 = vadd.f32 %v5742, 1.0
    %v5759 = vrcp.pop %v5743
    %v5760 = vmul.f32 1.0, %v5759
    %v5761 = vrcp.pop %v5744
    %v5762 = vmul.f32 1.0, %v5761
    %v5763 = vrcp.pop %v5745
    %v5764 = vmul.f32 1.0, %v5763
    %v5765 = vrcp.pop %v5746
    %v5766 = vmul.f32 1.0, %v5765
    %v5767 = vrcp.pop %v5747
    %v5768 = vmul.f32 1.0, %v5767
    %v5769 = vrcp.pop %v5748
    %v5770 = vmul.f32 1.0, %v5769
    %v5771 = vrcp.pop %v5749
    %v5772 = vmul.f32 1.0, %v5771
    %v5773 = vrcp.pop %v5750
    %v5774 = vmul.f32 1.0, %v5773
    %v5775 = vrcp.pop %v5751
    %v5776 = vmul.f32 1.0, %v5775
    %v5777 = vrcp.pop %v5752
    %v5778 = vmul.f32 1.0, %v5777
    %v5779 = vrcp.pop %v5753
    %v5780 = vmul.f32 1.0, %v5779
    %v5781 = vrcp.pop %v5754
    %v5782 = vmul.f32 1.0, %v5781
    %v5783 = vrcp.pop %v5755
    %v5784 = vmul.f32 1.0, %v5783
    %v5785 = vrcp.pop %v5756
    %v5786 = vmul.f32 1.0, %v5785
    %v5787 = vrcp.pop %v5757
    %v5788 = vmul.f32 1.0, %v5787
    %v5789 = vrcp.pop %v5758
    %v5790 = vmul.f32 1.0, %v5789
    %v5791 = vmul.f32 %v5679, %v5760
    %v5792 = vmul.f32 %v5680, %v5762
    %v5793 = vmul.f32 %v5681, %v5764
    %v5794 = vmul.f32 %v5682, %v5766
    %v5795 = vmul.f32 %v5683, %v5768
    %v5796 = vmul.f32 %v5684, %v5770
    %v5797 = vmul.f32 %v5685, %v5772
    %v5798 = vmul.f32 %v5686, %v5774
    %v5799 = vmul.f32 %v5687, %v5776
    %v5800 = vmul.f32 %v5688, %v5778
    %v5801 = vmul.f32 %v5689, %v5780
    %v5802 = vmul.f32 %v5690, %v5782
    %v5803 = vmul.f32 %v5691, %v5784
    %v5804 = vmul.f32 %v5692, %v5786
    %v5805 = vmul.f32 %v5693, %v5788
    %v5806 = vmul.f32 %v5694, %v5790
    %5807 = vst [vmem:[%s3] sm:$0xff] %v5791
    %5808 = vst [vmem:[%s3 + $0x8] sm:$0xff] %v5792
    %5809 = vst [vmem:[%s3 + $0x10] sm:$0xff] %v5793
    %5810 = vst [vmem:[%s3 + $0x18] sm:$0xff] %v5794
    %5811 = vst [vmem:[%s3 + $0x20] sm:$0xff] %v5795
    %5812 = vst [vmem:[%s3 + $0x28] sm:$0xff] %v5796
    %5813 = vst [vmem:[%s3 + $0x30] sm:$0xff] %v5797
    %5814 = vst [vmem:[%s3 + $0x38] sm:$0xff] %v5798
    %5815 = vst [vmem:[%s3 + $0x40] sm:$0xff] %v5799
    %5816 = vst [vmem:[%s3 + $0x48] sm:$0xff] %v5800
    %5817 = vst [vmem:[%s3 + $0x50] sm:$0xff] %v5801
    %5818 = vst [vmem:[%s3 + $0x58] sm:$0xff] %v5802
    %5819 = vst [vmem:[%s3 + $0x60] sm:$0xff] %v5803
    %5820 = vst [vmem:[%s3 + $0x68] sm:$0xff] %v5804
    %5821 = vst [vmem:[%s3 + $0x70] sm:$0xff] %v5805
    %5822 = vst [vmem:[%s3 + $0x78] sm:$0xff] %v5806
    // Predicated region
    $region22: #{td1_forward.1} parent=1 // pred_check
      _
    $region23: #{td1_forward.1} parent=1 // pred_check_branch
      %5824 = sbr.rel (0) target = $region25
    $region24: #{td1_forward.1} parent=1 // pred_region
      _
    $region25: #{td1_forward.1} parent=1 // pred_fallthru
      _
    // Predicated region
    $region26: #{td1_forward.1} parent=1 // pred_check
      _
    $region27: #{td1_forward.1} parent=1 // pred_check_branch
      %5826 = sbr.rel (0) target = $region29
    $region28: #{td1_forward.1} parent=1 // pred_region
      _
    $region29: #{td1_forward.1} parent=1 // pred_fallthru
      _
    %5827 = vsyncpa [#allocation3], 1
    %5828 = vsyncpa [#allocation5], 1

</llo_original>
